<compile_context>
chip_gen: v5e
topology: v5e:2x2
jax: 0.10.0
libtpu: 0.0.40
codegen_flags: <defaults>
</compile_context>

<pallas_src>
import math
from functools import partial

import jax
import jax.numpy as jnp
from jax.experimental import pallas as pl
from jax.experimental.pallas import tpu as pltpu


# Row layout of the packed (12, 3*D) f32 bias slab.
_B_PROJ, _B_WQKV, _B_WO, _B_BQ, _B_BKV, _B_BO, _B_FFN1, _B_FFN2 = 0, 1, 2, 3, 4, 5, 6, 9
_BIAS_ROWS = 12


# -----------------------------------------------------------------------------
# Pallas kernel: one grid step == Bt batch elements; all model math runs here.
# -----------------------------------------------------------------------------
def _mi_kernel(words_ref, attn_w_ref, proj_w_ref, ffn_w1_ref, ffn_w2_ref,
               bias_ref, bw_ref, out_ref, *, num_heads, n_bags, n_words):
    f32, bf16 = jnp.float32, jnp.bfloat16

    Bt = words_ref.shape[0]
    Fc = words_ref.shape[2]
    D = proj_w_ref.shape[1]
    H, N_b, N_w = num_heads, n_bags, n_words
    dh = D // H
    G = Bt * N_b                     # bags handled this step
    M = G * N_w                      # word rows handled this step
    scale = 1.0 / math.sqrt(dh)

    aw = attn_w_ref[...]             # (D, 8D) bf16: [wqkv | wo | bq | bkv | bo]
    w1 = ffn_w1_ref[...]             # (3, D, 2D) bf16
    w2 = ffn_w2_ref[...]             # (3, 2D, D) bf16
    bias = bias_ref[...]             # (12, 3D) f32, row-structured
    bw = bw_ref[...]                 # (N, N) f32 bag_word_wt in (in, out) layout

    def brow(r, width, rows=1):                       # (rows, width) f32 bias view
        return bias[r:r + rows, 0:width]

    def mm(x, w):                                     # bf16 MXU operands, f32 accum
        return jnp.dot(x.astype(bf16), w, preferred_element_type=f32)

    def split_heads(x3, base):                        # (Z, L, C) -> (H*Z, L, dh) bf16
        Z, L = x3.shape[0], x3.shape[1]
        chunks = [x3[:, :, base + h * dh: base + (h + 1) * dh][None] for h in range(H)]
        return jnp.concatenate(chunks, axis=0).reshape(H * Z, L, dh).astype(bf16)

    def merge_heads(x3):                              # (H*Z, L, dh) -> (Z*L, D)
        Z, L = x3.shape[0] // H, x3.shape[1]
        x4 = x3.reshape(H, Z, L, dh)
        return jnp.concatenate([x4[h] for h in range(H)], axis=-1).reshape(Z * L, D)

    def mha(qh, kh, vh, wo_cols, bo_row):             # head-batched attn + out-proj
        s = jnp.einsum('zqd,zkd->zqk', qh, kh, preferred_element_type=f32) * scale
        p = jax.nn.softmax(s, axis=-1)                # f32 softmax (VPU/EUP)
        ctx = jnp.einsum('zqk,zkd->zqd', p.astype(bf16), vh, preferred_element_type=f32)
        return mm(merge_heads(ctx), wo_cols) + bo_row, s

    def energy_pool(x):                               # x: (..., K, D), K == N_b == N_w
        e = jnp.sqrt(jnp.sum(x * x, axis=-1)) / D                 # unnormalized scores
        w = jnp.tanh(jnp.sum(e[..., None] * bw, axis=-2))         # e @ bag_word_wt (VPU)
        return jnp.sum(w[..., None] * x, axis=-2), e              # (..., D), (..., K)

    out_ref[...] = jnp.zeros_like(out_ref)            # deterministic slab padding

    # ---- 1) project CNN word features: one (Bt*N_b*N_w, Fc) @ (Fc, D) matmul ------
    x2d = words_ref[...].reshape(M, Fc)
    words_cnn_2d = mm(x2d, proj_w_ref[...]) + brow(_B_PROJ, D)          # (M, D) f32

    # ---- 2) word-to-word multi-head self-attention (fused QKV projection) ---------
    qkv = mm(words_cnn_2d, aw[:, 0:3 * D]) + brow(_B_WQKV, 3 * D)       # (M, 3D) f32
    qkv3 = qkv.reshape(G, N_w, 3 * D)
    words_sa_2d, s_w2w = mha(split_heads(qkv3, 0),
                             split_heads(qkv3, D),
                             split_heads(qkv3, 2 * D),
                             aw[:, 3 * D:4 * D], brow(_B_WO, D))
    words_sa = words_sa_2d.reshape(G, N_w, D)
    words_cnn = words_cnn_2d.reshape(G, N_w, D)

    # ---- 3) word -> bag pooling (both paths) + the two pooled-bag FFNs (batched) --
    bags_sa_raw, e_sa = energy_pool(words_sa)                           # (G, D), (G, N_w)
    bags_cnn_raw, e_cnn = energy_pool(words_cnn)
    xb = jnp.stack([bags_sa_raw, bags_cnn_raw], axis=0)                 # (2, G, D)
    b1 = brow(_B_FFN1, 2 * D, rows=2)[:, None, :]                       # (2, 1, 2D)
    b2 = brow(_B_FFN2, D, rows=2)[:, None, :]                           # (2, 1, D)
    h1 = jnp.maximum(jnp.einsum('fgd,fdk->fgk', xb.astype(bf16), w1[0:2],
                                preferred_element_type=f32) + b1, 0.0)
    bags2 = jnp.einsum('fgk,fko->fgo', h1.astype(bf16), w2[0:2],
                       preferred_element_type=f32) + b2                 # (2, G, D)
    bags_sa_f, bags_cnn_f = bags2[0], bags2[1]                          # ffn_w2b_sa / _cnn

    # ---- 4) bag-to-bag contextual attention (one fused Q/KV projection) ------------
    xq = jnp.concatenate([bags_cnn_f, bags_sa_f], axis=0)               # (2G, D)
    y = mm(xq, aw[:, 4 * D:7 * D])                                      # (2G, 3D)
    qb = y[0:G, 0:D] + brow(_B_BQ, D)                                   # Q from cnn path
    kvb = y[G:2 * G, D:3 * D] + brow(_B_BKV, 2 * D)                     # K/V from sa path
    qb3 = qb.reshape(Bt, N_b, D)
    kvb3 = kvb.reshape(Bt, N_b, 2 * D)
    bags_attn_2d, s_b2b = mha(split_heads(qb3, 0),
                              split_heads(kvb3, 0),
                              split_heads(kvb3, D),
                              aw[:, 7 * D:8 * D], brow(_B_BO, D))
    bags_attn = bags_attn_2d.reshape(Bt, N_b, D)

    # ---- 5) bag -> slide pooling (pure VPU, no transpose / MXU) + final FFN --------
    bags_to_slide, e_b = energy_pool(bags_attn)                         # (Bt, D), (Bt, N_b)
    h1s = jnp.maximum(mm(bags_to_slide, w1[2]) + brow(_B_FFN1 + 2, 2 * D), 0.0)
    out = mm(h1s, w2[2]) + brow(_B_FFN2 + 2, D)                         # (Bt, D)

    # ---- 6) pack all five results into the single lane-padded output slab ----------
    r1 = H * G * N_w                 # w2w rows        (lanes: N_w)
    r2 = r1 + H * Bt * N_b           # + b2b rows      (lanes: N_b)
    r3 = r2 + G                      # + word scores   (lanes: N_w)
    r4 = r3 + Bt                     # + bag scores    (lanes: N_b)
    r5 = r4 + Bt                     # + out           (lanes: D)
    out_ref[:, 0:r1, 0:N_w] = s_w2w.reshape(1, r1, N_w)
    out_ref[:, r1:r2, 0:N_b] = s_b2b.reshape(1, r2 - r1, N_b)
    out_ref[:, r2:r3, 0:N_w] = (e_sa + e_cnn).reshape(1, G, N_w)
    out_ref[:, r3:r4, 0:N_b] = e_b.reshape(1, Bt, N_b)
    out_ref[:, r4:r5, 0:D] = out.reshape(1, Bt, D)


# -----------------------------------------------------------------------------
# Wrapper
# -----------------------------------------------------------------------------
def _pick_bt(B, rows_per_elem, target_m=128):
    """Fold batch elements per grid step so matmul rows approach target_m, while
    keeping >= 2 grid steps when B >= 2 (so v7x megacore can shard the batch axis)."""
    divisors = [d for d in range(1, B + 1) if B % d == 0]
    fit = [d for d in divisors if d * rows_per_elem <= target_m] or [1]
    bt = max(fit)
    if B >= 2 and B // bt < 2:
        smaller = [d for d in divisors if d < bt]
        if smaller:
            bt = max(smaller)
    return bt


def make_mi_model_fn(B, N_b, N_w, Fc, D, H, batch_tile=None):
    assert N_b == N_w, "bag_word_wt (num_bags_words**2) requires N_b == N_w"
    assert D % H == 0, "out_features must be divisible by num_heads"
    assert max(D, N_b, N_w) <= 128, "packed output slab assumes <= 128 lanes per row"

    Bt = batch_tile or _pick_bt(B, N_b * N_w)
    assert B % Bt == 0
    S = B // Bt                                   # grid steps

    R1 = H * Bt * N_b * N_w                       # w2w rows / step
    R2 = H * Bt * N_b                             # b2b rows / step
    R3 = Bt * N_b                                 # word-score rows / step
    R4 = Bt                                       # bag-score rows / step
    R5 = Bt                                       # out rows / step
    R = R1 + R2 + R3 + R4 + R5

    kernel = partial(_mi_kernel, num_heads=H, n_bags=N_b, n_words=N_w)

    def const_spec(shape):
        nd = len(shape)
        return pl.BlockSpec(shape, lambda i, _nd=nd: (0,) * _nd)

    in_specs = [
        pl.BlockSpec((Bt, N_b * N_w, Fc), lambda i: (i, 0, 0)),   # words (Bt per step)
        const_spec((D, 8 * D)),                                   # attention weight slab
        const_spec((Fc, D)),                                      # project_cnn_words
        const_spec((3, D, 2 * D)),                                # FFN first linears
        const_spec((3, 2 * D, D)),                                # FFN second linears
        const_spec((_BIAS_ROWS, 3 * D)),                          # bias slab
        const_spec((N_w, N_w)),                                   # bag_word_wt
    ]
    out_shape = jax.ShapeDtypeStruct((S, R, 128), jnp.float32)
    out_specs = pl.BlockSpec((1, R, 128), lambda i: (i, 0, 0))

    # Advisory cost estimate for the XLA scheduler.
    dh = D // H
    M, G = B * N_b * N_w, B * N_b
    mnk = (M * Fc * D + M * D * 3 * D + 2 * H * G * N_w * N_w * dh + M * D * D
           + 2 * (G * D * 2 * D + G * 2 * D * D) + 2 * G * D * 3 * D
           + 2 * H * B * N_b * N_b * dh + G * D * D
           + B * (D * 2 * D + 2 * D * D))
    weight_bytes = (2 * (8 * D * D + Fc * D + 2 * 3 * D * 2 * D)
                    + 4 * (_BIAS_ROWS * 3 * D + N_w * N_w))
    cost = pl.CostEstimate(
        flops=2 * mnk,
        transcendentals=H * G * N_w * N_w + H * B * N_b * N_b + 2 * G * N_w + B * N_b,
        bytes_accessed=4 * B * N_b * N_w * Fc + S * weight_bytes + 4 * S * R * 128)

    f = pl.pallas_call(
        kernel,
        out_shape=out_shape,
        grid_spec=pltpu.PrefetchScalarGridSpec(
            num_scalar_prefetch=0, grid=(S,),
            in_specs=in_specs, out_specs=out_specs),
        compiler_params=pltpu.CompilerParams(
            dimension_semantics=("parallel",),        # batch tiles independent
            vmem_limit_bytes=32 * 1024 * 1024),
        cost_estimate=cost,
    )

    def fn(words, p):
        bf = jnp.bfloat16
        # Host-side packing (cheap XLA concats, fused away under jit).
        attn_slab = jnp.concatenate(
            [p['wattn_qkv_w'], p['wattn_o_w'], p['battn_q_w'],
             p['battn_kv_w'], p['battn_o_w']], axis=1).astype(bf)        # (D, 8D)
        bias_slab = jnp.zeros((_BIAS_ROWS, 3 * D), jnp.float32)
        bias_slab = bias_slab.at[_B_PROJ, :D].set(p['proj_b'])
        bias_slab = bias_slab.at[_B_WQKV, :3 * D].set(p['wattn_qkv_b'])
        bias_slab = bias_slab.at[_B_WO, :D].set(p['wattn_o_b'])
        bias_slab = bias_slab.at[_B_BQ, :D].set(p['battn_q_b'])
        bias_slab = bias_slab.at[_B_BKV, :2 * D].set(p['battn_kv_b'])
        bias_slab = bias_slab.at[_B_BO, :D].set(p['battn_o_b'])
        bias_slab = bias_slab.at[_B_FFN1:_B_FFN1 + 3, :2 * D].set(p['ffn_b1'])
        bias_slab = bias_slab.at[_B_FFN2:_B_FFN2 + 3, :D].set(p['ffn_b2'])

        slab = f(words.reshape(B, N_b * N_w, Fc),
                 attn_slab,
                 p['proj_w'].astype(bf),
                 p['ffn_w1'].astype(bf),
                 p['ffn_w2'].astype(bf),
                 bias_slab,
                 p['bw'])                                                # (S, R, 128)

        o = 0
        w2w = slab[:, o:o + R1, :N_w].reshape(S, H, Bt, N_b, N_w, N_w); o += R1
        b2b = slab[:, o:o + R2, :N_b].reshape(S, H, Bt, N_b, N_b);      o += R2
        wsc = slab[:, o:o + R3, :N_w].reshape(S, Bt, N_b, N_w);         o += R3
        bsc = slab[:, o:o + R4, :N_b].reshape(S, Bt, N_b);              o += R4
        out = slab[:, o:o + R5, :D].reshape(S, Bt, D)
        attn_scores = (
            jnp.transpose(w2w, (0, 2, 1, 3, 4, 5)).reshape(B, H, N_b, N_w, N_w),
            jnp.transpose(b2b, (0, 2, 1, 3, 4)).reshape(B, H, N_b, N_b),
            wsc.reshape(B, N_b, N_w),
            bsc.reshape(B, N_b),
        )
        return out.reshape(B, D), attn_scores

    return jax.jit(fn)


# -----------------------------------------------------------------------------
# Deterministic parameter init (xavier_uniform weights; small random biases so the
# correctness check exercises the bias path — PyTorch init would zero them).
# -----------------------------------------------------------------------------
def init_params(key, Fc, D, N, H):
    def xavier(k, fan_in, fan_out):
        limit = math.sqrt(6.0 / (fan_in + fan_out))
        return jax.random.uniform(k, (fan_in, fan_out), jnp.float32, -limit, limit)

    def small(k, *shape):
        return 0.05 * jax.random.normal(k, shape, jnp.float32)

    ks = jax.random.split(key, 24)
    wq, wk, wv = xavier(ks[1], D, D), xavier(ks[2], D, D), xavier(ks[3], D, D)
    bk_w, bv_w = xavier(ks[6], D, D), xavier(ks[7], D, D)
    return dict(
        proj_w=xavier(ks[0], Fc, D),               proj_b=small(ks[16], D),
        wattn_qkv_w=jnp.concatenate([wq, wk, wv], axis=1),
        wattn_qkv_b=small(ks[17], 3 * D),
        wattn_o_w=xavier(ks[4], D, D),             wattn_o_b=small(ks[18], D),
        battn_q_w=xavier(ks[5], D, D),             battn_q_b=small(ks[19], D),
        battn_kv_w=jnp.concatenate([bk_w, bv_w], axis=1),
        battn_kv_b=small(ks[20], 2 * D),
        battn_o_w=xavier(ks[8], D, D),             battn_o_b=small(ks[21], D),
        ffn_w1=jnp.stack([xavier(ks[9 + i], D, 2 * D) for i in range(3)]),
        ffn_b1=small(ks[22], 3, 2 * D),
        ffn_w2=jnp.stack([xavier(ks[12 + i], 2 * D, D) for i in range(3)]),
        ffn_b2=small(ks[23], 3, D),
        bw=xavier(ks[15], N, N),                   # bag_word_wt (no bias), (in, out)
    )


# -----------------------------------------------------------------------------
# Pure-JAX reference (same math, f32 HIGHEST precision) — now checks ALL outputs.
# -----------------------------------------------------------------------------
def ref_forward(words, p, H):
    D = p['proj_w'].shape[1]
    dh = D // H
    scale = 1.0 / math.sqrt(dh)
    hp = jax.lax.Precision.HIGHEST

    def lin(x, w, b):
        return jnp.einsum('...i,io->...o', x, w, precision=hp) + b

    def ffn(x, i):
        h1 = jnp.maximum(lin(x, p['ffn_w1'][i], p['ffn_b1'][i]), 0.0)
        return lin(h1, p['ffn_w2'][i], p['ffn_b2'][i])

    def energy(x):
        e = jnp.sqrt(jnp.sum(x * x, axis=-1)) / D
        w = jnp.tanh(jnp.einsum('...w,wv->...v', e, p['bw'], precision=hp))
        return jnp.einsum('...w,...wd->...d', w, x, precision=hp), e

    def mha(q, k, v, wo, bo):
        outs, scores = [], []
        for h in range(H):
            sl = slice(h * dh, (h + 1) * dh)
            s = jnp.einsum('...qd,...kd->...qk', q[..., sl], k[..., sl],
                           precision=hp) * scale
            scores.append(s)
            a = jax.nn.softmax(s, axis=-1)
            outs.append(jnp.einsum('...qk,...kd->...qd', a, v[..., sl], precision=hp))
        return lin(jnp.concatenate(outs, axis=-1), wo, bo), jnp.stack(scores, axis=1)

    words_cnn = lin(words, p['proj_w'], p['proj_b'])
    qkv = lin(words_cnn, p['wattn_qkv_w'], p['wattn_qkv_b'])
    words_sa, w2w = mha(qkv[..., :D], qkv[..., D:2 * D], qkv[..., 2 * D:],
                        p['wattn_o_w'], p['wattn_o_b'])
    bags_sa_raw, e_sa = energy(words_sa)
    bags_sa = ffn(bags_sa_raw, 0)
    bags_cnn_raw, e_cnn = energy(words_cnn)
    bags_cnn = ffn(bags_cnn_raw, 1)
    qb = lin(bags_cnn, p['battn_q_w'], p['battn_q_b'])
    kvb = lin(bags_sa, p['battn_kv_w'], p['battn_kv_b'])
    bags_attn, b2b = mha(qb, kvb[..., :D], kvb[..., D:],
                         p['battn_o_w'], p['battn_o_b'])
    bags_to_slide, e_b = energy(bags_attn)
    out = ffn(bags_to_slide, 2)
    return out, w2w, b2b, e_sa + e_cnn, e_b


# -----------------------------------------------------------------------------
if __name__ == "__main__":
    # Small shapes: num_bags_words = 2  =>  N_b = N_w = num_bags_words**2 = 4
    B, N_b, N_w = 4, 4, 4
    Fc, D, H = 32, 32, 2          # cnn_feature_sz, out_features, num_heads

    key = jax.random.PRNGKey(0)
    kp, kx = jax.random.split(key)
    params = init_params(kp, Fc, D, N_w, H)
    words = jax.random.normal(kx, (B, N_b, N_w, Fc), jnp.float32)

    fn = make_mi_model_fn(B, N_b, N_w, Fc, D, H)
    out, (w2w, b2b, wscore, bscore) = fn(words, params)
    jax.block_until_ready(out)

    assert out.shape == (B, D)
    assert w2w.shape == (B, H, N_b, N_w, N_w)
    assert b2b.shape == (B, H, N_b, N_b)
    assert wscore.shape == (B, N_b, N_w)
    assert bscore.shape == (B, N_b)
    assert bool(jnp.all(jnp.isfinite(out)))

    r_out, r_w2w, r_b2b, r_wsc, r_bsc = ref_forward(words, params, H)
    for name, got, want in [
        ("out", out, r_out),
        ("w2w_self_attn", w2w, r_w2w),
        ("b2b_self_attn", b2b, r_b2b),
        ("word_scores", wscore, r_wsc),
        ("bag_scores", bscore, r_bsc),
    ]:
        err = float(jnp.max(jnp.abs(got - want)))
        assert err < 5e-2, f"{name} mismatch vs reference: max abs err = {err}"

    print("KERNEL_OK")
</pallas_src>

<mosaic_0001>
module attributes {stable_mosaic.version = 11 : i64} {
  func.func @_mi_kernel(%arg0: i32, %arg1: memref<2x16x32xf32, #tpu.memory_space<vmem>>, %arg2: memref<32x256xbf16, #tpu.memory_space<vmem>>, %arg3: memref<32x32xbf16, #tpu.memory_space<vmem>>, %arg4: memref<3x32x64xbf16, #tpu.memory_space<vmem>>, %arg5: memref<3x64x32xbf16, #tpu.memory_space<vmem>>, %arg6: memref<12x96xf32, #tpu.memory_space<vmem>>, %arg7: memref<4x4xf32, #tpu.memory_space<vmem>>, %arg8: memref<1x92x128xf32, #tpu.memory_space<vmem>>) attributes {dimension_semantics = [#tpu.dimension_semantics<parallel>], iteration_bounds = array<i64: 2>, scalar_prefetch = 0 : i64, scratch_operands = 0 : i64, tpu.core_type = #tpu.core_type<tc>, window_params = [{transform_indices = @transform_0, window_bounds = array<i64: 2, 16, 32>}, {pipeline_mode = #tpu.pipeline_mode<synchronous>, transform_indices = @transform_1, window_bounds = array<i64: 32, 256>}, {pipeline_mode = #tpu.pipeline_mode<synchronous>, transform_indices = @transform_2, window_bounds = array<i64: 32, 32>}, {pipeline_mode = #tpu.pipeline_mode<synchronous>, transform_indices = @transform_3, window_bounds = array<i64: 3, 32, 64>}, {pipeline_mode = #tpu.pipeline_mode<synchronous>, transform_indices = @transform_4, window_bounds = array<i64: 3, 64, 32>}, {pipeline_mode = #tpu.pipeline_mode<synchronous>, transform_indices = @transform_5, window_bounds = array<i64: 12, 96>}, {pipeline_mode = #tpu.pipeline_mode<synchronous>, transform_indices = @transform_6, window_bounds = array<i64: 4, 4>}, {transform_indices = @transform_7, window_bounds = array<i64: 1, 92, 128>}]} {
    %c0 = arith.constant 0 : index
    %c0_0 = arith.constant 0 : index
    %0 = vector.load %arg2[%c0, %c0_0] : memref<32x256xbf16, #tpu.memory_space<vmem>>, vector<32x256xbf16>
    %c0_1 = arith.constant 0 : index
    %c0_2 = arith.constant 0 : index
    %c0_3 = arith.constant 0 : index
    %1 = vector.load %arg4[%c0_1, %c0_2, %c0_3] : memref<3x32x64xbf16, #tpu.memory_space<vmem>>, vector<3x32x64xbf16>
    %c0_4 = arith.constant 0 : index
    %c0_5 = arith.constant 0 : index
    %c0_6 = arith.constant 0 : index
    %2 = vector.load %arg5[%c0_4, %c0_5, %c0_6] : memref<3x64x32xbf16, #tpu.memory_space<vmem>>, vector<3x64x32xbf16>
    %c0_7 = arith.constant 0 : index
    %c0_8 = arith.constant 0 : index
    %3 = vector.load %arg6[%c0_7, %c0_8] : memref<12x96xf32, #tpu.memory_space<vmem>>, vector<12x96xf32>
    %c0_9 = arith.constant 0 : index
    %c0_10 = arith.constant 0 : index
    %4 = vector.load %arg7[%c0_9, %c0_10] : memref<4x4xf32, #tpu.memory_space<vmem>>, vector<4x4xf32>
    %cst = arith.constant 0.000000e+00 : f32
    %5 = vector.broadcast %cst : f32 to vector<1x92x128xf32>
    %c0_11 = arith.constant 0 : index
    %c0_12 = arith.constant 0 : index
    %c0_13 = arith.constant 0 : index
    %6 = vector.load %arg8[%c0_11, %c0_12, %c0_13] : memref<1x92x128xf32, #tpu.memory_space<vmem>>, vector<1x92x128xf32>
    tpu.vector_store %arg8[%c0_11, %c0_12, %c0_13], %5 {strides = array<i32>} : memref<1x92x128xf32, #tpu.memory_space<vmem>>, vector<1x92x128xf32>,
    %c0_14 = arith.constant 0 : index
    %c0_15 = arith.constant 0 : index
    %c0_16 = arith.constant 0 : index
    %7 = vector.load %arg1[%c0_14, %c0_15, %c0_16] : memref<2x16x32xf32, #tpu.memory_space<vmem>>, vector<2x16x32xf32>
    %8 = vector.shape_cast %7 : vector<2x16x32xf32> to vector<32x32xf32>
    %c0_17 = arith.constant 0 : index
    %c0_18 = arith.constant 0 : index
    %9 = vector.load %arg3[%c0_17, %c0_18] : memref<32x32xbf16, #tpu.memory_space<vmem>>, vector<32x32xbf16>
    %10 = arith.truncf %8 : vector<32x32xf32> to vector<32x32xbf16>
    %cst_19 = arith.constant dense<0.000000e+00> : vector<32x32xf32>
    %11 = tpu.matmul %10, %9, %cst_19 {dimension_numbers = #tpu.dot_dimension_numbers<[1], [0], [0], [1], [0, 0, 1, 1], [], []>} : vector<32x32xbf16>, vector<32x32xbf16>, vector<32x32xf32> -> vector<32x32xf32>
    %12 = vector.extract_strided_slice %3 {offsets = [0, 0], sizes = [1, 32], strides = [1, 1]} : vector<12x96xf32> to vector<1x32xf32>
    %13 = vector.broadcast %12 : vector<1x32xf32> to vector<32x32xf32>
    %14 = arith.addf %11, %13 : vector<32x32xf32>
    %15 = vector.extract_strided_slice %0 {offsets = [0, 0], sizes = [32, 96], strides = [1, 1]} : vector<32x256xbf16> to vector<32x96xbf16>
    %16 = arith.truncf %14 : vector<32x32xf32> to vector<32x32xbf16>
    %cst_20 = arith.constant dense<0.000000e+00> : vector<32x96xf32>
    %17 = tpu.matmul %16, %15, %cst_20 {dimension_numbers = #tpu.dot_dimension_numbers<[1], [0], [0], [1], [0, 0, 1, 1], [], []>} : vector<32x32xbf16>, vector<32x96xbf16>, vector<32x96xf32> -> vector<32x96xf32>
    %18 = vector.extract_strided_slice %3 {offsets = [1, 0], sizes = [1, 96], strides = [1, 1]} : vector<12x96xf32> to vector<1x96xf32>
    %19 = vector.broadcast %18 : vector<1x96xf32> to vector<32x96xf32>
    %20 = arith.addf %17, %19 : vector<32x96xf32>
    %21 = vector.shape_cast %20 : vector<32x96xf32> to vector<8x4x96xf32>
    %22 = vector.extract_strided_slice %21 {offsets = [0, 0, 0], sizes = [8, 4, 16], strides = [1, 1, 1]} : vector<8x4x96xf32> to vector<8x4x16xf32>
    %23 = vector.shape_cast %22 : vector<8x4x16xf32> to vector<1x8x4x16xf32>
    %24 = vector.extract_strided_slice %21 {offsets = [0, 0, 16], sizes = [8, 4, 16], strides = [1, 1, 1]} : vector<8x4x96xf32> to vector<8x4x16xf32>
    %25 = vector.shape_cast %24 : vector<8x4x16xf32> to vector<1x8x4x16xf32>
    %26 = tpu.concatenate %23, %25 in 0 : vector<1x8x4x16xf32>, vector<1x8x4x16xf32> -> vector<2x8x4x16xf32>
    %27 = vector.shape_cast %26 : vector<2x8x4x16xf32> to vector<16x4x16xf32>
    %28 = arith.truncf %27 : vector<16x4x16xf32> to vector<16x4x16xbf16>
    %29 = vector.extract_strided_slice %21 {offsets = [0, 0, 32], sizes = [8, 4, 16], strides = [1, 1, 1]} : vector<8x4x96xf32> to vector<8x4x16xf32>
    %30 = vector.shape_cast %29 : vector<8x4x16xf32> to vector<1x8x4x16xf32>
    %31 = vector.extract_strided_slice %21 {offsets = [0, 0, 48], sizes = [8, 4, 16], strides = [1, 1, 1]} : vector<8x4x96xf32> to vector<8x4x16xf32>
    %32 = vector.shape_cast %31 : vector<8x4x16xf32> to vector<1x8x4x16xf32>
    %33 = tpu.concatenate %30, %32 in 0 : vector<1x8x4x16xf32>, vector<1x8x4x16xf32> -> vector<2x8x4x16xf32>
    %34 = vector.shape_cast %33 : vector<2x8x4x16xf32> to vector<16x4x16xf32>
    %35 = arith.truncf %34 : vector<16x4x16xf32> to vector<16x4x16xbf16>
    %36 = vector.extract_strided_slice %21 {offsets = [0, 0, 64], sizes = [8, 4, 16], strides = [1, 1, 1]} : vector<8x4x96xf32> to vector<8x4x16xf32>
    %37 = vector.shape_cast %36 : vector<8x4x16xf32> to vector<1x8x4x16xf32>
    %38 = vector.extract_strided_slice %21 {offsets = [0, 0, 80], sizes = [8, 4, 16], strides = [1, 1, 1]} : vector<8x4x96xf32> to vector<8x4x16xf32>
    %39 = vector.shape_cast %38 : vector<8x4x16xf32> to vector<1x8x4x16xf32>
    %40 = tpu.concatenate %37, %39 in 0 : vector<1x8x4x16xf32>, vector<1x8x4x16xf32> -> vector<2x8x4x16xf32>
    %41 = vector.shape_cast %40 : vector<2x8x4x16xf32> to vector<16x4x16xf32>
    %42 = arith.truncf %41 : vector<16x4x16xf32> to vector<16x4x16xbf16>
    %43 = vector.extract_strided_slice %0 {offsets = [0, 96], sizes = [32, 32], strides = [1, 1]} : vector<32x256xbf16> to vector<32x32xbf16>
    %44 = vector.extract_strided_slice %3 {offsets = [2, 0], sizes = [1, 32], strides = [1, 1]} : vector<12x96xf32> to vector<1x32xf32>
    "tpu.trace_start"() <{level = 10 : i32, message = "zqd,zkd->zqk"}> : () -> ()
    %cst_21 = arith.constant dense<0.000000e+00> : vector<16x4x4xf32>
    %45 = tpu.matmul %28, %35, %cst_21 {dimension_numbers = #tpu.dot_dimension_numbers<[2], [2], [1], [1], [0, 0, 0, 1, 1, 1], [0], [0]>} : vector<16x4x16xbf16>, vector<16x4x16xbf16>, vector<16x4x4xf32> -> vector<16x4x4xf32>
    "tpu.trace_stop"() : () -> ()
    %cst_22 = arith.constant 2.500000e-01 : f32
    %46 = vector.broadcast %cst_22 : f32 to vector<16x4x4xf32>
    %47 = arith.mulf %45, %46 : vector<16x4x4xf32>
    %cst_23 = arith.constant dense<0xFF800000> : vector<16x4xf32>
    %48 = vector.multi_reduction <maximumf>, %47, %cst_23 [2] : vector<16x4x4xf32> to vector<16x4xf32>
    %cst_24 = arith.constant 0xFF800000 : f32
    %49 = vector.broadcast %cst_24 : f32 to vector<16x4xf32>
    %50 = arith.maximumf %49, %48 : vector<16x4xf32>
    %51 = vector.shape_cast %50 : vector<16x4xf32> to vector<16x4x1xf32>
    %52 = vector.broadcast %51 : vector<16x4x1xf32> to vector<16x4x4xf32>
    %53 = arith.subf %47, %52 : vector<16x4x4xf32>
    %54 = math.exp %53 : vector<16x4x4xf32>
    %cst_25 = arith.constant dense<0.000000e+00> : vector<16x4xf32>
    %55 = vector.multi_reduction <add>, %54, %cst_25 [2] : vector<16x4x4xf32> to vector<16x4xf32>
    %56 = vector.shape_cast %55 : vector<16x4xf32> to vector<16x4x1xf32>
    %57 = vector.broadcast %56 : vector<16x4x1xf32> to vector<16x4x4xf32>
    %58 = arith.divf %54, %57 : vector<16x4x4xf32>
    %59 = arith.truncf %58 : vector<16x4x4xf32> to vector<16x4x4xbf16>
    "tpu.trace_start"() <{level = 10 : i32, message = "zqk,zkd->zqd"}> : () -> ()
    %cst_26 = arith.constant dense<0.000000e+00> : vector<16x4x16xf32>
    %60 = tpu.matmul %59, %42, %cst_26 {dimension_numbers = #tpu.dot_dimension_numbers<[2], [1], [1], [2], [0, 0, 0, 1, 1, 2], [0], [0]>} : vector<16x4x4xbf16>, vector<16x4x16xbf16>, vector<16x4x16xf32> -> vector<16x4x16xf32>
    "tpu.trace_stop"() : () -> ()
    %61 = vector.shape_cast %60 : vector<16x4x16xf32> to vector<2x8x4x16xf32>
    %62 = vector.extract_strided_slice %61 {offsets = [0, 0, 0, 0], sizes = [1, 8, 4, 16], strides = [1, 1, 1, 1]} : vector<2x8x4x16xf32> to vector<1x8x4x16xf32>
    %63 = vector.shape_cast %62 : vector<1x8x4x16xf32> to vector<8x4x16xf32>
    %64 = vector.extract_strided_slice %61 {offsets = [1, 0, 0, 0], sizes = [1, 8, 4, 16], strides = [1, 1, 1, 1]} : vector<2x8x4x16xf32> to vector<1x8x4x16xf32>
    %65 = vector.shape_cast %64 : vector<1x8x4x16xf32> to vector<8x4x16xf32>
    %66 = tpu.concatenate %63, %65 in 2 : vector<8x4x16xf32>, vector<8x4x16xf32> -> vector<8x4x32xf32>
    %67 = vector.shape_cast %66 : vector<8x4x32xf32> to vector<32x32xf32>
    %68 = arith.truncf %67 : vector<32x32xf32> to vector<32x32xbf16>
    %cst_27 = arith.constant dense<0.000000e+00> : vector<32x32xf32>
    %69 = tpu.matmul %68, %43, %cst_27 {dimension_numbers = #tpu.dot_dimension_numbers<[1], [0], [0], [1], [0, 0, 1, 1], [], []>} : vector<32x32xbf16>, vector<32x32xbf16>, vector<32x32xf32> -> vector<32x32xf32>
    %70 = vector.broadcast %44 : vector<1x32xf32> to vector<32x32xf32>
    %71 = arith.addf %69, %70 : vector<32x32xf32>
    %72 = vector.shape_cast %71 : vector<32x32xf32> to vector<8x4x32xf32>
    %73 = vector.shape_cast %14 : vector<32x32xf32> to vector<8x4x32xf32>
    %74 = arith.mulf %72, %72 : vector<8x4x32xf32>
    %cst_28 = arith.constant dense<0.000000e+00> : vector<8x4xf32>
    %75 = vector.multi_reduction <add>, %74, %cst_28 [2] : vector<8x4x32xf32> to vector<8x4xf32>
    %76 = math.sqrt %75 : vector<8x4xf32>
    %cst_29 = arith.constant 3.200000e+01 : f32
    %77 = vector.broadcast %cst_29 : f32 to vector<8x4xf32>
    %78 = arith.divf %76, %77 : vector<8x4xf32>
    %79 = vector.shape_cast %78 : vector<8x4xf32> to vector<8x4x1xf32>
    %80 = vector.shape_cast %4 : vector<4x4xf32> to vector<1x4x4xf32>
    %81 = vector.broadcast %79 : vector<8x4x1xf32> to vector<8x4x4xf32>
    %82 = vector.broadcast %80 : vector<1x4x4xf32> to vector<8x4x4xf32>
    %83 = arith.mulf %81, %82 : vector<8x4x4xf32>
    %cst_30 = arith.constant dense<0.000000e+00> : vector<8x4xf32>
    %84 = vector.multi_reduction <add>, %83, %cst_30 [1] : vector<8x4x4xf32> to vector<8x4xf32>
    %85 = math.tanh %84 : vector<8x4xf32>
    %86 = vector.shape_cast %85 : vector<8x4xf32> to vector<8x4x1xf32>
    %87 = vector.broadcast %86 : vector<8x4x1xf32> to vector<8x4x32xf32>
    %88 = arith.mulf %87, %72 : vector<8x4x32xf32>
    %cst_31 = arith.constant dense<0.000000e+00> : vector<8x32xf32>
    %89 = vector.multi_reduction <add>, %88, %cst_31 [1] : vector<8x4x32xf32> to vector<8x32xf32>
    %90 = arith.mulf %73, %73 : vector<8x4x32xf32>
    %cst_32 = arith.constant dense<0.000000e+00> : vector<8x4xf32>
    %91 = vector.multi_reduction <add>, %90, %cst_32 [2] : vector<8x4x32xf32> to vector<8x4xf32>
    %92 = math.sqrt %91 : vector<8x4xf32>
    %cst_33 = arith.constant 3.200000e+01 : f32
    %93 = vector.broadcast %cst_33 : f32 to vector<8x4xf32>
    %94 = arith.divf %92, %93 : vector<8x4xf32>
    %95 = vector.shape_cast %94 : vector<8x4xf32> to vector<8x4x1xf32>
    %96 = vector.shape_cast %4 : vector<4x4xf32> to vector<1x4x4xf32>
    %97 = vector.broadcast %95 : vector<8x4x1xf32> to vector<8x4x4xf32>
    %98 = vector.broadcast %96 : vector<1x4x4xf32> to vector<8x4x4xf32>
    %99 = arith.mulf %97, %98 : vector<8x4x4xf32>
    %cst_34 = arith.constant dense<0.000000e+00> : vector<8x4xf32>
    %100 = vector.multi_reduction <add>, %99, %cst_34 [1] : vector<8x4x4xf32> to vector<8x4xf32>
    %101 = math.tanh %100 : vector<8x4xf32>
    %102 = vector.shape_cast %101 : vector<8x4xf32> to vector<8x4x1xf32>
    %103 = vector.broadcast %102 : vector<8x4x1xf32> to vector<8x4x32xf32>
    %104 = arith.mulf %103, %73 : vector<8x4x32xf32>
    %cst_35 = arith.constant dense<0.000000e+00> : vector<8x32xf32>
    %105 = vector.multi_reduction <add>, %104, %cst_35 [1] : vector<8x4x32xf32> to vector<8x32xf32>
    %106 = vector.shape_cast %89 : vector<8x32xf32> to vector<1x8x32xf32>
    %107 = vector.shape_cast %105 : vector<8x32xf32> to vector<1x8x32xf32>
    %108 = tpu.concatenate %106, %107 in 0 : vector<1x8x32xf32>, vector<1x8x32xf32> -> vector<2x8x32xf32>
    %109 = vector.extract_strided_slice %3 {offsets = [6, 0], sizes = [2, 64], strides = [1, 1]} : vector<12x96xf32> to vector<2x64xf32>
    %110 = vector.shape_cast %109 : vector<2x64xf32> to vector<2x1x64xf32>
    %111 = vector.extract_strided_slice %3 {offsets = [9, 0], sizes = [2, 32], strides = [1, 1]} : vector<12x96xf32> to vector<2x32xf32>
    %112 = vector.shape_cast %111 : vector<2x32xf32> to vector<2x1x32xf32>
    %113 = arith.truncf %108 : vector<2x8x32xf32> to vector<2x8x32xbf16>
    %114 = vector.extract_strided_slice %1 {offsets = [0, 0, 0], sizes = [2, 32, 64], strides = [1, 1, 1]} : vector<3x32x64xbf16> to vector<2x32x64xbf16>
    "tpu.trace_start"() <{level = 10 : i32, message = "fgd,fdk->fgk"}> : () -> ()
    %cst_36 = arith.constant dense<0.000000e+00> : vector<2x8x64xf32>
    %115 = tpu.matmul %113, %114, %cst_36 {dimension_numbers = #tpu.dot_dimension_numbers<[2], [1], [1], [2], [0, 0, 0, 1, 1, 2], [0], [0]>} : vector<2x8x32xbf16>, vector<2x32x64xbf16>, vector<2x8x64xf32> -> vector<2x8x64xf32>
    "tpu.trace_stop"() : () -> ()
    %116 = vector.broadcast %110 : vector<2x1x64xf32> to vector<2x8x64xf32>
    %117 = arith.addf %115, %116 : vector<2x8x64xf32>
    %cst_37 = arith.constant 0.000000e+00 : f32
    %118 = vector.broadcast %cst_37 : f32 to vector<2x8x64xf32>
    %119 = arith.maximumf %117, %118 : vector<2x8x64xf32>
    %120 = arith.truncf %119 : vector<2x8x64xf32> to vector<2x8x64xbf16>
    %121 = vector.extract_strided_slice %2 {offsets = [0, 0, 0], sizes = [2, 64, 32], strides = [1, 1, 1]} : vector<3x64x32xbf16> to vector<2x64x32xbf16>
    "tpu.trace_start"() <{level = 10 : i32, message = "fgk,fko->fgo"}> : () -> ()
    %cst_38 = arith.constant dense<0.000000e+00> : vector<2x8x32xf32>
    %122 = tpu.matmul %120, %121, %cst_38 {dimension_numbers = #tpu.dot_dimension_numbers<[2], [1], [1], [2], [0, 0, 0, 1, 1, 2], [0], [0]>} : vector<2x8x64xbf16>, vector<2x64x32xbf16>, vector<2x8x32xf32> -> vector<2x8x32xf32>
    "tpu.trace_stop"() : () -> ()
    %123 = vector.broadcast %112 : vector<2x1x32xf32> to vector<2x8x32xf32>
    %124 = arith.addf %122, %123 : vector<2x8x32xf32>
    %125 = vector.extract_strided_slice %124 {offsets = [0, 0, 0], sizes = [1, 8, 32], strides = [1, 1, 1]} : vector<2x8x32xf32> to vector<1x8x32xf32>
    %126 = vector.shape_cast %125 : vector<1x8x32xf32> to vector<8x32xf32>
    %127 = vector.extract_strided_slice %124 {offsets = [1, 0, 0], sizes = [1, 8, 32], strides = [1, 1, 1]} : vector<2x8x32xf32> to vector<1x8x32xf32>
    %128 = vector.shape_cast %127 : vector<1x8x32xf32> to vector<8x32xf32>
    %129 = tpu.concatenate %128, %126 in 0 : vector<8x32xf32>, vector<8x32xf32> -> vector<16x32xf32>
    %130 = vector.extract_strided_slice %0 {offsets = [0, 128], sizes = [32, 96], strides = [1, 1]} : vector<32x256xbf16> to vector<32x96xbf16>
    %131 = arith.truncf %129 : vector<16x32xf32> to vector<16x32xbf16>
    %cst_39 = arith.constant dense<0.000000e+00> : vector<16x96xf32>
    %132 = tpu.matmul %131, %130, %cst_39 {dimension_numbers = #tpu.dot_dimension_numbers<[1], [0], [0], [1], [0, 0, 1, 1], [], []>} : vector<16x32xbf16>, vector<32x96xbf16>, vector<16x96xf32> -> vector<16x96xf32>
    %133 = vector.extract_strided_slice %132 {offsets = [0, 0], sizes = [8, 32], strides = [1, 1]} : vector<16x96xf32> to vector<8x32xf32>
    %134 = vector.extract_strided_slice %3 {offsets = [3, 0], sizes = [1, 32], strides = [1, 1]} : vector<12x96xf32> to vector<1x32xf32>
    %135 = vector.broadcast %134 : vector<1x32xf32> to vector<8x32xf32>
    %136 = arith.addf %133, %135 : vector<8x32xf32>
    %137 = vector.extract_strided_slice %132 {offsets = [8, 32], sizes = [8, 64], strides = [1, 1]} : vector<16x96xf32> to vector<8x64xf32>
    %138 = vector.extract_strided_slice %3 {offsets = [4, 0], sizes = [1, 64], strides = [1, 1]} : vector<12x96xf32> to vector<1x64xf32>
    %139 = vector.broadcast %138 : vector<1x64xf32> to vector<8x64xf32>
    %140 = arith.addf %137, %139 : vector<8x64xf32>
    %141 = vector.shape_cast %136 : vector<8x32xf32> to vector<2x4x32xf32>
    %142 = vector.shape_cast %140 : vector<8x64xf32> to vector<2x4x64xf32>
    %143 = vector.extract_strided_slice %141 {offsets = [0, 0, 0], sizes = [2, 4, 16], strides = [1, 1, 1]} : vector<2x4x32xf32> to vector<2x4x16xf32>
    %144 = vector.shape_cast %143 : vector<2x4x16xf32> to vector<1x2x4x16xf32>
    %145 = vector.extract_strided_slice %141 {offsets = [0, 0, 16], sizes = [2, 4, 16], strides = [1, 1, 1]} : vector<2x4x32xf32> to vector<2x4x16xf32>
    %146 = vector.shape_cast %145 : vector<2x4x16xf32> to vector<1x2x4x16xf32>
    %147 = tpu.concatenate %144, %146 in 0 : vector<1x2x4x16xf32>, vector<1x2x4x16xf32> -> vector<2x2x4x16xf32>
    %148 = vector.shape_cast %147 : vector<2x2x4x16xf32> to vector<4x4x16xf32>
    %149 = arith.truncf %148 : vector<4x4x16xf32> to vector<4x4x16xbf16>
    %150 = vector.extract_strided_slice %142 {offsets = [0, 0, 0], sizes = [2, 4, 16], strides = [1, 1, 1]} : vector<2x4x64xf32> to vector<2x4x16xf32>
    %151 = vector.shape_cast %150 : vector<2x4x16xf32> to vector<1x2x4x16xf32>
    %152 = vector.extract_strided_slice %142 {offsets = [0, 0, 16], sizes = [2, 4, 16], strides = [1, 1, 1]} : vector<2x4x64xf32> to vector<2x4x16xf32>
    %153 = vector.shape_cast %152 : vector<2x4x16xf32> to vector<1x2x4x16xf32>
    %154 = tpu.concatenate %151, %153 in 0 : vector<1x2x4x16xf32>, vector<1x2x4x16xf32> -> vector<2x2x4x16xf32>
    %155 = vector.shape_cast %154 : vector<2x2x4x16xf32> to vector<4x4x16xf32>
    %156 = arith.truncf %155 : vector<4x4x16xf32> to vector<4x4x16xbf16>
    %157 = vector.extract_strided_slice %142 {offsets = [0, 0, 32], sizes = [2, 4, 16], strides = [1, 1, 1]} : vector<2x4x64xf32> to vector<2x4x16xf32>
    %158 = vector.shape_cast %157 : vector<2x4x16xf32> to vector<1x2x4x16xf32>
    %159 = vector.extract_strided_slice %142 {offsets = [0, 0, 48], sizes = [2, 4, 16], strides = [1, 1, 1]} : vector<2x4x64xf32> to vector<2x4x16xf32>
    %160 = vector.shape_cast %159 : vector<2x4x16xf32> to vector<1x2x4x16xf32>
    %161 = tpu.concatenate %158, %160 in 0 : vector<1x2x4x16xf32>, vector<1x2x4x16xf32> -> vector<2x2x4x16xf32>
    %162 = vector.shape_cast %161 : vector<2x2x4x16xf32> to vector<4x4x16xf32>
    %163 = arith.truncf %162 : vector<4x4x16xf32> to vector<4x4x16xbf16>
    %164 = vector.extract_strided_slice %0 {offsets = [0, 224], sizes = [32, 32], strides = [1, 1]} : vector<32x256xbf16> to vector<32x32xbf16>
    %165 = vector.extract_strided_slice %3 {offsets = [5, 0], sizes = [1, 32], strides = [1, 1]} : vector<12x96xf32> to vector<1x32xf32>
    "tpu.trace_start"() <{level = 10 : i32, message = "zqd,zkd->zqk"}> : () -> ()
    %cst_40 = arith.constant dense<0.000000e+00> : vector<4x4x4xf32>
    %166 = tpu.matmul %149, %156, %cst_40 {dimension_numbers = #tpu.dot_dimension_numbers<[2], [2], [1], [1], [0, 0, 0, 1, 1, 1], [0], [0]>} : vector<4x4x16xbf16>, vector<4x4x16xbf16>, vector<4x4x4xf32> -> vector<4x4x4xf32>
    "tpu.trace_stop"() : () -> ()
    %cst_41 = arith.constant 2.500000e-01 : f32
    %167 = vector.broadcast %cst_41 : f32 to vector<4x4x4xf32>
    %168 = arith.mulf %166, %167 : vector<4x4x4xf32>
    %cst_42 = arith.constant dense<0xFF800000> : vector<4x4xf32>
    %169 = vector.multi_reduction <maximumf>, %168, %cst_42 [2] : vector<4x4x4xf32> to vector<4x4xf32>
    %cst_43 = arith.constant 0xFF800000 : f32
    %170 = vector.broadcast %cst_43 : f32 to vector<4x4xf32>
    %171 = arith.maximumf %170, %169 : vector<4x4xf32>
    %172 = vector.shape_cast %171 : vector<4x4xf32> to vector<4x4x1xf32>
    %173 = vector.broadcast %172 : vector<4x4x1xf32> to vector<4x4x4xf32>
    %174 = arith.subf %168, %173 : vector<4x4x4xf32>
    %175 = math.exp %174 : vector<4x4x4xf32>
    %cst_44 = arith.constant dense<0.000000e+00> : vector<4x4xf32>
    %176 = vector.multi_reduction <add>, %175, %cst_44 [2] : vector<4x4x4xf32> to vector<4x4xf32>
    %177 = vector.shape_cast %176 : vector<4x4xf32> to vector<4x4x1xf32>
    %178 = vector.broadcast %177 : vector<4x4x1xf32> to vector<4x4x4xf32>
    %179 = arith.divf %175, %178 : vector<4x4x4xf32>
    %180 = arith.truncf %179 : vector<4x4x4xf32> to vector<4x4x4xbf16>
    "tpu.trace_start"() <{level = 10 : i32, message = "zqk,zkd->zqd"}> : () -> ()
    %cst_45 = arith.constant dense<0.000000e+00> : vector<4x4x16xf32>
    %181 = tpu.matmul %180, %163, %cst_45 {dimension_numbers = #tpu.dot_dimension_numbers<[2], [1], [1], [2], [0, 0, 0, 1, 1, 2], [0], [0]>} : vector<4x4x4xbf16>, vector<4x4x16xbf16>, vector<4x4x16xf32> -> vector<4x4x16xf32>
    "tpu.trace_stop"() : () -> ()
    %182 = vector.shape_cast %181 : vector<4x4x16xf32> to vector<2x2x4x16xf32>
    %183 = vector.extract_strided_slice %182 {offsets = [0, 0, 0, 0], sizes = [1, 2, 4, 16], strides = [1, 1, 1, 1]} : vector<2x2x4x16xf32> to vector<1x2x4x16xf32>
    %184 = vector.shape_cast %183 : vector<1x2x4x16xf32> to vector<2x4x16xf32>
    %185 = vector.extract_strided_slice %182 {offsets = [1, 0, 0, 0], sizes = [1, 2, 4, 16], strides = [1, 1, 1, 1]} : vector<2x2x4x16xf32> to vector<1x2x4x16xf32>
    %186 = vector.shape_cast %185 : vector<1x2x4x16xf32> to vector<2x4x16xf32>
    %187 = tpu.concatenate %184, %186 in 2 : vector<2x4x16xf32>, vector<2x4x16xf32> -> vector<2x4x32xf32>
    %188 = vector.shape_cast %187 : vector<2x4x32xf32> to vector<8x32xf32>
    %189 = arith.truncf %188 : vector<8x32xf32> to vector<8x32xbf16>
    %cst_46 = arith.constant dense<0.000000e+00> : vector<8x32xf32>
    %190 = tpu.matmul %189, %164, %cst_46 {dimension_numbers = #tpu.dot_dimension_numbers<[1], [0], [0], [1], [0, 0, 1, 1], [], []>} : vector<8x32xbf16>, vector<32x32xbf16>, vector<8x32xf32> -> vector<8x32xf32>
    %191 = vector.broadcast %165 : vector<1x32xf32> to vector<8x32xf32>
    %192 = arith.addf %190, %191 : vector<8x32xf32>
    %193 = vector.shape_cast %192 : vector<8x32xf32> to vector<2x4x32xf32>
    %194 = arith.mulf %193, %193 : vector<2x4x32xf32>
    %cst_47 = arith.constant dense<0.000000e+00> : vector<2x4xf32>
    %195 = vector.multi_reduction <add>, %194, %cst_47 [2] : vector<2x4x32xf32> to vector<2x4xf32>
    %196 = math.sqrt %195 : vector<2x4xf32>
    %cst_48 = arith.constant 3.200000e+01 : f32
    %197 = vector.broadcast %cst_48 : f32 to vector<2x4xf32>
    %198 = arith.divf %196, %197 : vector<2x4xf32>
    %199 = vector.shape_cast %198 : vector<2x4xf32> to vector<2x4x1xf32>
    %200 = vector.shape_cast %4 : vector<4x4xf32> to vector<1x4x4xf32>
    %201 = vector.broadcast %199 : vector<2x4x1xf32> to vector<2x4x4xf32>
    %202 = vector.broadcast %200 : vector<1x4x4xf32> to vector<2x4x4xf32>
    %203 = arith.mulf %201, %202 : vector<2x4x4xf32>
    %cst_49 = arith.constant dense<0.000000e+00> : vector<2x4xf32>
    %204 = vector.multi_reduction <add>, %203, %cst_49 [1] : vector<2x4x4xf32> to vector<2x4xf32>
    %205 = math.tanh %204 : vector<2x4xf32>
    %206 = vector.shape_cast %205 : vector<2x4xf32> to vector<2x4x1xf32>
    %207 = vector.broadcast %206 : vector<2x4x1xf32> to vector<2x4x32xf32>
    %208 = arith.mulf %207, %193 : vector<2x4x32xf32>
    %cst_50 = arith.constant dense<0.000000e+00> : vector<2x32xf32>
    %209 = vector.multi_reduction <add>, %208, %cst_50 [1] : vector<2x4x32xf32> to vector<2x32xf32>
    %210 = vector.extract_strided_slice %1 {offsets = [2, 0, 0], sizes = [1, 32, 64], strides = [1, 1, 1]} : vector<3x32x64xbf16> to vector<1x32x64xbf16>
    %211 = vector.shape_cast %210 : vector<1x32x64xbf16> to vector<32x64xbf16>
    %212 = arith.truncf %209 : vector<2x32xf32> to vector<2x32xbf16>
    %cst_51 = arith.constant dense<0.000000e+00> : vector<2x64xf32>
    %213 = tpu.matmul %212, %211, %cst_51 {dimension_numbers = #tpu.dot_dimension_numbers<[1], [0], [0], [1], [0, 0, 1, 1], [], []>} : vector<2x32xbf16>, vector<32x64xbf16>, vector<2x64xf32> -> vector<2x64xf32>
    %214 = vector.extract_strided_slice %3 {offsets = [8, 0], sizes = [1, 64], strides = [1, 1]} : vector<12x96xf32> to vector<1x64xf32>
    %215 = vector.broadcast %214 : vector<1x64xf32> to vector<2x64xf32>
    %216 = arith.addf %213, %215 : vector<2x64xf32>
    %cst_52 = arith.constant 0.000000e+00 : f32
    %217 = vector.broadcast %cst_52 : f32 to vector<2x64xf32>
    %218 = arith.maximumf %216, %217 : vector<2x64xf32>
    %219 = vector.extract_strided_slice %2 {offsets = [2, 0, 0], sizes = [1, 64, 32], strides = [1, 1, 1]} : vector<3x64x32xbf16> to vector<1x64x32xbf16>
    %220 = vector.shape_cast %219 : vector<1x64x32xbf16> to vector<64x32xbf16>
    %221 = arith.truncf %218 : vector<2x64xf32> to vector<2x64xbf16>
    %cst_53 = arith.constant dense<0.000000e+00> : vector<2x32xf32>
    %222 = tpu.matmul %221, %220, %cst_53 {dimension_numbers = #tpu.dot_dimension_numbers<[1], [0], [0], [1], [0, 0, 1, 1], [], []>} : vector<2x64xbf16>, vector<64x32xbf16>, vector<2x32xf32> -> vector<2x32xf32>
    %223 = vector.extract_strided_slice %3 {offsets = [11, 0], sizes = [1, 32], strides = [1, 1]} : vector<12x96xf32> to vector<1x32xf32>
    %224 = vector.broadcast %223 : vector<1x32xf32> to vector<2x32xf32>
    %225 = arith.addf %222, %224 : vector<2x32xf32>
    %226 = vector.shape_cast %47 : vector<16x4x4xf32> to vector<1x64x4xf32>
    %c0_54 = arith.constant 0 : index
    %c0_55 = arith.constant 0 : index
    %c0_56 = arith.constant 0 : index
    %227 = vector.load %arg8[%c0_54, %c0_55, %c0_56] : memref<1x92x128xf32, #tpu.memory_space<vmem>>, vector<1x64x4xf32>
    tpu.vector_store %arg8[%c0_54, %c0_55, %c0_56], %226 {strides = array<i32>} : memref<1x92x128xf32, #tpu.memory_space<vmem>>, vector<1x64x4xf32>,
    %228 = vector.shape_cast %168 : vector<4x4x4xf32> to vector<1x16x4xf32>
    %c0_57 = arith.constant 0 : index
    %c64 = arith.constant 64 : index
    %c0_58 = arith.constant 0 : index
    %229 = vector.load %arg8[%c0_57, %c64, %c0_58] : memref<1x92x128xf32, #tpu.memory_space<vmem>>, vector<1x16x4xf32>
    tpu.vector_store %arg8[%c0_57, %c64, %c0_58], %228 {strides = array<i32>} : memref<1x92x128xf32, #tpu.memory_space<vmem>>, vector<1x16x4xf32>,
    %230 = arith.addf %78, %94 : vector<8x4xf32>
    %231 = vector.shape_cast %230 : vector<8x4xf32> to vector<1x8x4xf32>
    %c0_59 = arith.constant 0 : index
    %c80 = arith.constant 80 : index
    %c0_60 = arith.constant 0 : index
    %232 = vector.load %arg8[%c0_59, %c80, %c0_60] : memref<1x92x128xf32, #tpu.memory_space<vmem>>, vector<1x8x4xf32>
    tpu.vector_store %arg8[%c0_59, %c80, %c0_60], %231 {strides = array<i32>} : memref<1x92x128xf32, #tpu.memory_space<vmem>>, vector<1x8x4xf32>,
    %233 = vector.shape_cast %198 : vector<2x4xf32> to vector<1x2x4xf32>
    %c0_61 = arith.constant 0 : index
    %c88 = arith.constant 88 : index
    %c0_62 = arith.constant 0 : index
    %234 = vector.load %arg8[%c0_61, %c88, %c0_62] : memref<1x92x128xf32, #tpu.memory_space<vmem>>, vector<1x2x4xf32>
    tpu.vector_store %arg8[%c0_61, %c88, %c0_62], %233 {strides = array<i32>} : memref<1x92x128xf32, #tpu.memory_space<vmem>>, vector<1x2x4xf32>,
    %235 = vector.shape_cast %225 : vector<2x32xf32> to vector<1x2x32xf32>
    %c0_63 = arith.constant 0 : index
    %c90 = arith.constant 90 : index
    %c0_64 = arith.constant 0 : index
    %236 = vector.load %arg8[%c0_63, %c90, %c0_64] : memref<1x92x128xf32, #tpu.memory_space<vmem>>, vector<1x2x32xf32>
    tpu.vector_store %arg8[%c0_63, %c90, %c0_64], %235 {strides = array<i32>} : memref<1x92x128xf32, #tpu.memory_space<vmem>>, vector<1x2x32xf32>,
    return
  }
  func.func @transform_0(%arg0: i32) -> (i32, i32, i32) {
    %c0_i32 = arith.constant 0 : i32
    %c0_i32_0 = arith.constant 0 : i32
    %c0_i32_1 = arith.constant 0 : i32
    return %arg0, %c0_i32, %c0_i32_0 : i32, i32, i32
  }
  func.func @transform_1(%arg0: i32) -> (i32, i32) {
    %c0_i32 = arith.constant 0 : i32
    %c0_i32_0 = arith.constant 0 : i32
    %c0_i32_1 = arith.constant 0 : i32
    return %c0_i32, %c0_i32_0 : i32, i32
  }
  func.func @transform_2(%arg0: i32) -> (i32, i32) {
    %c0_i32 = arith.constant 0 : i32
    %c0_i32_0 = arith.constant 0 : i32
    %c0_i32_1 = arith.constant 0 : i32
    return %c0_i32, %c0_i32_0 : i32, i32
  }
  func.func @transform_3(%arg0: i32) -> (i32, i32, i32) {
    %c0_i32 = arith.constant 0 : i32
    %c0_i32_0 = arith.constant 0 : i32
    %c0_i32_1 = arith.constant 0 : i32
    %c0_i32_2 = arith.constant 0 : i32
    return %c0_i32, %c0_i32_0, %c0_i32_1 : i32, i32, i32
  }
  func.func @transform_4(%arg0: i32) -> (i32, i32, i32) {
    %c0_i32 = arith.constant 0 : i32
    %c0_i32_0 = arith.constant 0 : i32
    %c0_i32_1 = arith.constant 0 : i32
    %c0_i32_2 = arith.constant 0 : i32
    return %c0_i32, %c0_i32_0, %c0_i32_1 : i32, i32, i32
  }
  func.func @transform_5(%arg0: i32) -> (i32, i32) {
    %c0_i32 = arith.constant 0 : i32
    %c0_i32_0 = arith.constant 0 : i32
    %c0_i32_1 = arith.constant 0 : i32
    return %c0_i32, %c0_i32_0 : i32, i32
  }
  func.func @transform_6(%arg0: i32) -> (i32, i32) {
    %c0_i32 = arith.constant 0 : i32
    %c0_i32_0 = arith.constant 0 : i32
    %c0_i32_1 = arith.constant 0 : i32
    return %c0_i32, %c0_i32_0 : i32, i32
  }
  func.func @transform_7(%arg0: i32) -> (i32, i32, i32) {
    %c0_i32 = arith.constant 0 : i32
    %c0_i32_0 = arith.constant 0 : i32
    %c0_i32_1 = arith.constant 0 : i32
    return %arg0, %c0_i32, %c0_i32_0 : i32, i32, i32
  }
}

</mosaic_0001>

<llo_original>
// kernel: fn.1
$region0: #{fn.1}
  #allocation0 [shape = 'u32[]', space=smem, size = 0x4, offset = 0x4, fixed_abs, tag = 'smem constant byte address 0x4 - core index']
  #allocation1 [shape = 'u32[72,128]{1,0:T(1,128)}', space=vmem, size = 0x9000, scoped, tag = 'internal scratch']
  %s0 = inlined_call_operand.vmem [shape: f32[4,16,32], index: 0, kind: input, shape index: {}]
  %s1 = inlined_call_operand.vmem [shape: bf16[32,256], index: 1, kind: input, shape index: {}]
  %s2 = inlined_call_operand.vmem [shape: bf16[32,32], index: 2, kind: input, shape index: {}]
  %s3 = inlined_call_operand.vmem [shape: bf16[3,32,64], index: 3, kind: input, shape index: {}]
  %s4 = inlined_call_operand.vmem [shape: bf16[3,64,32], index: 4, kind: input, shape index: {}]
  %s5 = inlined_call_operand.vmem [shape: f32[12,96], index: 5, kind: input, shape index: {}]
  %s6 = inlined_call_operand.vmem [shape: f32[4,4], index: 6, kind: input, shape index: {}]
  %s7 = inlined_call_operand.vmem [shape: f32[2,92,128], index: 7, kind: output, shape index: {}]
  %s8 = sld [smem:[#allocation0]]
  $region61: #{fn.1} parent=0
    _
  %s10 = ssub.s32 1, %s8
  %s11 = scalar_select 0, %s10, %s8
  loop: start=0, step=1, limit=4
  $region2: #{fn.1} parent=0 // loop_pre_header
    _
  $region3: #{fn.1} parent=0 // loop_header
    %s13 = sphi 0, %s17
    %p14 = scmp.ge.s32.totalorder %s13, 4
    %s23 = sphi 0, %s25
    %s26 = sphi 0, %s23
    %s27 = sphi 0, %s26
    %s43 = sphi 0, %s27
    %s47 = sphi 0, %s47
    %s49 = sphi 0, %s47
    %s50 = sphi 0, %s49
    %s64 = sphi 0, %s50
    %s68 = sphi 0, %s68
    %s70 = sphi 0, %s68
    %s71 = sphi 0, %s70
    %s85 = sphi 0, %s71
    %s89 = sphi 0, %s89
    %s91 = sphi 0, %s89
    %s92 = sphi 0, %s91
    %s106 = sphi 0, %s92
    %s110 = sphi 0, %s110
    %s112 = sphi 0, %s110
    %s113 = sphi 0, %s112
    %s127 = sphi 0, %s113
    %s131 = sphi 0, %s131
    %s133 = sphi 0, %s131
    %s134 = sphi 0, %s133
    %s148 = sphi 0, %s134
    %s152 = sphi 0, %s152
    %s154 = sphi 0, %s152
    %s155 = sphi 0, %s154
    %s169 = sphi 0, %s155
    %s175 = sphi 0, %s177
    %s178 = sphi 0, %s175
    %s179 = sphi 0, %s178
    %s195 = sphi 0, %s179
  $region4: #{fn.1} parent=0 // loop_header_branch
    %16 = sbr.rel (%p14) target = $region8
  $region5: #{fn.1} parent=0 // loop_body
    %s18 = ssub.s32 %s13, 1
    %s19 = ssub.s32 %s13, 2
    %s20 = sadd.s32 %s13, 1
    %s21 = ssub.s32 %s13, %s20
    %p22 = scmp.eq.s32.totalorder %s21, 0
    %s24 = sadd.s32 %s23, 1
    %s25 = scalar_select %p22, %s23, %s24
    %p28 = pneg %p22
    %p29 = scmp.eq.s32.totalorder %s13, 1
    %p30 = por %p28, %p29
    %p31 = scmp.ne.s32.totalorder %s23, %s26
    %p32 = scmp.eq.s32.totalorder %s13, 0
    %p33 = por %p31, %p32
    %p34 = scmp.ne.s32.totalorder %s23, %s26
    %p35 = scmp.eq.s32.totalorder %s18, 1
    %p36 = por %p34, %p35
    %p37 = scmp.ne.s32.totalorder %s26, %s27
    %p38 = scmp.eq.s32.totalorder %s18, 0
    %p39 = por %p37, %p38
    %p40 = scmp.ne.s32.totalorder %s26, %s27
    %p41 = scmp.eq.s32.totalorder %s19, 1
    %p42 = por %p40, %p41
    %p44 = scmp.ne.s32.totalorder %s27, %s43
    %p45 = scmp.eq.s32.totalorder %s19, 0
    %p46 = por %p44, %p45
    %s48 = sadd.s32 %s47, 1
    %p51 = scmp.eq.s32.totalorder %s13, 1
    %p52 = scmp.ne.s32.totalorder %s47, %s49
    %p53 = scmp.eq.s32.totalorder %s13, 0
    %p54 = por %p52, %p53
    %p55 = scmp.ne.s32.totalorder %s47, %s49
    %p56 = scmp.eq.s32.totalorder %s18, 1
    %p57 = por %p55, %p56
    %p58 = scmp.ne.s32.totalorder %s49, %s50
    %p59 = scmp.eq.s32.totalorder %s18, 0
    %p60 = por %p58, %p59
    %p61 = scmp.ne.s32.totalorder %s49, %s50
    %p62 = scmp.eq.s32.totalorder %s19, 1
    %p63 = por %p61, %p62
    %p65 = scmp.ne.s32.totalorder %s50, %s64
    %p66 = scmp.eq.s32.totalorder %s19, 0
    %p67 = por %p65, %p66
    %s69 = sadd.s32 %s68, 1
    %p72 = scmp.eq.s32.totalorder %s13, 1
    %p73 = scmp.ne.s32.totalorder %s68, %s70
    %p74 = scmp.eq.s32.totalorder %s13, 0
    %p75 = por %p73, %p74
    %p76 = scmp.ne.s32.totalorder %s68, %s70
    %p77 = scmp.eq.s32.totalorder %s18, 1
    %p78 = por %p76, %p77
    %p79 = scmp.ne.s32.totalorder %s70, %s71
    %p80 = scmp.eq.s32.totalorder %s18, 0
    %p81 = por %p79, %p80
    %p82 = scmp.ne.s32.totalorder %s70, %s71
    %p83 = scmp.eq.s32.totalorder %s19, 1
    %p84 = por %p82, %p83
    %p86 = scmp.ne.s32.totalorder %s71, %s85
    %p87 = scmp.eq.s32.totalorder %s19, 0
    %p88 = por %p86, %p87
    %s90 = sadd.s32 %s89, 1
    %p93 = scmp.eq.s32.totalorder %s13, 1
    %p94 = scmp.ne.s32.totalorder %s89, %s91
    %p95 = scmp.eq.s32.totalorder %s13, 0
    %p96 = por %p94, %p95
    %p97 = scmp.ne.s32.totalorder %s89, %s91
    %p98 = scmp.eq.s32.totalorder %s18, 1
    %p99 = por %p97, %p98
    %p100 = scmp.ne.s32.totalorder %s91, %s92
    %p101 = scmp.eq.s32.totalorder %s18, 0
    %p102 = por %p100, %p101
    %p103 = scmp.ne.s32.totalorder %s91, %s92
    %p104 = scmp.eq.s32.totalorder %s19, 1
    %p105 = por %p103, %p104
    %p107 = scmp.ne.s32.totalorder %s92, %s106
    %p108 = scmp.eq.s32.totalorder %s19, 0
    %p109 = por %p107, %p108
    %s111 = sadd.s32 %s110, 1
    %p114 = scmp.eq.s32.totalorder %s13, 1
    %p115 = scmp.ne.s32.totalorder %s110, %s112
    %p116 = scmp.eq.s32.totalorder %s13, 0
    %p117 = por %p115, %p116
    %p118 = scmp.ne.s32.totalorder %s110, %s112
    %p119 = scmp.eq.s32.totalorder %s18, 1
    %p120 = por %p118, %p119
    %p121 = scmp.ne.s32.totalorder %s112, %s113
    %p122 = scmp.eq.s32.totalorder %s18, 0
    %p123 = por %p121, %p122
    %p124 = scmp.ne.s32.totalorder %s112, %s113
    %p125 = scmp.eq.s32.totalorder %s19, 1
    %p126 = por %p124, %p125
    %p128 = scmp.ne.s32.totalorder %s113, %s127
    %p129 = scmp.eq.s32.totalorder %s19, 0
    %p130 = por %p128, %p129
    %s132 = sadd.s32 %s131, 1
    %p135 = scmp.eq.s32.totalorder %s13, 1
    %p136 = scmp.ne.s32.totalorder %s131, %s133
    %p137 = scmp.eq.s32.totalorder %s13, 0
    %p138 = por %p136, %p137
    %p139 = scmp.ne.s32.totalorder %s131, %s133
    %p140 = scmp.eq.s32.totalorder %s18, 1
    %p141 = por %p139, %p140
    %p142 = scmp.ne.s32.totalorder %s133, %s134
    %p143 = scmp.eq.s32.totalorder %s18, 0
    %p144 = por %p142, %p143
    %p145 = scmp.ne.s32.totalorder %s133, %s134
    %p146 = scmp.eq.s32.totalorder %s19, 1
    %p147 = por %p145, %p146
    %p149 = scmp.ne.s32.totalorder %s134, %s148
    %p150 = scmp.eq.s32.totalorder %s19, 0
    %p151 = por %p149, %p150
    %s153 = sadd.s32 %s152, 1
    %p156 = scmp.eq.s32.totalorder %s13, 1
    %p157 = scmp.ne.s32.totalorder %s152, %s154
    %p158 = scmp.eq.s32.totalorder %s13, 0
    %p159 = por %p157, %p158
    %p160 = scmp.ne.s32.totalorder %s152, %s154
    %p161 = scmp.eq.s32.totalorder %s18, 1
    %p162 = por %p160, %p161
    %p163 = scmp.ne.s32.totalorder %s154, %s155
    %p164 = scmp.eq.s32.totalorder %s18, 0
    %p165 = por %p163, %p164
    %p166 = scmp.ne.s32.totalorder %s154, %s155
    %p167 = scmp.eq.s32.totalorder %s19, 1
    %p168 = por %p166, %p167
    %p170 = scmp.ne.s32.totalorder %s155, %s169
    %p171 = scmp.eq.s32.totalorder %s19, 0
    %p172 = por %p170, %p171
    %s173 = ssub.s32 %s13, %s20
    %p174 = scmp.eq.s32.totalorder %s173, 0
    %s176 = sadd.s32 %s175, 1
    %s177 = scalar_select %p174, %s175, %s176
    %p180 = pneg %p174
    %p181 = scmp.eq.s32.totalorder %s13, 1
    %p182 = por %p180, %p181
    %p183 = scmp.ne.s32.totalorder %s175, %s178
    %p184 = scmp.eq.s32.totalorder %s13, 0
    %p185 = por %p183, %p184
    %p186 = scmp.ne.s32.totalorder %s175, %s178
    %p187 = scmp.eq.s32.totalorder %s18, 1
    %p188 = por %p186, %p187
    %p189 = scmp.ne.s32.totalorder %s178, %s179
    %p190 = scmp.eq.s32.totalorder %s18, 0
    %p191 = por %p189, %p190
    %p192 = scmp.ne.s32.totalorder %s178, %s179
    %p193 = scmp.eq.s32.totalorder %s19, 1
    %p194 = por %p192, %p193
    %p196 = scmp.ne.s32.totalorder %s179, %s195
    %p197 = scmp.eq.s32.totalorder %s19, 0
    %p198 = por %p196, %p197
    %p199 = scmp.le.s32.totalorder 1, %s13
    %p200 = scmp.lt.s32.totalorder %s13, 3
    %p201 = pnand %p199, %p200
    %p202 = pneg %p201
    // Predicated region
    $region9: #{fn.1} parent=5 // pred_check
      _
    $region10: #{fn.1} parent=5 // pred_check_branch
      %204 = sbr.rel (%p201) target = $region12
    $region11: #{fn.1} parent=5 // pred_region
      %s205 = ssub.s32 %s13, 1
      // Predicated region
      $region13: #{fn.1} parent=11 // pred_check
        %p206 = pneg %p60
      $region14: #{fn.1} parent=11 // pred_check_branch
        %208 = sbr.rel (%p206) target = $region16
      $region15: #{fn.1} parent=11 // pred_region
        _
      $region16: #{fn.1} parent=11 // pred_fallthru
        _
      // Predicated region
      $region17: #{fn.1} parent=11 // pred_check
        %p209 = pneg %p81
      $region18: #{fn.1} parent=11 // pred_check_branch
        %211 = sbr.rel (%p209) target = $region20
      $region19: #{fn.1} parent=11 // pred_region
        _
      $region20: #{fn.1} parent=11 // pred_fallthru
        _
      // Predicated region
      $region21: #{fn.1} parent=11 // pred_check
        %p212 = pneg %p102
      $region22: #{fn.1} parent=11 // pred_check_branch
        %214 = sbr.rel (%p212) target = $region24
      $region23: #{fn.1} parent=11 // pred_region
        _
      $region24: #{fn.1} parent=11 // pred_fallthru
        _
      // Predicated region
      $region25: #{fn.1} parent=11 // pred_check
        %p215 = pneg %p123
      $region26: #{fn.1} parent=11 // pred_check_branch
        %217 = sbr.rel (%p215) target = $region28
      $region27: #{fn.1} parent=11 // pred_region
        _
      $region28: #{fn.1} parent=11 // pred_fallthru
        _
      // Predicated region
      $region29: #{fn.1} parent=11 // pred_check
        %p218 = pneg %p144
      $region30: #{fn.1} parent=11 // pred_check_branch
        %220 = sbr.rel (%p218) target = $region32
      $region31: #{fn.1} parent=11 // pred_region
        _
      $region32: #{fn.1} parent=11 // pred_fallthru
        _
      // Predicated region
      $region33: #{fn.1} parent=11 // pred_check
        %p221 = pneg %p165
      $region34: #{fn.1} parent=11 // pred_check_branch
        %223 = sbr.rel (%p221) target = $region36
      $region35: #{fn.1} parent=11 // pred_region
        _
      $region36: #{fn.1} parent=11 // pred_fallthru
        _
    $region12: #{fn.1} parent=5 // pred_fallthru
      _
    %p224 = scmp.lt.s32.totalorder %s13, 2
    // Predicated region
    $region37: #{fn.1} parent=5 // pred_check
      %p225 = pneg %p224
    $region38: #{fn.1} parent=5 // pred_check_branch
      %227 = sbr.rel (%p225) target = $region40
    $region39: #{fn.1} parent=5 // pred_region
      // Predicated region
      $region41: #{fn.1} parent=39 // pred_check
        %p228 = pneg %p33
      $region42: #{fn.1} parent=39 // pred_check_branch
        %230 = sbr.rel (%p228) target = $region44
      $region43: #{fn.1} parent=39 // pred_region
        %s231 = smul.u32 2, %s13
        %p232 = scmp.lt.s32.totalorder %s231, 3
        %s233 = scalar_select %p232, %s231, 3
        %s234 = smul.addr %s233, 2
        %s235 = smul.addr %s234, 8
        %s236 = scalar_lea.vmem %s0, %s235
        %s237 = smul.u32 2, %s13
      $region44: #{fn.1} parent=39 // pred_fallthru
        _
    $region40: #{fn.1} parent=5 // pred_fallthru
      _
    %p238 = scmp.le.s32.totalorder 1, %s13
    %p239 = scmp.lt.s32.totalorder %s13, 3
    %p240 = pnand %p238, %p239
    %p241 = pneg %p240
    // Predicated region
    $region45: #{fn.1} parent=5 // pred_check
      _
    $region46: #{fn.1} parent=5 // pred_check_branch
      %243 = sbr.rel (%p240) target = $region48
    $region47: #{fn.1} parent=5 // pred_region
      %s244 = ssub.s32 %s13, 1
      %s245 = smul.u32 2, %s18
      %p246 = scmp.lt.s32.totalorder %s245, 3
      %s247 = scalar_select %p246, %s245, 3
      %s248 = smul.addr %s247, 2
      %s249 = smul.addr %s248, 8
      %s250 = scalar_lea.vmem %s0, %s249
      %p251 = pneg %p39
      %p252 = pneg %p36
      %p253 = pneg %p60
      %p254 = pneg %p57
      %p255 = pneg %p81
      %p256 = pneg %p78
      %p257 = pneg %p102
      %p258 = pneg %p99
      %p259 = pneg %p123
      %p260 = pneg %p120
      %p261 = pneg %p144
      %p262 = pneg %p141
      %p263 = pneg %p165
      %p264 = pneg %p162
      %p265 = pneg %p191
      %p266 = pneg %p188
      %p267 = scmp.lt.s32.totalorder %s18, 1
      %s268 = scalar_select %p267, %s18, 1
      %s269 = smul.addr %s268, 12
      %s270 = smul.addr %s269, 8
      %s271 = scalar_lea.vmem %s7, %s270
      %s272 = smul.u32 2, %s18
      %p273 = scmp.lt.s32.totalorder %s272, 3
      %s274 = scalar_select %p273, %s272, 3
      %s275 = smul.addr %s274, 2
      %s276 = smul.addr %s275, 8
      %s277 = scalar_lea.vmem %s0, %s276
      %s278 = smul.u32 2, %s18
      %p279 = scmp.lt.s32.totalorder %s18, 1
      %s280 = scalar_select %p279, %s18, 1
      %s281 = smul.addr %s280, 12
      %s282 = smul.addr %s281, 8
      %s283 = scalar_lea.vmem %s7, %s282
      %v285 = vld [vmem:[%s1] sm:$0xff]
      %v286 = vld [vmem:[%s1 + $0x8] sm:$0xff]
      %v287 = vld [vmem:[%s1 + $0x10] sm:$0xff]
      %v288 = vld [vmem:[%s1 + $0x18] sm:$0xff]
      %v289 = vld [vmem:[%s3] sm:$0xf]
      %v290 = vld [vmem:[%s3 + $0x4] sm:$0xf]
      %v291 = vld [vmem:[%s3 + $0x8] sm:$0xf]
      %v292 = vld [vmem:[%s3 + $0xc] sm:$0xf]
      %v293 = vld [vmem:[%s3 + $0x10] sm:$0xf]
      %v294 = vld [vmem:[%s3 + $0x14] sm:$0xf]
      %v295 = vld [vmem:[%s3 + $0x18] sm:$0xf]
      %v296 = vld [vmem:[%s3 + $0x1c] sm:$0xf]
      %v297 = vld [vmem:[%s3 + $0x20] sm:$0xf]
      %v298 = vld [vmem:[%s3 + $0x24] sm:$0xf]
      %v299 = vld [vmem:[%s3 + $0x28] sm:$0xf]
      %v300 = vld [vmem:[%s3 + $0x2c] sm:$0xf]
      %v301 = vld [vmem:[%s4] sm:$0xf]
      %v302 = vld [vmem:[%s4 + $0x4] sm:$0xf]
      %v303 = vld [vmem:[%s4 + $0x8] sm:$0xf]
      %v304 = vld [vmem:[%s4 + $0xc] sm:$0xf]
      %v305 = vld [vmem:[%s4 + $0x10] sm:$0xf]
      %v306 = vld [vmem:[%s4 + $0x14] sm:$0xf]
      %v307 = vld [vmem:[%s4 + $0x18] sm:$0xf]
      %v308 = vld [vmem:[%s4 + $0x1c] sm:$0xf]
      %v309 = vld [vmem:[%s4 + $0x20] sm:$0xf]
      %v310 = vld [vmem:[%s4 + $0x24] sm:$0xf]
      %v311 = vld [vmem:[%s4 + $0x28] sm:$0xf]
      %v312 = vld [vmem:[%s4 + $0x2c] sm:$0xf]
      %v313 = vld [vmem:[%s4 + $0x30] sm:$0xf]
      %v314 = vld [vmem:[%s4 + $0x34] sm:$0xf]
      %v315 = vld [vmem:[%s4 + $0x38] sm:$0xf]
      %v316 = vld [vmem:[%s4 + $0x3c] sm:$0xf]
      %v317 = vld [vmem:[%s4 + $0x40] sm:$0xf]
      %v318 = vld [vmem:[%s4 + $0x44] sm:$0xf]
      %v319 = vld [vmem:[%s4 + $0x48] sm:$0xf]
      %v320 = vld [vmem:[%s4 + $0x4c] sm:$0xf]
      %v321 = vld [vmem:[%s4 + $0x50] sm:$0xf]
      %v322 = vld [vmem:[%s4 + $0x54] sm:$0xf]
      %v323 = vld [vmem:[%s4 + $0x58] sm:$0xf]
      %v324 = vld [vmem:[%s4 + $0x5c] sm:$0xf]
      %v325 = vld [vmem:[%s5] sm:$0xff]
      %v326 = vld [vmem:[%s5 + $0x8] sm:$0xf]
      %v327 = vld [vmem:[%s6] sm:$0xf]
      %328 = vst [vmem:[%s283] sm:$0xff] 0.0
      %329 = vst [vmem:[%s283 + $0x8] sm:$0xff] 0.0
      %330 = vst [vmem:[%s283 + $0x10] sm:$0xff] 0.0
      %331 = vst [vmem:[%s283 + $0x18] sm:$0xff] 0.0
      %332 = vst [vmem:[%s283 + $0x20] sm:$0xff] 0.0
      %333 = vst [vmem:[%s283 + $0x28] sm:$0xff] 0.0
      %334 = vst [vmem:[%s283 + $0x30] sm:$0xff] 0.0
      %335 = vst [vmem:[%s283 + $0x38] sm:$0xff] 0.0
      %336 = vst [vmem:[%s283 + $0x40] sm:$0xff] 0.0
      %337 = vst [vmem:[%s283 + $0x48] sm:$0xff] 0.0
      %338 = vst [vmem:[%s283 + $0x50] sm:$0xff] 0.0
      %339 = vst [vmem:[%s283 + $0x58] sm:$0xf] 0.0
      %v340 = vld [vmem:[%s277] sm:$0xff]
      %v341 = vld [vmem:[%s277 + $0x8] sm:$0xff]
      %v342 = vld [vmem:[%s277 + $0x10] sm:$0xff]
      %v343 = vld [vmem:[%s277 + $0x18] sm:$0xff]
      %v344 = vld [vmem:[%s2] sm:$0xf]
      %v345 = vld [vmem:[%s2 + $0x4] sm:$0xf]
      %v346 = vld [vmem:[%s2 + $0x8] sm:$0xf]
      %v347 = vld [vmem:[%s2 + $0xc] sm:$0xf]
      %v348 = vpack.c.bf16 %v341, %v340
      %v349 = vpack.c.bf16 %v343, %v342
      %v350 = vperm.slane %v325, 0
      %v355 = vunpack.c.l.b16 %v344
      %v356 = vunpack.c.l.b16 %v345
      %v357 = vunpack.c.l.b16 %v346
      %v358 = vunpack.c.l.b16 %v347
      %v359 = vpack.c.b16 %v356, %v355
      %v360 = vpack.c.b16 %v358, %v357
      %vm363 = vcmask 261120
      %v365 = vsel %vm363, %v348, 0
      %v368 = vsel %vm363, %v349, 0
      %370 = vmatpush.bf16.msra.mxu0 0
      %371 = vmatpush.bf16.msra.mxu0 0
      %372 = vmatpush.bf16.msra.mxu0 0
      %373 = vmatpush.bf16.msra.mxu0 0
      %374 = vmatpush.bf16.msra.mxu0 0
      %375 = vmatpush.bf16.msra.mxu0 0
      %376 = vmatpush.bf16.msra.mxu0 %v360
      %377 = vmatpush.bf16.msra.mxu0 %v359
      %378 = vmatmul.bf16.gmra.mxu0 %v365
      %v379 = vpop.f32.mrf.mxu0
      %v380 = vadd.f32 %v350, %v379
      %v381 = vpop.f32.mrf.mxu0
      %v382 = vadd.f32 %v350, %v381
      %383 = vmatmul.bf16.gmra.mxu0 %v368
      %v384 = vpop.f32.mrf.mxu0
      %v385 = vadd.f32 %v350, %v384
      %v386 = vpop.f32.mrf.mxu0
      %v387 = vadd.f32 %v350, %v386
      %388 = vdwg.mxu0
      %v389 = vpack.c.bf16 %v382, %v380
      %v390 = vpack.c.bf16 %v387, %v385
      %v391 = vperm.slane %v325, 1
      %v396 = vunpack.c.l.b16 %v285
      %v397 = vunpack.c.l.b16 %v286
      %v398 = vunpack.c.l.b16 %v287
      %v399 = vunpack.c.l.b16 %v288
      %v400 = vpack.c.b16 %v397, %v396
      %v401 = vpack.c.b16 %v399, %v398
      %v405 = vsel %vm363, %v389, 0
      %v408 = vsel %vm363, %v390, 0
      %410 = vmatpush.bf16.msra.mxu0 0
      %411 = vmatpush.bf16.msra.mxu0 0
      %412 = vmatpush.bf16.msra.mxu0 0
      %413 = vmatpush.bf16.msra.mxu0 0
      %414 = vmatpush.bf16.msra.mxu0 0
      %415 = vmatpush.bf16.msra.mxu0 0
      %416 = vmatpush.bf16.msra.mxu0 %v401
      %417 = vmatpush.bf16.msra.mxu0 %v400
      %418 = vmatmul.bf16.gmra.mxu0 %v405
      %v419 = vpop.f32.mrf.mxu0
      %v420 = vadd.f32 %v391, %v419
      %v421 = vpop.f32.mrf.mxu0
      %v422 = vadd.f32 %v391, %v421
      %423 = vmatmul.bf16.gmra.mxu0 %v408
      %v424 = vpop.f32.mrf.mxu0
      %v425 = vadd.f32 %v391, %v424
      %v426 = vpop.f32.mrf.mxu0
      %v427 = vadd.f32 %v391, %v426
      %428 = vdwg.mxu0
      %v433 = vrot.slane %v420, 4
      %v434 = vrot.slane %v422, 4
      %v435 = vrot.slane %v425, 4
      %v436 = vrot.slane %v427, 4
      %441 = vrot.lane.b32.xlu0 %v420, 112
      %v442 = vpop.permute.xlu0 %441
      %443 = vrot.lane.b32.xlu0 %v433, 112
      %v444 = vpop.permute.xlu0 %443
      %445 = vrot.lane.b32.xlu0 %v422, 112
      %v446 = vpop.permute.xlu0 %445
      %447 = vrot.lane.b32.xlu0 %v434, 112
      %v448 = vpop.permute.xlu0 %447
      %449 = vrot.lane.b32.xlu0 %v425, 112
      %v450 = vpop.permute.xlu0 %449
      %451 = vrot.lane.b32.xlu0 %v435, 112
      %v452 = vpop.permute.xlu0 %451
      %453 = vrot.lane.b32.xlu0 %v427, 112
      %v454 = vpop.permute.xlu0 %453
      %455 = vrot.lane.b32.xlu0 %v436, 112
      %v456 = vpop.permute.xlu0 %455
      %v465 = vpack.c.bf16 %v420, %v420
      %v466 = vpack.c.bf16 %v433, %v433
      %v467 = vpack.c.bf16 %v422, %v422
      %v468 = vpack.c.bf16 %v434, %v434
      %v469 = vpack.c.bf16 %v425, %v425
      %v470 = vpack.c.bf16 %v435, %v435
      %v471 = vpack.c.bf16 %v427, %v427
      %v472 = vpack.c.bf16 %v436, %v436
      %v473 = vpack.c.bf16 %v442, %v442
      %v474 = vpack.c.bf16 %v444, %v444
      %v475 = vpack.c.bf16 %v446, %v446
      %v476 = vpack.c.bf16 %v448, %v448
      %v477 = vpack.c.bf16 %v450, %v450
      %v478 = vpack.c.bf16 %v452, %v452
      %v479 = vpack.c.bf16 %v454, %v454
      %v480 = vpack.c.bf16 %v456, %v456
      %v482 = vunpack.c.l.b16 %v465
      %v483 = vpack.c.b16 %v482, %v482
      %484 = vrot.lane.b32.xlu0 %v483, 96
      %v485 = vpop.permute.xlu0 %484
      %vm486 = vcmask 130048
      %v488 = vsel %vm486, %v465, 0
      %v491 = vsel %vm486, %v485, 0
      %493 = vmatpush.bf16.xpose.msra.mxu0 0
      %494 = vmatpush.bf16.xpose.msra.mxu0 0
      %495 = vmatpush.bf16.xpose.msra.mxu0 0
      %496 = vmatpush.bf16.xpose.msra.mxu0 0
      %497 = vmatpush.bf16.xpose.msra.mxu0 0
      %498 = vmatpush.bf16.xpose.msra.mxu0 0
      %499 = vmatpush.bf16.xpose.msra.mxu0 0
      %500 = vmatpush.bf16.xpose.msra.mxu0 %v491
      %501 = vmatmul.bf16.gmra.mxu0 %v488
      %v502 = vpop.f32.mrf.mxu0
      %v503 = vadd.f32 0.0, %v502
      %v504 = vpop.f32.mrf.mxu0
      %505 = vdwg.mxu0
      %v507 = vunpack.c.l.b16 %v466
      %v508 = vpack.c.b16 %v507, %v507
      %509 = vrot.lane.b32.xlu0 %v508, 96
      %v510 = vpop.permute.xlu0 %509
      %v512 = vsel %vm486, %v466, 0
      %v515 = vsel %vm486, %v510, 0
      %517 = vmatpush.bf16.xpose.msra.mxu0 0
      %518 = vmatpush.bf16.xpose.msra.mxu0 0
      %519 = vmatpush.bf16.xpose.msra.mxu0 0
      %520 = vmatpush.bf16.xpose.msra.mxu0 0
      %521 = vmatpush.bf16.xpose.msra.mxu0 0
      %522 = vmatpush.bf16.xpose.msra.mxu0 0
      %523 = vmatpush.bf16.xpose.msra.mxu0 0
      %524 = vmatpush.bf16.xpose.msra.mxu0 %v515
      %525 = vmatmul.bf16.gmra.mxu0 %v512
      %v526 = vpop.f32.mrf.mxu0
      %v527 = vadd.f32 0.0, %v526
      %v528 = vpop.f32.mrf.mxu0
      %529 = vdwg.mxu0
      %v531 = vunpack.c.l.b16 %v467
      %v532 = vpack.c.b16 %v531, %v531
      %533 = vrot.lane.b32.xlu0 %v532, 96
      %v534 = vpop.permute.xlu0 %533
      %v536 = vsel %vm486, %v467, 0
      %v539 = vsel %vm486, %v534, 0
      %541 = vmatpush.bf16.xpose.msra.mxu0 0
      %542 = vmatpush.bf16.xpose.msra.mxu0 0
      %543 = vmatpush.bf16.xpose.msra.mxu0 0
      %544 = vmatpush.bf16.xpose.msra.mxu0 0
      %545 = vmatpush.bf16.xpose.msra.mxu0 0
      %546 = vmatpush.bf16.xpose.msra.mxu0 0
      %547 = vmatpush.bf16.xpose.msra.mxu0 0
      %548 = vmatpush.bf16.xpose.msra.mxu0 %v539
      %549 = vmatmul.bf16.gmra.mxu0 %v536
      %v550 = vpop.f32.mrf.mxu0
      %v551 = vadd.f32 0.0, %v550
      %v552 = vpop.f32.mrf.mxu0
      %553 = vdwg.mxu0
      %v555 = vunpack.c.l.b16 %v468
      %v556 = vpack.c.b16 %v555, %v555
      %557 = vrot.lane.b32.xlu0 %v556, 96
      %v558 = vpop.permute.xlu0 %557
      %v560 = vsel %vm486, %v468, 0
      %v563 = vsel %vm486, %v558, 0
      %565 = vmatpush.bf16.xpose.msra.mxu0 0
      %566 = vmatpush.bf16.xpose.msra.mxu0 0
      %567 = vmatpush.bf16.xpose.msra.mxu0 0
      %568 = vmatpush.bf16.xpose.msra.mxu0 0
      %569 = vmatpush.bf16.xpose.msra.mxu0 0
      %570 = vmatpush.bf16.xpose.msra.mxu0 0
      %571 = vmatpush.bf16.xpose.msra.mxu0 0
      %572 = vmatpush.bf16.xpose.msra.mxu0 %v563
      %573 = vmatmul.bf16.gmra.mxu0 %v560
      %v574 = vpop.f32.mrf.mxu0
      %v575 = vadd.f32 0.0, %v574
      %v576 = vpop.f32.mrf.mxu0
      %577 = vdwg.mxu0
      %v579 = vunpack.c.l.b16 %v469
      %v580 = vpack.c.b16 %v579, %v579
      %581 = vrot.lane.b32.xlu0 %v580, 96
      %v582 = vpop.permute.xlu0 %581
      %v584 = vsel %vm486, %v469, 0
      %v587 = vsel %vm486, %v582, 0
      %589 = vmatpush.bf16.xpose.msra.mxu0 0
      %590 = vmatpush.bf16.xpose.msra.mxu0 0
      %591 = vmatpush.bf16.xpose.msra.mxu0 0
      %592 = vmatpush.bf16.xpose.msra.mxu0 0
      %593 = vmatpush.bf16.xpose.msra.mxu0 0
      %594 = vmatpush.bf16.xpose.msra.mxu0 0
      %595 = vmatpush.bf16.xpose.msra.mxu0 0
      %596 = vmatpush.bf16.xpose.msra.mxu0 %v587
      %597 = vmatmul.bf16.gmra.mxu0 %v584
      %v598 = vpop.f32.mrf.mxu0
      %v599 = vadd.f32 0.0, %v598
      %v600 = vpop.f32.mrf.mxu0
      %601 = vdwg.mxu0
      %v603 = vunpack.c.l.b16 %v470
      %v604 = vpack.c.b16 %v603, %v603
      %605 = vrot.lane.b32.xlu0 %v604, 96
      %v606 = vpop.permute.xlu0 %605
      %v608 = vsel %vm486, %v470, 0
      %v611 = vsel %vm486, %v606, 0
      %613 = vmatpush.bf16.xpose.msra.mxu0 0
      %614 = vmatpush.bf16.xpose.msra.mxu0 0
      %615 = vmatpush.bf16.xpose.msra.mxu0 0
      %616 = vmatpush.bf16.xpose.msra.mxu0 0
      %617 = vmatpush.bf16.xpose.msra.mxu0 0
      %618 = vmatpush.bf16.xpose.msra.mxu0 0
      %619 = vmatpush.bf16.xpose.msra.mxu0 0
      %620 = vmatpush.bf16.xpose.msra.mxu0 %v611
      %621 = vmatmul.bf16.gmra.mxu0 %v608
      %v622 = vpop.f32.mrf.mxu0
      %v623 = vadd.f32 0.0, %v622
      %v624 = vpop.f32.mrf.mxu0
      %625 = vdwg.mxu0
      %v627 = vunpack.c.l.b16 %v471
      %v628 = vpack.c.b16 %v627, %v627
      %629 = vrot.lane.b32.xlu0 %v628, 96
      %v630 = vpop.permute.xlu0 %629
      %v632 = vsel %vm486, %v471, 0
      %v635 = vsel %vm486, %v630, 0
      %637 = vmatpush.bf16.xpose.msra.mxu0 0
      %638 = vmatpush.bf16.xpose.msra.mxu0 0
      %639 = vmatpush.bf16.xpose.msra.mxu0 0
      %640 = vmatpush.bf16.xpose.msra.mxu0 0
      %641 = vmatpush.bf16.xpose.msra.mxu0 0
      %642 = vmatpush.bf16.xpose.msra.mxu0 0
      %643 = vmatpush.bf16.xpose.msra.mxu0 0
      %644 = vmatpush.bf16.xpose.msra.mxu0 %v635
      %645 = vmatmul.bf16.gmra.mxu0 %v632
      %v646 = vpop.f32.mrf.mxu0
      %v647 = vadd.f32 0.0, %v646
      %v648 = vpop.f32.mrf.mxu0
      %649 = vdwg.mxu0
      %v651 = vunpack.c.l.b16 %v472
      %v652 = vpack.c.b16 %v651, %v651
      %653 = vrot.lane.b32.xlu0 %v652, 96
      %v654 = vpop.permute.xlu0 %653
      %v656 = vsel %vm486, %v472, 0
      %v659 = vsel %vm486, %v654, 0
      %661 = vmatpush.bf16.xpose.msra.mxu0 0
      %662 = vmatpush.bf16.xpose.msra.mxu0 0
      %663 = vmatpush.bf16.xpose.msra.mxu0 0
      %664 = vmatpush.bf16.xpose.msra.mxu0 0
      %665 = vmatpush.bf16.xpose.msra.mxu0 0
      %666 = vmatpush.bf16.xpose.msra.mxu0 0
      %667 = vmatpush.bf16.xpose.msra.mxu0 0
      %668 = vmatpush.bf16.xpose.msra.mxu0 %v659
      %669 = vmatmul.bf16.gmra.mxu0 %v656
      %v670 = vpop.f32.mrf.mxu0
      %v671 = vadd.f32 0.0, %v670
      %v672 = vpop.f32.mrf.mxu0
      %673 = vdwg.mxu0
      %v675 = vunpack.c.l.b16 %v473
      %v676 = vpack.c.b16 %v675, %v675
      %677 = vrot.lane.b32.xlu0 %v676, 96
      %v678 = vpop.permute.xlu0 %677
      %v680 = vsel %vm486, %v473, 0
      %v683 = vsel %vm486, %v678, 0
      %685 = vmatpush.bf16.xpose.msra.mxu0 0
      %686 = vmatpush.bf16.xpose.msra.mxu0 0
      %687 = vmatpush.bf16.xpose.msra.mxu0 0
      %688 = vmatpush.bf16.xpose.msra.mxu0 0
      %689 = vmatpush.bf16.xpose.msra.mxu0 0
      %690 = vmatpush.bf16.xpose.msra.mxu0 0
      %691 = vmatpush.bf16.xpose.msra.mxu0 0
      %692 = vmatpush.bf16.xpose.msra.mxu0 %v683
      %693 = vmatmul.bf16.gmra.mxu0 %v680
      %v694 = vpop.f32.mrf.mxu0
      %v695 = vadd.f32 0.0, %v694
      %v696 = vpop.f32.mrf.mxu0
      %697 = vdwg.mxu0
      %v699 = vunpack.c.l.b16 %v474
      %v700 = vpack.c.b16 %v699, %v699
      %701 = vrot.lane.b32.xlu0 %v700, 96
      %v702 = vpop.permute.xlu0 %701
      %v704 = vsel %vm486, %v474, 0
      %v707 = vsel %vm486, %v702, 0
      %709 = vmatpush.bf16.xpose.msra.mxu0 0
      %710 = vmatpush.bf16.xpose.msra.mxu0 0
      %711 = vmatpush.bf16.xpose.msra.mxu0 0
      %712 = vmatpush.bf16.xpose.msra.mxu0 0
      %713 = vmatpush.bf16.xpose.msra.mxu0 0
      %714 = vmatpush.bf16.xpose.msra.mxu0 0
      %715 = vmatpush.bf16.xpose.msra.mxu0 0
      %716 = vmatpush.bf16.xpose.msra.mxu0 %v707
      %717 = vmatmul.bf16.gmra.mxu0 %v704
      %v718 = vpop.f32.mrf.mxu0
      %v719 = vadd.f32 0.0, %v718
      %v720 = vpop.f32.mrf.mxu0
      %721 = vdwg.mxu0
      %v723 = vunpack.c.l.b16 %v475
      %v724 = vpack.c.b16 %v723, %v723
      %725 = vrot.lane.b32.xlu0 %v724, 96
      %v726 = vpop.permute.xlu0 %725
      %v728 = vsel %vm486, %v475, 0
      %v731 = vsel %vm486, %v726, 0
      %733 = vmatpush.bf16.xpose.msra.mxu0 0
      %734 = vmatpush.bf16.xpose.msra.mxu0 0
      %735 = vmatpush.bf16.xpose.msra.mxu0 0
      %736 = vmatpush.bf16.xpose.msra.mxu0 0
      %737 = vmatpush.bf16.xpose.msra.mxu0 0
      %738 = vmatpush.bf16.xpose.msra.mxu0 0
      %739 = vmatpush.bf16.xpose.msra.mxu0 0
      %740 = vmatpush.bf16.xpose.msra.mxu0 %v731
      %741 = vmatmul.bf16.gmra.mxu0 %v728
      %v742 = vpop.f32.mrf.mxu0
      %v743 = vadd.f32 0.0, %v742
      %v744 = vpop.f32.mrf.mxu0
      %745 = vdwg.mxu0
      %v747 = vunpack.c.l.b16 %v476
      %v748 = vpack.c.b16 %v747, %v747
      %749 = vrot.lane.b32.xlu0 %v748, 96
      %v750 = vpop.permute.xlu0 %749
      %v752 = vsel %vm486, %v476, 0
      %v755 = vsel %vm486, %v750, 0
      %757 = vmatpush.bf16.xpose.msra.mxu0 0
      %758 = vmatpush.bf16.xpose.msra.mxu0 0
      %759 = vmatpush.bf16.xpose.msra.mxu0 0
      %760 = vmatpush.bf16.xpose.msra.mxu0 0
      %761 = vmatpush.bf16.xpose.msra.mxu0 0
      %762 = vmatpush.bf16.xpose.msra.mxu0 0
      %763 = vmatpush.bf16.xpose.msra.mxu0 0
      %764 = vmatpush.bf16.xpose.msra.mxu0 %v755
      %765 = vmatmul.bf16.gmra.mxu0 %v752
      %v766 = vpop.f32.mrf.mxu0
      %v767 = vadd.f32 0.0, %v766
      %v768 = vpop.f32.mrf.mxu0
      %769 = vdwg.mxu0
      %v771 = vunpack.c.l.b16 %v477
      %v772 = vpack.c.b16 %v771, %v771
      %773 = vrot.lane.b32.xlu0 %v772, 96
      %v774 = vpop.permute.xlu0 %773
      %v776 = vsel %vm486, %v477, 0
      %v779 = vsel %vm486, %v774, 0
      %781 = vmatpush.bf16.xpose.msra.mxu0 0
      %782 = vmatpush.bf16.xpose.msra.mxu0 0
      %783 = vmatpush.bf16.xpose.msra.mxu0 0
      %784 = vmatpush.bf16.xpose.msra.mxu0 0
      %785 = vmatpush.bf16.xpose.msra.mxu0 0
      %786 = vmatpush.bf16.xpose.msra.mxu0 0
      %787 = vmatpush.bf16.xpose.msra.mxu0 0
      %788 = vmatpush.bf16.xpose.msra.mxu0 %v779
      %789 = vmatmul.bf16.gmra.mxu0 %v776
      %v790 = vpop.f32.mrf.mxu0
      %v791 = vadd.f32 0.0, %v790
      %v792 = vpop.f32.mrf.mxu0
      %793 = vdwg.mxu0
      %v795 = vunpack.c.l.b16 %v478
      %v796 = vpack.c.b16 %v795, %v795
      %797 = vrot.lane.b32.xlu0 %v796, 96
      %v798 = vpop.permute.xlu0 %797
      %v800 = vsel %vm486, %v478, 0
      %v803 = vsel %vm486, %v798, 0
      %805 = vmatpush.bf16.xpose.msra.mxu0 0
      %806 = vmatpush.bf16.xpose.msra.mxu0 0
      %807 = vmatpush.bf16.xpose.msra.mxu0 0
      %808 = vmatpush.bf16.xpose.msra.mxu0 0
      %809 = vmatpush.bf16.xpose.msra.mxu0 0
      %810 = vmatpush.bf16.xpose.msra.mxu0 0
      %811 = vmatpush.bf16.xpose.msra.mxu0 0
      %812 = vmatpush.bf16.xpose.msra.mxu0 %v803
      %813 = vmatmul.bf16.gmra.mxu0 %v800
      %v814 = vpop.f32.mrf.mxu0
      %v815 = vadd.f32 0.0, %v814
      %v816 = vpop.f32.mrf.mxu0
      %817 = vdwg.mxu0
      %v819 = vunpack.c.l.b16 %v479
      %v820 = vpack.c.b16 %v819, %v819
      %821 = vrot.lane.b32.xlu0 %v820, 96
      %v822 = vpop.permute.xlu0 %821
      %v824 = vsel %vm486, %v479, 0
      %v827 = vsel %vm486, %v822, 0
      %829 = vmatpush.bf16.xpose.msra.mxu0 0
      %830 = vmatpush.bf16.xpose.msra.mxu0 0
      %831 = vmatpush.bf16.xpose.msra.mxu0 0
      %832 = vmatpush.bf16.xpose.msra.mxu0 0
      %833 = vmatpush.bf16.xpose.msra.mxu0 0
      %834 = vmatpush.bf16.xpose.msra.mxu0 0
      %835 = vmatpush.bf16.xpose.msra.mxu0 0
      %836 = vmatpush.bf16.xpose.msra.mxu0 %v827
      %837 = vmatmul.bf16.gmra.mxu0 %v824
      %v838 = vpop.f32.mrf.mxu0
      %v839 = vadd.f32 0.0, %v838
      %v840 = vpop.f32.mrf.mxu0
      %841 = vdwg.mxu0
      %v843 = vunpack.c.l.b16 %v480
      %v844 = vpack.c.b16 %v843, %v843
      %845 = vrot.lane.b32.xlu0 %v844, 96
      %v846 = vpop.permute.xlu0 %845
      %v848 = vsel %vm486, %v480, 0
      %v851 = vsel %vm486, %v846, 0
      %853 = vmatpush.bf16.xpose.msra.mxu0 0
      %854 = vmatpush.bf16.xpose.msra.mxu0 0
      %855 = vmatpush.bf16.xpose.msra.mxu0 0
      %856 = vmatpush.bf16.xpose.msra.mxu0 0
      %857 = vmatpush.bf16.xpose.msra.mxu0 0
      %858 = vmatpush.bf16.xpose.msra.mxu0 0
      %859 = vmatpush.bf16.xpose.msra.mxu0 0
      %860 = vmatpush.bf16.xpose.msra.mxu0 %v851
      %861 = vmatmul.bf16.gmra.mxu0 %v848
      %v862 = vpop.f32.mrf.mxu0
      %v863 = vadd.f32 0.0, %v862
      %v864 = vpop.f32.mrf.mxu0
      %865 = vdwg.mxu0
      %v866 = vmul.f32 %v503, 0.25
      %v867 = vmul.f32 %v527, 0.25
      %v868 = vmul.f32 %v551, 0.25
      %v869 = vmul.f32 %v575, 0.25
      %v870 = vmul.f32 %v599, 0.25
      %v871 = vmul.f32 %v623, 0.25
      %v872 = vmul.f32 %v647, 0.25
      %v873 = vmul.f32 %v671, 0.25
      %v874 = vmul.f32 %v695, 0.25
      %v875 = vmul.f32 %v719, 0.25
      %v876 = vmul.f32 %v743, 0.25
      %v877 = vmul.f32 %v767, 0.25
      %v878 = vmul.f32 %v791, 0.25
      %v879 = vmul.f32 %v815, 0.25
      %v880 = vmul.f32 %v839, 0.25
      %v881 = vmul.f32 %v863, 0.25
      %vm882 = vcmask 27648
      %v883 = vsel %vm882, %v866, -inf
      %884 = vmax.xlane.f32.xlu0 %v883
      %v885 = vpop.xlane.xlu0 %884
      %v886 = vsel %vm882, %v867, -inf
      %887 = vmax.xlane.f32.xlu0 %v886
      %v888 = vpop.xlane.xlu0 %887
      %v889 = vsel %vm882, %v868, -inf
      %890 = vmax.xlane.f32.xlu0 %v889
      %v891 = vpop.xlane.xlu0 %890
      %v892 = vsel %vm882, %v869, -inf
      %893 = vmax.xlane.f32.xlu0 %v892
      %v894 = vpop.xlane.xlu0 %893
      %v895 = vsel %vm882, %v870, -inf
      %896 = vmax.xlane.f32.xlu0 %v895
      %v897 = vpop.xlane.xlu0 %896
      %v898 = vsel %vm882, %v871, -inf
      %899 = vmax.xlane.f32.xlu0 %v898
      %v900 = vpop.xlane.xlu0 %899
      %v901 = vsel %vm882, %v872, -inf
      %902 = vmax.xlane.f32.xlu0 %v901
      %v903 = vpop.xlane.xlu0 %902
      %v904 = vsel %vm882, %v873, -inf
      %905 = vmax.xlane.f32.xlu0 %v904
      %v906 = vpop.xlane.xlu0 %905
      %v907 = vsel %vm882, %v874, -inf
      %908 = vmax.xlane.f32.xlu0 %v907
      %v909 = vpop.xlane.xlu0 %908
      %v910 = vsel %vm882, %v875, -inf
      %911 = vmax.xlane.f32.xlu0 %v910
      %v912 = vpop.xlane.xlu0 %911
      %v913 = vsel %vm882, %v876, -inf
      %914 = vmax.xlane.f32.xlu0 %v913
      %v915 = vpop.xlane.xlu0 %914
      %v916 = vsel %vm882, %v877, -inf
      %917 = vmax.xlane.f32.xlu0 %v916
      %v918 = vpop.xlane.xlu0 %917
      %v919 = vsel %vm882, %v878, -inf
      %920 = vmax.xlane.f32.xlu0 %v919
      %v921 = vpop.xlane.xlu0 %920
      %v922 = vsel %vm882, %v879, -inf
      %923 = vmax.xlane.f32.xlu0 %v922
      %v924 = vpop.xlane.xlu0 %923
      %v925 = vsel %vm882, %v880, -inf
      %926 = vmax.xlane.f32.xlu0 %v925
      %v927 = vpop.xlane.xlu0 %926
      %v928 = vsel %vm882, %v881, -inf
      %929 = vmax.xlane.f32.xlu0 %v928
      %v930 = vpop.xlane.xlu0 %929
      %v931 = vsub.f32 %v866, %v885
      %v932 = vsub.f32 %v867, %v888
      %v933 = vsub.f32 %v868, %v891
      %v934 = vsub.f32 %v869, %v894
      %v935 = vsub.f32 %v870, %v897
      %v936 = vsub.f32 %v871, %v900
      %v937 = vsub.f32 %v872, %v903
      %v938 = vsub.f32 %v873, %v906
      %v939 = vsub.f32 %v874, %v909
      %v940 = vsub.f32 %v875, %v912
      %v941 = vsub.f32 %v876, %v915
      %v942 = vsub.f32 %v877, %v918
      %v943 = vsub.f32 %v878, %v921
      %v944 = vsub.f32 %v879, %v924
      %v945 = vsub.f32 %v880, %v927
      %v946 = vsub.f32 %v881, %v930
      %v947 = vmul.f32 %v931, 1.442695
      %v948 = vpow.pop %v947
      %v949 = vmul.f32 %v932, 1.442695
      %v950 = vpow.pop %v949
      %v951 = vmul.f32 %v933, 1.442695
      %v952 = vpow.pop %v951
      %v953 = vmul.f32 %v934, 1.442695
      %v954 = vpow.pop %v953
      %v955 = vmul.f32 %v935, 1.442695
      %v956 = vpow.pop %v955
      %v957 = vmul.f32 %v936, 1.442695
      %v958 = vpow.pop %v957
      %v959 = vmul.f32 %v937, 1.442695
      %v960 = vpow.pop %v959
      %v961 = vmul.f32 %v938, 1.442695
      %v962 = vpow.pop %v961
      %v963 = vmul.f32 %v939, 1.442695
      %v964 = vpow.pop %v963
      %v965 = vmul.f32 %v940, 1.442695
      %v966 = vpow.pop %v965
      %v967 = vmul.f32 %v941, 1.442695
      %v968 = vpow.pop %v967
      %v969 = vmul.f32 %v942, 1.442695
      %v970 = vpow.pop %v969
      %v971 = vmul.f32 %v943, 1.442695
      %v972 = vpow.pop %v971
      %v973 = vmul.f32 %v944, 1.442695
      %v974 = vpow.pop %v973
      %v975 = vmul.f32 %v945, 1.442695
      %v976 = vpow.pop %v975
      %v977 = vmul.f32 %v946, 1.442695
      %v978 = vpow.pop %v977
      %v979 = vsel %vm882, %v948, 0.0
      %980 = vadd.xlane.f32.xlu0 %v979
      %v981 = vpop.xlane.xlu0 %980
      %v982 = vsel %vm882, %v950, 0.0
      %983 = vadd.xlane.f32.xlu0 %v982
      %v984 = vpop.xlane.xlu0 %983
      %v985 = vsel %vm882, %v952, 0.0
      %986 = vadd.xlane.f32.xlu0 %v985
      %v987 = vpop.xlane.xlu0 %986
      %v988 = vsel %vm882, %v954, 0.0
      %989 = vadd.xlane.f32.xlu0 %v988
      %v990 = vpop.xlane.xlu0 %989
      %v991 = vsel %vm882, %v956, 0.0
      %992 = vadd.xlane.f32.xlu0 %v991
      %v993 = vpop.xlane.xlu0 %992
      %v994 = vsel %vm882, %v958, 0.0
      %995 = vadd.xlane.f32.xlu0 %v994
      %v996 = vpop.xlane.xlu0 %995
      %v997 = vsel %vm882, %v960, 0.0
      %998 = vadd.xlane.f32.xlu0 %v997
      %v999 = vpop.xlane.xlu0 %998
      %v1000 = vsel %vm882, %v962, 0.0
      %1001 = vadd.xlane.f32.xlu0 %v1000
      %v1002 = vpop.xlane.xlu0 %1001
      %v1003 = vsel %vm882, %v964, 0.0
      %1004 = vadd.xlane.f32.xlu0 %v1003
      %v1005 = vpop.xlane.xlu0 %1004
      %v1006 = vsel %vm882, %v966, 0.0
      %1007 = vadd.xlane.f32.xlu0 %v1006
      %v1008 = vpop.xlane.xlu0 %1007
      %v1009 = vsel %vm882, %v968, 0.0
      %1010 = vadd.xlane.f32.xlu0 %v1009
      %v1011 = vpop.xlane.xlu0 %1010
      %v1012 = vsel %vm882, %v970, 0.0
      %1013 = vadd.xlane.f32.xlu0 %v1012
      %v1014 = vpop.xlane.xlu0 %1013
      %v1015 = vsel %vm882, %v972, 0.0
      %1016 = vadd.xlane.f32.xlu0 %v1015
      %v1017 = vpop.xlane.xlu0 %1016
      %v1018 = vsel %vm882, %v974, 0.0
      %1019 = vadd.xlane.f32.xlu0 %v1018
      %v1020 = vpop.xlane.xlu0 %1019
      %v1021 = vsel %vm882, %v976, 0.0
      %1022 = vadd.xlane.f32.xlu0 %v1021
      %v1023 = vpop.xlane.xlu0 %1022
      %v1024 = vsel %vm882, %v978, 0.0
      %1025 = vadd.xlane.f32.xlu0 %v1024
      %v1026 = vpop.xlane.xlu0 %1025
      %v1027 = vrcp.pop %v981
      %v1028 = vmul.f32 %v981, %v1027
      %v1029 = vsub.f32 1.0, %v1028
      %v1030 = vmul.f32 %v1027, %v1029
      %v1031 = vadd.f32 %v1027, %v1030
      %vm1032 = vweird.f32 %v981
      %vm1033 = vweird.f32 %v1027
      %vm1034 = vmor %vm1032, %vm1033
      %v1035 = vsel %vm1034, %v1027, %v1031
      %v1036 = vand.u32 2147483647, %v981
      %vm1037 = vcmp.eq.f32.partialorder %v1036, 8.507059e+37
      %v1038 = vand.u32 %v981, 2147483648
      %v1039 = vor.u32 1.1754944e-38, %v1038
      %v1040 = vsel %vm1037, %v1039, %v1035
      %v1041 = vmul.f32 %v948, %v1040
      %v1042 = vrcp.pop %v984
      %v1043 = vmul.f32 %v984, %v1042
      %v1044 = vsub.f32 1.0, %v1043
      %v1045 = vmul.f32 %v1042, %v1044
      %v1046 = vadd.f32 %v1042, %v1045
      %vm1047 = vweird.f32 %v984
      %vm1048 = vweird.f32 %v1042
      %vm1049 = vmor %vm1047, %vm1048
      %v1050 = vsel %vm1049, %v1042, %v1046
      %v1051 = vand.u32 2147483647, %v984
      %vm1052 = vcmp.eq.f32.partialorder %v1051, 8.507059e+37
      %v1053 = vand.u32 %v984, 2147483648
      %v1054 = vor.u32 1.1754944e-38, %v1053
      %v1055 = vsel %vm1052, %v1054, %v1050
      %v1056 = vmul.f32 %v950, %v1055
      %v1057 = vrcp.pop %v987
      %v1058 = vmul.f32 %v987, %v1057
      %v1059 = vsub.f32 1.0, %v1058
      %v1060 = vmul.f32 %v1057, %v1059
      %v1061 = vadd.f32 %v1057, %v1060
      %vm1062 = vweird.f32 %v987
      %vm1063 = vweird.f32 %v1057
      %vm1064 = vmor %vm1062, %vm1063
      %v1065 = vsel %vm1064, %v1057, %v1061
      %v1066 = vand.u32 2147483647, %v987
      %vm1067 = vcmp.eq.f32.partialorder %v1066, 8.507059e+37
      %v1068 = vand.u32 %v987, 2147483648
      %v1069 = vor.u32 1.1754944e-38, %v1068
      %v1070 = vsel %vm1067, %v1069, %v1065
      %v1071 = vmul.f32 %v952, %v1070
      %v1072 = vrcp.pop %v990
      %v1073 = vmul.f32 %v990, %v1072
      %v1074 = vsub.f32 1.0, %v1073
      %v1075 = vmul.f32 %v1072, %v1074
      %v1076 = vadd.f32 %v1072, %v1075
      %vm1077 = vweird.f32 %v990
      %vm1078 = vweird.f32 %v1072
      %vm1079 = vmor %vm1077, %vm1078
      %v1080 = vsel %vm1079, %v1072, %v1076
      %v1081 = vand.u32 2147483647, %v990
      %vm1082 = vcmp.eq.f32.partialorder %v1081, 8.507059e+37
      %v1083 = vand.u32 %v990, 2147483648
      %v1084 = vor.u32 1.1754944e-38, %v1083
      %v1085 = vsel %vm1082, %v1084, %v1080
      %v1086 = vmul.f32 %v954, %v1085
      %v1087 = vrcp.pop %v993
      %v1088 = vmul.f32 %v993, %v1087
      %v1089 = vsub.f32 1.0, %v1088
      %v1090 = vmul.f32 %v1087, %v1089
      %v1091 = vadd.f32 %v1087, %v1090
      %vm1092 = vweird.f32 %v993
      %vm1093 = vweird.f32 %v1087
      %vm1094 = vmor %vm1092, %vm1093
      %v1095 = vsel %vm1094, %v1087, %v1091
      %v1096 = vand.u32 2147483647, %v993
      %vm1097 = vcmp.eq.f32.partialorder %v1096, 8.507059e+37
      %v1098 = vand.u32 %v993, 2147483648
      %v1099 = vor.u32 1.1754944e-38, %v1098
      %v1100 = vsel %vm1097, %v1099, %v1095
      %v1101 = vmul.f32 %v956, %v1100
      %v1102 = vrcp.pop %v996
      %v1103 = vmul.f32 %v996, %v1102
      %v1104 = vsub.f32 1.0, %v1103
      %v1105 = vmul.f32 %v1102, %v1104
      %v1106 = vadd.f32 %v1102, %v1105
      %vm1107 = vweird.f32 %v996
      %vm1108 = vweird.f32 %v1102
      %vm1109 = vmor %vm1107, %vm1108
      %v1110 = vsel %vm1109, %v1102, %v1106
      %v1111 = vand.u32 2147483647, %v996
      %vm1112 = vcmp.eq.f32.partialorder %v1111, 8.507059e+37
      %v1113 = vand.u32 %v996, 2147483648
      %v1114 = vor.u32 1.1754944e-38, %v1113
      %v1115 = vsel %vm1112, %v1114, %v1110
      %v1116 = vmul.f32 %v958, %v1115
      %v1117 = vrcp.pop %v999
      %v1118 = vmul.f32 %v999, %v1117
      %v1119 = vsub.f32 1.0, %v1118
      %v1120 = vmul.f32 %v1117, %v1119
      %v1121 = vadd.f32 %v1117, %v1120
      %vm1122 = vweird.f32 %v999
      %vm1123 = vweird.f32 %v1117
      %vm1124 = vmor %vm1122, %vm1123
      %v1125 = vsel %vm1124, %v1117, %v1121
      %v1126 = vand.u32 2147483647, %v999
      %vm1127 = vcmp.eq.f32.partialorder %v1126, 8.507059e+37
      %v1128 = vand.u32 %v999, 2147483648
      %v1129 = vor.u32 1.1754944e-38, %v1128
      %v1130 = vsel %vm1127, %v1129, %v1125
      %v1131 = vmul.f32 %v960, %v1130
      %v1132 = vrcp.pop %v1002
      %v1133 = vmul.f32 %v1002, %v1132
      %v1134 = vsub.f32 1.0, %v1133
      %v1135 = vmul.f32 %v1132, %v1134
      %v1136 = vadd.f32 %v1132, %v1135
      %vm1137 = vweird.f32 %v1002
      %vm1138 = vweird.f32 %v1132
      %vm1139 = vmor %vm1137, %vm1138
      %v1140 = vsel %vm1139, %v1132, %v1136
      %v1141 = vand.u32 2147483647, %v1002
      %vm1142 = vcmp.eq.f32.partialorder %v1141, 8.507059e+37
      %v1143 = vand.u32 %v1002, 2147483648
      %v1144 = vor.u32 1.1754944e-38, %v1143
      %v1145 = vsel %vm1142, %v1144, %v1140
      %v1146 = vmul.f32 %v962, %v1145
      %v1147 = vrcp.pop %v1005
      %v1148 = vmul.f32 %v1005, %v1147
      %v1149 = vsub.f32 1.0, %v1148
      %v1150 = vmul.f32 %v1147, %v1149
      %v1151 = vadd.f32 %v1147, %v1150
      %vm1152 = vweird.f32 %v1005
      %vm1153 = vweird.f32 %v1147
      %vm1154 = vmor %vm1152, %vm1153
      %v1155 = vsel %vm1154, %v1147, %v1151
      %v1156 = vand.u32 2147483647, %v1005
      %vm1157 = vcmp.eq.f32.partialorder %v1156, 8.507059e+37
      %v1158 = vand.u32 %v1005, 2147483648
      %v1159 = vor.u32 1.1754944e-38, %v1158
      %v1160 = vsel %vm1157, %v1159, %v1155
      %v1161 = vmul.f32 %v964, %v1160
      %v1162 = vrcp.pop %v1008
      %v1163 = vmul.f32 %v1008, %v1162
      %v1164 = vsub.f32 1.0, %v1163
      %v1165 = vmul.f32 %v1162, %v1164
      %v1166 = vadd.f32 %v1162, %v1165
      %vm1167 = vweird.f32 %v1008
      %vm1168 = vweird.f32 %v1162
      %vm1169 = vmor %vm1167, %vm1168
      %v1170 = vsel %vm1169, %v1162, %v1166
      %v1171 = vand.u32 2147483647, %v1008
      %vm1172 = vcmp.eq.f32.partialorder %v1171, 8.507059e+37
      %v1173 = vand.u32 %v1008, 2147483648
      %v1174 = vor.u32 1.1754944e-38, %v1173
      %v1175 = vsel %vm1172, %v1174, %v1170
      %v1176 = vmul.f32 %v966, %v1175
      %v1177 = vrcp.pop %v1011
      %v1178 = vmul.f32 %v1011, %v1177
      %v1179 = vsub.f32 1.0, %v1178
      %v1180 = vmul.f32 %v1177, %v1179
      %v1181 = vadd.f32 %v1177, %v1180
      %vm1182 = vweird.f32 %v1011
      %vm1183 = vweird.f32 %v1177
      %vm1184 = vmor %vm1182, %vm1183
      %v1185 = vsel %vm1184, %v1177, %v1181
      %v1186 = vand.u32 2147483647, %v1011
      %vm1187 = vcmp.eq.f32.partialorder %v1186, 8.507059e+37
      %v1188 = vand.u32 %v1011, 2147483648
      %v1189 = vor.u32 1.1754944e-38, %v1188
      %v1190 = vsel %vm1187, %v1189, %v1185
      %v1191 = vmul.f32 %v968, %v1190
      %v1192 = vrcp.pop %v1014
      %v1193 = vmul.f32 %v1014, %v1192
      %v1194 = vsub.f32 1.0, %v1193
      %v1195 = vmul.f32 %v1192, %v1194
      %v1196 = vadd.f32 %v1192, %v1195
      %vm1197 = vweird.f32 %v1014
      %vm1198 = vweird.f32 %v1192
      %vm1199 = vmor %vm1197, %vm1198
      %v1200 = vsel %vm1199, %v1192, %v1196
      %v1201 = vand.u32 2147483647, %v1014
      %vm1202 = vcmp.eq.f32.partialorder %v1201, 8.507059e+37
      %v1203 = vand.u32 %v1014, 2147483648
      %v1204 = vor.u32 1.1754944e-38, %v1203
      %v1205 = vsel %vm1202, %v1204, %v1200
      %v1206 = vmul.f32 %v970, %v1205
      %v1207 = vrcp.pop %v1017
      %v1208 = vmul.f32 %v1017, %v1207
      %v1209 = vsub.f32 1.0, %v1208
      %v1210 = vmul.f32 %v1207, %v1209
      %v1211 = vadd.f32 %v1207, %v1210
      %vm1212 = vweird.f32 %v1017
      %vm1213 = vweird.f32 %v1207
      %vm1214 = vmor %vm1212, %vm1213
      %v1215 = vsel %vm1214, %v1207, %v1211
      %v1216 = vand.u32 2147483647, %v1017
      %vm1217 = vcmp.eq.f32.partialorder %v1216, 8.507059e+37
      %v1218 = vand.u32 %v1017, 2147483648
      %v1219 = vor.u32 1.1754944e-38, %v1218
      %v1220 = vsel %vm1217, %v1219, %v1215
      %v1221 = vmul.f32 %v972, %v1220
      %v1222 = vrcp.pop %v1020
      %v1223 = vmul.f32 %v1020, %v1222
      %v1224 = vsub.f32 1.0, %v1223
      %v1225 = vmul.f32 %v1222, %v1224
      %v1226 = vadd.f32 %v1222, %v1225
      %vm1227 = vweird.f32 %v1020
      %vm1228 = vweird.f32 %v1222
      %vm1229 = vmor %vm1227, %vm1228
      %v1230 = vsel %vm1229, %v1222, %v1226
      %v1231 = vand.u32 2147483647, %v1020
      %vm1232 = vcmp.eq.f32.partialorder %v1231, 8.507059e+37
      %v1233 = vand.u32 %v1020, 2147483648
      %v1234 = vor.u32 1.1754944e-38, %v1233
      %v1235 = vsel %vm1232, %v1234, %v1230
      %v1236 = vmul.f32 %v974, %v1235
      %v1237 = vrcp.pop %v1023
      %v1238 = vmul.f32 %v1023, %v1237
      %v1239 = vsub.f32 1.0, %v1238
      %v1240 = vmul.f32 %v1237, %v1239
      %v1241 = vadd.f32 %v1237, %v1240
      %vm1242 = vweird.f32 %v1023
      %vm1243 = vweird.f32 %v1237
      %vm1244 = vmor %vm1242, %vm1243
      %v1245 = vsel %vm1244, %v1237, %v1241
      %v1246 = vand.u32 2147483647, %v1023
      %vm1247 = vcmp.eq.f32.partialorder %v1246, 8.507059e+37
      %v1248 = vand.u32 %v1023, 2147483648
      %v1249 = vor.u32 1.1754944e-38, %v1248
      %v1250 = vsel %vm1247, %v1249, %v1245
      %v1251 = vmul.f32 %v976, %v1250
      %v1252 = vrcp.pop %v1026
      %v1253 = vmul.f32 %v1026, %v1252
      %v1254 = vsub.f32 1.0, %v1253
      %v1255 = vmul.f32 %v1252, %v1254
      %v1256 = vadd.f32 %v1252, %v1255
      %vm1257 = vweird.f32 %v1026
      %vm1258 = vweird.f32 %v1252
      %vm1259 = vmor %vm1257, %vm1258
      %v1260 = vsel %vm1259, %v1252, %v1256
      %v1261 = vand.u32 2147483647, %v1026
      %vm1262 = vcmp.eq.f32.partialorder %v1261, 8.507059e+37
      %v1263 = vand.u32 %v1026, 2147483648
      %v1264 = vor.u32 1.1754944e-38, %v1263
      %v1265 = vsel %vm1262, %v1264, %v1260
      %v1266 = vmul.f32 %v978, %v1265
      %v1267 = vpack.c.bf16 %v1041, %v1041
      %v1268 = vpack.c.bf16 %v1056, %v1056
      %v1269 = vpack.c.bf16 %v1071, %v1071
      %v1270 = vpack.c.bf16 %v1086, %v1086
      %v1271 = vpack.c.bf16 %v1101, %v1101
      %v1272 = vpack.c.bf16 %v1116, %v1116
      %v1273 = vpack.c.bf16 %v1131, %v1131
      %v1274 = vpack.c.bf16 %v1146, %v1146
      %v1275 = vpack.c.bf16 %v1161, %v1161
      %v1276 = vpack.c.bf16 %v1176, %v1176
      %v1277 = vpack.c.bf16 %v1191, %v1191
      %v1278 = vpack.c.bf16 %v1206, %v1206
      %v1279 = vpack.c.bf16 %v1221, %v1221
      %v1280 = vpack.c.bf16 %v1236, %v1236
      %v1281 = vpack.c.bf16 %v1251, %v1251
      %v1282 = vpack.c.bf16 %v1266, %v1266
      %1283 = vrot.lane.b32.xlu0 %v483, 64
      %v1284 = vpop.permute.xlu0 %1283
      %vm1285 = vcmask 31744
      %v1287 = vsel %vm1285, %v1267, 0
      %vm1289 = vcmask 1041408
      %v1291 = vsel %vm1289, %v1284, 0
      %1293 = vmatpush.bf16.msra.mxu0 0
      %1294 = vmatpush.bf16.msra.mxu0 0
      %1295 = vmatpush.bf16.msra.mxu0 0
      %1296 = vmatpush.bf16.msra.mxu0 0
      %1297 = vmatpush.bf16.msra.mxu0 0
      %1298 = vmatpush.bf16.msra.mxu0 0
      %1299 = vmatpush.bf16.msra.mxu0 0
      %1300 = vmatpush.bf16.msra.mxu0 %v1291
      %1301 = vmatmul.bf16.gmra.mxu0 %v1287
      %v1302 = vpop.f32.mrf.mxu0
      %v1303 = vadd.f32 0.0, %v1302
      %v1304 = vpop.f32.mrf.mxu0
      %1305 = vdwg.mxu0
      %1306 = vrot.lane.b32.xlu0 %v508, 64
      %v1307 = vpop.permute.xlu0 %1306
      %v1309 = vsel %vm1285, %v1268, 0
      %v1312 = vsel %vm1289, %v1307, 0
      %1314 = vmatpush.bf16.msra.mxu0 0
      %1315 = vmatpush.bf16.msra.mxu0 0
      %1316 = vmatpush.bf16.msra.mxu0 0
      %1317 = vmatpush.bf16.msra.mxu0 0
      %1318 = vmatpush.bf16.msra.mxu0 0
      %1319 = vmatpush.bf16.msra.mxu0 0
      %1320 = vmatpush.bf16.msra.mxu0 0
      %1321 = vmatpush.bf16.msra.mxu0 %v1312
      %1322 = vmatmul.bf16.gmra.mxu0 %v1309
      %v1323 = vpop.f32.mrf.mxu0
      %v1324 = vadd.f32 0.0, %v1323
      %v1325 = vpop.f32.mrf.mxu0
      %1326 = vdwg.mxu0
      %1327 = vrot.lane.b32.xlu0 %v532, 64
      %v1328 = vpop.permute.xlu0 %1327
      %v1330 = vsel %vm1285, %v1269, 0
      %v1333 = vsel %vm1289, %v1328, 0
      %1335 = vmatpush.bf16.msra.mxu0 0
      %1336 = vmatpush.bf16.msra.mxu0 0
      %1337 = vmatpush.bf16.msra.mxu0 0
      %1338 = vmatpush.bf16.msra.mxu0 0
      %1339 = vmatpush.bf16.msra.mxu0 0
      %1340 = vmatpush.bf16.msra.mxu0 0
      %1341 = vmatpush.bf16.msra.mxu0 0
      %1342 = vmatpush.bf16.msra.mxu0 %v1333
      %1343 = vmatmul.bf16.gmra.mxu0 %v1330
      %v1344 = vpop.f32.mrf.mxu0
      %v1345 = vadd.f32 0.0, %v1344
      %v1346 = vpop.f32.mrf.mxu0
      %1347 = vdwg.mxu0
      %1348 = vrot.lane.b32.xlu0 %v556, 64
      %v1349 = vpop.permute.xlu0 %1348
      %v1351 = vsel %vm1285, %v1270, 0
      %v1354 = vsel %vm1289, %v1349, 0
      %1356 = vmatpush.bf16.msra.mxu0 0
      %1357 = vmatpush.bf16.msra.mxu0 0
      %1358 = vmatpush.bf16.msra.mxu0 0
      %1359 = vmatpush.bf16.msra.mxu0 0
      %1360 = vmatpush.bf16.msra.mxu0 0
      %1361 = vmatpush.bf16.msra.mxu0 0
      %1362 = vmatpush.bf16.msra.mxu0 0
      %1363 = vmatpush.bf16.msra.mxu0 %v1354
      %1364 = vmatmul.bf16.gmra.mxu0 %v1351
      %v1365 = vpop.f32.mrf.mxu0
      %v1366 = vadd.f32 0.0, %v1365
      %v1367 = vpop.f32.mrf.mxu0
      %1368 = vdwg.mxu0
      %1369 = vrot.lane.b32.xlu0 %v580, 64
      %v1370 = vpop.permute.xlu0 %1369
      %v1372 = vsel %vm1285, %v1271, 0
      %v1375 = vsel %vm1289, %v1370, 0
      %1377 = vmatpush.bf16.msra.mxu0 0
      %1378 = vmatpush.bf16.msra.mxu0 0
      %1379 = vmatpush.bf16.msra.mxu0 0
      %1380 = vmatpush.bf16.msra.mxu0 0
      %1381 = vmatpush.bf16.msra.mxu0 0
      %1382 = vmatpush.bf16.msra.mxu0 0
      %1383 = vmatpush.bf16.msra.mxu0 0
      %1384 = vmatpush.bf16.msra.mxu0 %v1375
      %1385 = vmatmul.bf16.gmra.mxu0 %v1372
      %v1386 = vpop.f32.mrf.mxu0
      %v1387 = vadd.f32 0.0, %v1386
      %v1388 = vpop.f32.mrf.mxu0
      %1389 = vdwg.mxu0
      %1390 = vrot.lane.b32.xlu0 %v604, 64
      %v1391 = vpop.permute.xlu0 %1390
      %v1393 = vsel %vm1285, %v1272, 0
      %v1396 = vsel %vm1289, %v1391, 0
      %1398 = vmatpush.bf16.msra.mxu0 0
      %1399 = vmatpush.bf16.msra.mxu0 0
      %1400 = vmatpush.bf16.msra.mxu0 0
      %1401 = vmatpush.bf16.msra.mxu0 0
      %1402 = vmatpush.bf16.msra.mxu0 0
      %1403 = vmatpush.bf16.msra.mxu0 0
      %1404 = vmatpush.bf16.msra.mxu0 0
      %1405 = vmatpush.bf16.msra.mxu0 %v1396
      %1406 = vmatmul.bf16.gmra.mxu0 %v1393
      %v1407 = vpop.f32.mrf.mxu0
      %v1408 = vadd.f32 0.0, %v1407
      %v1409 = vpop.f32.mrf.mxu0
      %1410 = vdwg.mxu0
      %1411 = vrot.lane.b32.xlu0 %v628, 64
      %v1412 = vpop.permute.xlu0 %1411
      %v1414 = vsel %vm1285, %v1273, 0
      %v1417 = vsel %vm1289, %v1412, 0
      %1419 = vmatpush.bf16.msra.mxu0 0
      %1420 = vmatpush.bf16.msra.mxu0 0
      %1421 = vmatpush.bf16.msra.mxu0 0
      %1422 = vmatpush.bf16.msra.mxu0 0
      %1423 = vmatpush.bf16.msra.mxu0 0
      %1424 = vmatpush.bf16.msra.mxu0 0
      %1425 = vmatpush.bf16.msra.mxu0 0
      %1426 = vmatpush.bf16.msra.mxu0 %v1417
      %1427 = vmatmul.bf16.gmra.mxu0 %v1414
      %v1428 = vpop.f32.mrf.mxu0
      %v1429 = vadd.f32 0.0, %v1428
      %v1430 = vpop.f32.mrf.mxu0
      %1431 = vdwg.mxu0
      %1432 = vrot.lane.b32.xlu0 %v652, 64
      %v1433 = vpop.permute.xlu0 %1432
      %v1435 = vsel %vm1285, %v1274, 0
      %v1438 = vsel %vm1289, %v1433, 0
      %1440 = vmatpush.bf16.msra.mxu0 0
      %1441 = vmatpush.bf16.msra.mxu0 0
      %1442 = vmatpush.bf16.msra.mxu0 0
      %1443 = vmatpush.bf16.msra.mxu0 0
      %1444 = vmatpush.bf16.msra.mxu0 0
      %1445 = vmatpush.bf16.msra.mxu0 0
      %1446 = vmatpush.bf16.msra.mxu0 0
      %1447 = vmatpush.bf16.msra.mxu0 %v1438
      %1448 = vmatmul.bf16.gmra.mxu0 %v1435
      %v1449 = vpop.f32.mrf.mxu0
      %v1450 = vadd.f32 0.0, %v1449
      %v1451 = vpop.f32.mrf.mxu0
      %1452 = vdwg.mxu0
      %1453 = vrot.lane.b32.xlu0 %v676, 64
      %v1454 = vpop.permute.xlu0 %1453
      %v1456 = vsel %vm1285, %v1275, 0
      %v1459 = vsel %vm1289, %v1454, 0
      %1461 = vmatpush.bf16.msra.mxu0 0
      %1462 = vmatpush.bf16.msra.mxu0 0
      %1463 = vmatpush.bf16.msra.mxu0 0
      %1464 = vmatpush.bf16.msra.mxu0 0
      %1465 = vmatpush.bf16.msra.mxu0 0
      %1466 = vmatpush.bf16.msra.mxu0 0
      %1467 = vmatpush.bf16.msra.mxu0 0
      %1468 = vmatpush.bf16.msra.mxu0 %v1459
      %1469 = vmatmul.bf16.gmra.mxu0 %v1456
      %v1470 = vpop.f32.mrf.mxu0
      %v1471 = vadd.f32 0.0, %v1470
      %v1472 = vpop.f32.mrf.mxu0
      %1473 = vdwg.mxu0
      %1474 = vrot.lane.b32.xlu0 %v700, 64
      %v1475 = vpop.permute.xlu0 %1474
      %v1477 = vsel %vm1285, %v1276, 0
      %v1480 = vsel %vm1289, %v1475, 0
      %1482 = vmatpush.bf16.msra.mxu0 0
      %1483 = vmatpush.bf16.msra.mxu0 0
      %1484 = vmatpush.bf16.msra.mxu0 0
      %1485 = vmatpush.bf16.msra.mxu0 0
      %1486 = vmatpush.bf16.msra.mxu0 0
      %1487 = vmatpush.bf16.msra.mxu0 0
      %1488 = vmatpush.bf16.msra.mxu0 0
      %1489 = vmatpush.bf16.msra.mxu0 %v1480
      %1490 = vmatmul.bf16.gmra.mxu0 %v1477
      %v1491 = vpop.f32.mrf.mxu0
      %v1492 = vadd.f32 0.0, %v1491
      %v1493 = vpop.f32.mrf.mxu0
      %1494 = vdwg.mxu0
      %1495 = vrot.lane.b32.xlu0 %v724, 64
      %v1496 = vpop.permute.xlu0 %1495
      %v1498 = vsel %vm1285, %v1277, 0
      %v1501 = vsel %vm1289, %v1496, 0
      %1503 = vmatpush.bf16.msra.mxu0 0
      %1504 = vmatpush.bf16.msra.mxu0 0
      %1505 = vmatpush.bf16.msra.mxu0 0
      %1506 = vmatpush.bf16.msra.mxu0 0
      %1507 = vmatpush.bf16.msra.mxu0 0
      %1508 = vmatpush.bf16.msra.mxu0 0
      %1509 = vmatpush.bf16.msra.mxu0 0
      %1510 = vmatpush.bf16.msra.mxu0 %v1501
      %1511 = vmatmul.bf16.gmra.mxu0 %v1498
      %v1512 = vpop.f32.mrf.mxu0
      %v1513 = vadd.f32 0.0, %v1512
      %v1514 = vpop.f32.mrf.mxu0
      %1515 = vdwg.mxu0
      %1516 = vrot.lane.b32.xlu0 %v748, 64
      %v1517 = vpop.permute.xlu0 %1516
      %v1519 = vsel %vm1285, %v1278, 0
      %v1522 = vsel %vm1289, %v1517, 0
      %1524 = vmatpush.bf16.msra.mxu0 0
      %1525 = vmatpush.bf16.msra.mxu0 0
      %1526 = vmatpush.bf16.msra.mxu0 0
      %1527 = vmatpush.bf16.msra.mxu0 0
      %1528 = vmatpush.bf16.msra.mxu0 0
      %1529 = vmatpush.bf16.msra.mxu0 0
      %1530 = vmatpush.bf16.msra.mxu0 0
      %1531 = vmatpush.bf16.msra.mxu0 %v1522
      %1532 = vmatmul.bf16.gmra.mxu0 %v1519
      %v1533 = vpop.f32.mrf.mxu0
      %v1534 = vadd.f32 0.0, %v1533
      %v1535 = vpop.f32.mrf.mxu0
      %1536 = vdwg.mxu0
      %1537 = vrot.lane.b32.xlu0 %v772, 64
      %v1538 = vpop.permute.xlu0 %1537
      %v1540 = vsel %vm1285, %v1279, 0
      %v1543 = vsel %vm1289, %v1538, 0
      %1545 = vmatpush.bf16.msra.mxu0 0
      %1546 = vmatpush.bf16.msra.mxu0 0
      %1547 = vmatpush.bf16.msra.mxu0 0
      %1548 = vmatpush.bf16.msra.mxu0 0
      %1549 = vmatpush.bf16.msra.mxu0 0
      %1550 = vmatpush.bf16.msra.mxu0 0
      %1551 = vmatpush.bf16.msra.mxu0 0
      %1552 = vmatpush.bf16.msra.mxu0 %v1543
      %1553 = vmatmul.bf16.gmra.mxu0 %v1540
      %v1554 = vpop.f32.mrf.mxu0
      %v1555 = vadd.f32 0.0, %v1554
      %v1556 = vpop.f32.mrf.mxu0
      %1557 = vdwg.mxu0
      %1558 = vrot.lane.b32.xlu0 %v796, 64
      %v1559 = vpop.permute.xlu0 %1558
      %v1561 = vsel %vm1285, %v1280, 0
      %v1564 = vsel %vm1289, %v1559, 0
      %1566 = vmatpush.bf16.msra.mxu0 0
      %1567 = vmatpush.bf16.msra.mxu0 0
      %1568 = vmatpush.bf16.msra.mxu0 0
      %1569 = vmatpush.bf16.msra.mxu0 0
      %1570 = vmatpush.bf16.msra.mxu0 0
      %1571 = vmatpush.bf16.msra.mxu0 0
      %1572 = vmatpush.bf16.msra.mxu0 0
      %1573 = vmatpush.bf16.msra.mxu0 %v1564
      %1574 = vmatmul.bf16.gmra.mxu0 %v1561
      %v1575 = vpop.f32.mrf.mxu0
      %v1576 = vadd.f32 0.0, %v1575
      %v1577 = vpop.f32.mrf.mxu0
      %1578 = vdwg.mxu0
      %1579 = vrot.lane.b32.xlu0 %v820, 64
      %v1580 = vpop.permute.xlu0 %1579
      %v1582 = vsel %vm1285, %v1281, 0
      %v1585 = vsel %vm1289, %v1580, 0
      %1587 = vmatpush.bf16.msra.mxu0 0
      %1588 = vmatpush.bf16.msra.mxu0 0
      %1589 = vmatpush.bf16.msra.mxu0 0
      %1590 = vmatpush.bf16.msra.mxu0 0
      %1591 = vmatpush.bf16.msra.mxu0 0
      %1592 = vmatpush.bf16.msra.mxu0 0
      %1593 = vmatpush.bf16.msra.mxu0 0
      %1594 = vmatpush.bf16.msra.mxu0 %v1585
      %1595 = vmatmul.bf16.gmra.mxu0 %v1582
      %v1596 = vpop.f32.mrf.mxu0
      %v1597 = vadd.f32 0.0, %v1596
      %v1598 = vpop.f32.mrf.mxu0
      %1599 = vdwg.mxu0
      %1600 = vrot.lane.b32.xlu0 %v844, 64
      %v1601 = vpop.permute.xlu0 %1600
      %v1603 = vsel %vm1285, %v1282, 0
      %v1606 = vsel %vm1289, %v1601, 0
      %1608 = vmatpush.bf16.msra.mxu0 0
      %1609 = vmatpush.bf16.msra.mxu0 0
      %1610 = vmatpush.bf16.msra.mxu0 0
      %1611 = vmatpush.bf16.msra.mxu0 0
      %1612 = vmatpush.bf16.msra.mxu0 0
      %1613 = vmatpush.bf16.msra.mxu0 0
      %1614 = vmatpush.bf16.msra.mxu0 0
      %1615 = vmatpush.bf16.msra.mxu0 %v1606
      %1616 = vmatmul.bf16.gmra.mxu0 %v1603
      %v1617 = vpop.f32.mrf.mxu0
      %v1618 = vadd.f32 0.0, %v1617
      %v1619 = vpop.f32.mrf.mxu0
      %1620 = vdwg.mxu0
      %1629 = vrot.lane.b32.xlu0 %v1471, 16
      %v1630 = vpop.permute.xlu0 %1629
      %1631 = vrot.lane.b32.xlu0 %v1492, 16
      %v1632 = vpop.permute.xlu0 %1631
      %1633 = vrot.lane.b32.xlu0 %v1513, 16
      %v1634 = vpop.permute.xlu0 %1633
      %1635 = vrot.lane.b32.xlu0 %v1534, 16
      %v1636 = vpop.permute.xlu0 %1635
      %1637 = vrot.lane.b32.xlu0 %v1555, 16
      %v1638 = vpop.permute.xlu0 %1637
      %1639 = vrot.lane.b32.xlu0 %v1576, 16
      %v1640 = vpop.permute.xlu0 %1639
      %1641 = vrot.lane.b32.xlu0 %v1597, 16
      %v1642 = vpop.permute.xlu0 %1641
      %1643 = vrot.lane.b32.xlu0 %v1618, 16
      %v1644 = vpop.permute.xlu0 %1643
      %v1653 = vsel %vm486, %v1303, %v1630
      %v1654 = vsel %vm486, %v1324, %v1632
      %v1655 = vsel %vm486, %v1345, %v1634
      %v1656 = vsel %vm486, %v1366, %v1636
      %v1657 = vsel %vm486, %v1387, %v1638
      %v1658 = vsel %vm486, %v1408, %v1640
      %v1659 = vsel %vm486, %v1429, %v1642
      %v1660 = vsel %vm486, %v1450, %v1644
      %1669 = vst [vmem:[#allocation1] ss:$2 sm:$0xff] %v1653
      %s1670 = scalar_lea.vmem [#allocation1], 1
      %1671 = vst [vmem:[%s1670] ss:$2 sm:$0xff] %v1654
      %s1672 = scalar_lea.vmem [#allocation1], 16
      %1673 = vst [vmem:[%s1672] ss:$2 sm:$0xff] %v1655
      %s1674 = scalar_lea.vmem [#allocation1], 17
      %1675 = vst [vmem:[%s1674] ss:$2 sm:$0xff] %v1656
      %s1676 = scalar_lea.vmem [#allocation1], 32
      %1677 = vst [vmem:[%s1676] ss:$2 sm:$0xff] %v1657
      %s1678 = scalar_lea.vmem [#allocation1], 33
      %1679 = vst [vmem:[%s1678] ss:$2 sm:$0xff] %v1658
      %s1680 = scalar_lea.vmem [#allocation1], 48
      %1681 = vst [vmem:[%s1680] ss:$2 sm:$0xff] %v1659
      %s1682 = scalar_lea.vmem [#allocation1], 49
      %1683 = vst [vmem:[%s1682] ss:$2 sm:$0xff] %v1660
      %v1684 = vld.sshfl [vmem:[#allocation1] sm:$0xff pattern:$0x75316420]
      %v1685 = vld.sshfl [vmem:[#allocation1 + $0x10] sm:$0xff pattern:$0x75316420]
      %v1686 = vld.sshfl [vmem:[#allocation1 + $0x20] sm:$0xff pattern:$0x75316420]
      %v1687 = vld.sshfl [vmem:[#allocation1 + $0x30] sm:$0xff pattern:$0x75316420]
      %v1692 = vpack.c.bf16 %v1685, %v1684
      %v1693 = vpack.c.bf16 %v1687, %v1686
      %v1694 = vperm.slane %v325, 2
      %1695 = vrot.lane.b32.xlu0 %v400, 32
      %v1696 = vpop.permute.xlu0 %1695
      %1697 = vrot.lane.b32.xlu0 %v401, 32
      %v1698 = vpop.permute.xlu0 %1697
      %v1702 = vsel %vm363, %v1692, 0
      %v1705 = vsel %vm363, %v1693, 0
      %1707 = vmatpush.bf16.msra.mxu0 0
      %1708 = vmatpush.bf16.msra.mxu0 0
      %1709 = vmatpush.bf16.msra.mxu0 0
      %1710 = vmatpush.bf16.msra.mxu0 0
      %1711 = vmatpush.bf16.msra.mxu0 0
      %1712 = vmatpush.bf16.msra.mxu0 0
      %1713 = vmatpush.bf16.msra.mxu0 %v1698
      %1714 = vmatpush.bf16.msra.mxu0 %v1696
      %1715 = vmatmul.bf16.gmra.mxu0 %v1702
      %v1716 = vpop.f32.mrf.mxu0
      %v1717 = vadd.f32 %v1694, %v1716
      %v1718 = vpop.f32.mrf.mxu0
      %v1719 = vadd.f32 %v1694, %v1718
      %1720 = vmatmul.bf16.gmra.mxu0 %v1705
      %v1721 = vpop.f32.mrf.mxu0
      %v1722 = vadd.f32 %v1694, %v1721
      %v1723 = vpop.f32.mrf.mxu0
      %v1724 = vadd.f32 %v1694, %v1723
      %1725 = vdwg.mxu0
      %v1730 = vrot.slane %v1717, 4
      %v1731 = vrot.slane %v1719, 4
      %v1732 = vrot.slane %v1722, 4
      %v1733 = vrot.slane %v1724, 4
      %v1742 = vrot.slane %v380, 4
      %v1743 = vrot.slane %v382, 4
      %v1744 = vrot.slane %v385, 4
      %v1745 = vrot.slane %v387, 4
      %v1750 = vmul.f32 %v1717, %v1717
      %v1751 = vmul.f32 %v1730, %v1730
      %v1752 = vmul.f32 %v1719, %v1719
      %v1753 = vmul.f32 %v1731, %v1731
      %v1754 = vmul.f32 %v1722, %v1722
      %v1755 = vmul.f32 %v1732, %v1732
      %v1756 = vmul.f32 %v1724, %v1724
      %v1757 = vmul.f32 %v1733, %v1733
      %vm1758 = vcmask 257024
      %v1759 = vsel %vm1758, %v1750, 0.0
      %1760 = vadd.xlane.f32.xlu0 %v1759
      %v1761 = vpop.xlane.xlu0 %1760
      %v1762 = vsel %vm1758, %v1751, 0.0
      %1763 = vadd.xlane.f32.xlu0 %v1762
      %v1764 = vpop.xlane.xlu0 %1763
      %v1765 = vsel %vm1758, %v1752, 0.0
      %1766 = vadd.xlane.f32.xlu0 %v1765
      %v1767 = vpop.xlane.xlu0 %1766
      %v1768 = vsel %vm1758, %v1753, 0.0
      %1769 = vadd.xlane.f32.xlu0 %v1768
      %v1770 = vpop.xlane.xlu0 %1769
      %v1771 = vsel %vm1758, %v1754, 0.0
      %1772 = vadd.xlane.f32.xlu0 %v1771
      %v1773 = vpop.xlane.xlu0 %1772
      %v1774 = vsel %vm1758, %v1755, 0.0
      %1775 = vadd.xlane.f32.xlu0 %v1774
      %v1776 = vpop.xlane.xlu0 %1775
      %v1777 = vsel %vm1758, %v1756, 0.0
      %1778 = vadd.xlane.f32.xlu0 %v1777
      %v1779 = vpop.xlane.xlu0 %1778
      %v1780 = vsel %vm1758, %v1757, 0.0
      %1781 = vadd.xlane.f32.xlu0 %v1780
      %v1782 = vpop.xlane.xlu0 %1781
      %v1783 = vrsqrt.pop %v1761
      %v1784 = vmul.f32 %v1783, %v1761
      %v1785 = vmul.f32 %v1784, %v1783
      %v1786 = vmul.f32 0.5, %v1785
      %v1787 = vsub.f32 1.5, %v1786
      %v1788 = vmul.f32 %v1783, %v1787
      %v1789 = vmul.f32 %v1761, %v1788
      %vm1790 = vcmp.eq.f32.partialorder %v1761, inf
      %v1791 = vsel %vm1790, %v1761, %v1789
      %vm1792 = vcmp.eq.f32.partialorder %v1761, 0.0
      %v1793 = vand.u32 %v1761, 2147483648
      %v1794 = vsel %vm1792, %v1793, %v1791
      %v1795 = vrsqrt.pop %v1764
      %v1796 = vmul.f32 %v1795, %v1764
      %v1797 = vmul.f32 %v1796, %v1795
      %v1798 = vmul.f32 0.5, %v1797
      %v1799 = vsub.f32 1.5, %v1798
      %v1800 = vmul.f32 %v1795, %v1799
      %v1801 = vmul.f32 %v1764, %v1800
      %vm1802 = vcmp.eq.f32.partialorder %v1764, inf
      %v1803 = vsel %vm1802, %v1764, %v1801
      %vm1804 = vcmp.eq.f32.partialorder %v1764, 0.0
      %v1805 = vand.u32 %v1764, 2147483648
      %v1806 = vsel %vm1804, %v1805, %v1803
      %v1807 = vrsqrt.pop %v1767
      %v1808 = vmul.f32 %v1807, %v1767
      %v1809 = vmul.f32 %v1808, %v1807
      %v1810 = vmul.f32 0.5, %v1809
      %v1811 = vsub.f32 1.5, %v1810
      %v1812 = vmul.f32 %v1807, %v1811
      %v1813 = vmul.f32 %v1767, %v1812
      %vm1814 = vcmp.eq.f32.partialorder %v1767, inf
      %v1815 = vsel %vm1814, %v1767, %v1813
      %vm1816 = vcmp.eq.f32.partialorder %v1767, 0.0
      %v1817 = vand.u32 %v1767, 2147483648
      %v1818 = vsel %vm1816, %v1817, %v1815
      %v1819 = vrsqrt.pop %v1770
      %v1820 = vmul.f32 %v1819, %v1770
      %v1821 = vmul.f32 %v1820, %v1819
      %v1822 = vmul.f32 0.5, %v1821
      %v1823 = vsub.f32 1.5, %v1822
      %v1824 = vmul.f32 %v1819, %v1823
      %v1825 = vmul.f32 %v1770, %v1824
      %vm1826 = vcmp.eq.f32.partialorder %v1770, inf
      %v1827 = vsel %vm1826, %v1770, %v1825
      %vm1828 = vcmp.eq.f32.partialorder %v1770, 0.0
      %v1829 = vand.u32 %v1770, 2147483648
      %v1830 = vsel %vm1828, %v1829, %v1827
      %v1831 = vrsqrt.pop %v1773
      %v1832 = vmul.f32 %v1831, %v1773
      %v1833 = vmul.f32 %v1832, %v1831
      %v1834 = vmul.f32 0.5, %v1833
      %v1835 = vsub.f32 1.5, %v1834
      %v1836 = vmul.f32 %v1831, %v1835
      %v1837 = vmul.f32 %v1773, %v1836
      %vm1838 = vcmp.eq.f32.partialorder %v1773, inf
      %v1839 = vsel %vm1838, %v1773, %v1837
      %vm1840 = vcmp.eq.f32.partialorder %v1773, 0.0
      %v1841 = vand.u32 %v1773, 2147483648
      %v1842 = vsel %vm1840, %v1841, %v1839
      %v1843 = vrsqrt.pop %v1776
      %v1844 = vmul.f32 %v1843, %v1776
      %v1845 = vmul.f32 %v1844, %v1843
      %v1846 = vmul.f32 0.5, %v1845
      %v1847 = vsub.f32 1.5, %v1846
      %v1848 = vmul.f32 %v1843, %v1847
      %v1849 = vmul.f32 %v1776, %v1848
      %vm1850 = vcmp.eq.f32.partialorder %v1776, inf
      %v1851 = vsel %vm1850, %v1776, %v1849
      %vm1852 = vcmp.eq.f32.partialorder %v1776, 0.0
      %v1853 = vand.u32 %v1776, 2147483648
      %v1854 = vsel %vm1852, %v1853, %v1851
      %v1855 = vrsqrt.pop %v1779
      %v1856 = vmul.f32 %v1855, %v1779
      %v1857 = vmul.f32 %v1856, %v1855
      %v1858 = vmul.f32 0.5, %v1857
      %v1859 = vsub.f32 1.5, %v1858
      %v1860 = vmul.f32 %v1855, %v1859
      %v1861 = vmul.f32 %v1779, %v1860
      %vm1862 = vcmp.eq.f32.partialorder %v1779, inf
      %v1863 = vsel %vm1862, %v1779, %v1861
      %vm1864 = vcmp.eq.f32.partialorder %v1779, 0.0
      %v1865 = vand.u32 %v1779, 2147483648
      %v1866 = vsel %vm1864, %v1865, %v1863
      %v1867 = vrsqrt.pop %v1782
      %v1868 = vmul.f32 %v1867, %v1782
      %v1869 = vmul.f32 %v1868, %v1867
      %v1870 = vmul.f32 0.5, %v1869
      %v1871 = vsub.f32 1.5, %v1870
      %v1872 = vmul.f32 %v1867, %v1871
      %v1873 = vmul.f32 %v1782, %v1872
      %vm1874 = vcmp.eq.f32.partialorder %v1782, inf
      %v1875 = vsel %vm1874, %v1782, %v1873
      %vm1876 = vcmp.eq.f32.partialorder %v1782, 0.0
      %v1877 = vand.u32 %v1782, 2147483648
      %v1878 = vsel %vm1876, %v1877, %v1875
      %v1879 = vrcp.pop 32.0
      %v1880 = vmul.f32 32.0, %v1879
      %v1881 = vsub.f32 1.0, %v1880
      %v1882 = vmul.f32 %v1879, %v1881
      %v1883 = vadd.f32 %v1879, %v1882
      %vm1884 = vweird.f32 %v1879
      %v1885 = vsel %vm1884, %v1879, %v1883
      %v1886 = vmul.f32 %v1794, %v1885
      %v1887 = vmul.f32 %v1806, %v1885
      %v1888 = vmul.f32 %v1818, %v1885
      %v1889 = vmul.f32 %v1830, %v1885
      %v1890 = vmul.f32 %v1842, %v1885
      %v1891 = vmul.f32 %v1854, %v1885
      %v1892 = vmul.f32 %v1866, %v1885
      %v1893 = vmul.f32 %v1878, %v1885
      %v1894 = vmul.f32 %v1886, %v327
      %v1895 = vmul.f32 %v1887, %v327
      %v1896 = vmul.f32 %v1888, %v327
      %v1897 = vmul.f32 %v1889, %v327
      %v1898 = vmul.f32 %v1890, %v327
      %v1899 = vmul.f32 %v1891, %v327
      %v1900 = vmul.f32 %v1892, %v327
      %v1901 = vmul.f32 %v1893, %v327
      %v1902 = vsel %vm882, %v1894, 0.0
      %v1903 = vrot.slane %v1902, 4
      %v1904 = vadd.f32 %v1902, %v1903
      %v1905 = vrot.slane %v1904, 2
      %v1906 = vadd.f32 %v1904, %v1905
      %v1907 = vrot.slane %v1906, 1
      %v1908 = vadd.f32 %v1906, %v1907
      %v1909 = vsel %vm882, %v1895, 0.0
      %v1910 = vrot.slane %v1909, 4
      %v1911 = vadd.f32 %v1909, %v1910
      %v1912 = vrot.slane %v1911, 2
      %v1913 = vadd.f32 %v1911, %v1912
      %v1914 = vrot.slane %v1913, 1
      %v1915 = vadd.f32 %v1913, %v1914
      %v1916 = vsel %vm882, %v1896, 0.0
      %v1917 = vrot.slane %v1916, 4
      %v1918 = vadd.f32 %v1916, %v1917
      %v1919 = vrot.slane %v1918, 2
      %v1920 = vadd.f32 %v1918, %v1919
      %v1921 = vrot.slane %v1920, 1
      %v1922 = vadd.f32 %v1920, %v1921
      %v1923 = vsel %vm882, %v1897, 0.0
      %v1924 = vrot.slane %v1923, 4
      %v1925 = vadd.f32 %v1923, %v1924
      %v1926 = vrot.slane %v1925, 2
      %v1927 = vadd.f32 %v1925, %v1926
      %v1928 = vrot.slane %v1927, 1
      %v1929 = vadd.f32 %v1927, %v1928
      %v1930 = vsel %vm882, %v1898, 0.0
      %v1931 = vrot.slane %v1930, 4
      %v1932 = vadd.f32 %v1930, %v1931
      %v1933 = vrot.slane %v1932, 2
      %v1934 = vadd.f32 %v1932, %v1933
      %v1935 = vrot.slane %v1934, 1
      %v1936 = vadd.f32 %v1934, %v1935
      %v1937 = vsel %vm882, %v1899, 0.0
      %v1938 = vrot.slane %v1937, 4
      %v1939 = vadd.f32 %v1937, %v1938
      %v1940 = vrot.slane %v1939, 2
      %v1941 = vadd.f32 %v1939, %v1940
      %v1942 = vrot.slane %v1941, 1
      %v1943 = vadd.f32 %v1941, %v1942
      %v1944 = vsel %vm882, %v1900, 0.0
      %v1945 = vrot.slane %v1944, 4
      %v1946 = vadd.f32 %v1944, %v1945
      %v1947 = vrot.slane %v1946, 2
      %v1948 = vadd.f32 %v1946, %v1947
      %v1949 = vrot.slane %v1948, 1
      %v1950 = vadd.f32 %v1948, %v1949
      %v1951 = vsel %vm882, %v1901, 0.0
      %v1952 = vrot.slane %v1951, 4
      %v1953 = vadd.f32 %v1951, %v1952
      %v1954 = vrot.slane %v1953, 2
      %v1955 = vadd.f32 %v1953, %v1954
      %v1956 = vrot.slane %v1955, 1
      %v1957 = vadd.f32 %v1955, %v1956
      %v1958 = vtanh.pop %v1908
      %v1959 = vtanh.pop %v1915
      %v1960 = vtanh.pop %v1922
      %v1961 = vtanh.pop %v1929
      %v1962 = vtanh.pop %v1936
      %v1963 = vtanh.pop %v1943
      %v1964 = vtanh.pop %v1950
      %v1965 = vtanh.pop %v1957
      %v1966 = vlaneseq
      %v1967 = vshrl.u32 %v1966, 7
      %1969 = vset.pattern.permute.xlu0 %v1967
      %1970 = vperm.xlu0 %1969, %v1958
      %v1971 = vpop.permute.xlu0 %1970
      %v1972 = vlaneseq
      %v1973 = vshrl.u32 %v1972, 7
      %1975 = vset.pattern.permute.xlu0 %v1973
      %1976 = vperm.xlu0 %1975, %v1959
      %v1977 = vpop.permute.xlu0 %1976
      %v1978 = vlaneseq
      %v1979 = vshrl.u32 %v1978, 7
      %1981 = vset.pattern.permute.xlu0 %v1979
      %1982 = vperm.xlu0 %1981, %v1960
      %v1983 = vpop.permute.xlu0 %1982
      %v1984 = vlaneseq
      %v1985 = vshrl.u32 %v1984, 7
      %1987 = vset.pattern.permute.xlu0 %v1985
      %1988 = vperm.xlu0 %1987, %v1961
      %v1989 = vpop.permute.xlu0 %1988
      %v1990 = vlaneseq
      %v1991 = vshrl.u32 %v1990, 7
      %1993 = vset.pattern.permute.xlu0 %v1991
      %1994 = vperm.xlu0 %1993, %v1962
      %v1995 = vpop.permute.xlu0 %1994
      %v1996 = vlaneseq
      %v1997 = vshrl.u32 %v1996, 7
      %1999 = vset.pattern.permute.xlu0 %v1997
      %2000 = vperm.xlu0 %1999, %v1963
      %v2001 = vpop.permute.xlu0 %2000
      %v2002 = vlaneseq
      %v2003 = vshrl.u32 %v2002, 7
      %2005 = vset.pattern.permute.xlu0 %v2003
      %2006 = vperm.xlu0 %2005, %v1964
      %v2007 = vpop.permute.xlu0 %2006
      %v2008 = vlaneseq
      %v2009 = vshrl.u32 %v2008, 7
      %2011 = vset.pattern.permute.xlu0 %v2009
      %2012 = vperm.xlu0 %2011, %v1965
      %v2013 = vpop.permute.xlu0 %2012
      %v2014 = vmul.f32 %v1971, %v1717
      %v2015 = vmul.f32 %v1977, %v1730
      %v2016 = vmul.f32 %v1983, %v1719
      %v2017 = vmul.f32 %v1989, %v1731
      %v2018 = vmul.f32 %v1995, %v1722
      %v2019 = vmul.f32 %v2001, %v1732
      %v2020 = vmul.f32 %v2007, %v1724
      %v2021 = vmul.f32 %v2013, %v1733
      %v2022 = vsel %vm1758, %v2014, 0.0
      %v2023 = vrot.slane %v2022, 4
      %v2024 = vadd.f32 %v2022, %v2023
      %v2025 = vrot.slane %v2024, 2
      %v2026 = vadd.f32 %v2024, %v2025
      %v2027 = vrot.slane %v2026, 1
      %v2028 = vadd.f32 %v2026, %v2027
      %v2029 = vsel %vm1758, %v2015, 0.0
      %v2030 = vrot.slane %v2029, 4
      %v2031 = vadd.f32 %v2029, %v2030
      %v2032 = vrot.slane %v2031, 2
      %v2033 = vadd.f32 %v2031, %v2032
      %v2034 = vrot.slane %v2033, 1
      %v2035 = vadd.f32 %v2033, %v2034
      %v2036 = vsel %vm1758, %v2016, 0.0
      %v2037 = vrot.slane %v2036, 4
      %v2038 = vadd.f32 %v2036, %v2037
      %v2039 = vrot.slane %v2038, 2
      %v2040 = vadd.f32 %v2038, %v2039
      %v2041 = vrot.slane %v2040, 1
      %v2042 = vadd.f32 %v2040, %v2041
      %v2043 = vsel %vm1758, %v2017, 0.0
      %v2044 = vrot.slane %v2043, 4
      %v2045 = vadd.f32 %v2043, %v2044
      %v2046 = vrot.slane %v2045, 2
      %v2047 = vadd.f32 %v2045, %v2046
      %v2048 = vrot.slane %v2047, 1
      %v2049 = vadd.f32 %v2047, %v2048
      %v2050 = vsel %vm1758, %v2018, 0.0
      %v2051 = vrot.slane %v2050, 4
      %v2052 = vadd.f32 %v2050, %v2051
      %v2053 = vrot.slane %v2052, 2
      %v2054 = vadd.f32 %v2052, %v2053
      %v2055 = vrot.slane %v2054, 1
      %v2056 = vadd.f32 %v2054, %v2055
      %v2057 = vsel %vm1758, %v2019, 0.0
      %v2058 = vrot.slane %v2057, 4
      %v2059 = vadd.f32 %v2057, %v2058
      %v2060 = vrot.slane %v2059, 2
      %v2061 = vadd.f32 %v2059, %v2060
      %v2062 = vrot.slane %v2061, 1
      %v2063 = vadd.f32 %v2061, %v2062
      %v2064 = vsel %vm1758, %v2020, 0.0
      %v2065 = vrot.slane %v2064, 4
      %v2066 = vadd.f32 %v2064, %v2065
      %v2067 = vrot.slane %v2066, 2
      %v2068 = vadd.f32 %v2066, %v2067
      %v2069 = vrot.slane %v2068, 1
      %v2070 = vadd.f32 %v2068, %v2069
      %v2071 = vsel %vm1758, %v2021, 0.0
      %v2072 = vrot.slane %v2071, 4
      %v2073 = vadd.f32 %v2071, %v2072
      %v2074 = vrot.slane %v2073, 2
      %v2075 = vadd.f32 %v2073, %v2074
      %v2076 = vrot.slane %v2075, 1
      %v2077 = vadd.f32 %v2075, %v2076
      %v2078 = vmul.f32 %v380, %v380
      %v2079 = vmul.f32 %v1742, %v1742
      %v2080 = vmul.f32 %v382, %v382
      %v2081 = vmul.f32 %v1743, %v1743
      %v2082 = vmul.f32 %v385, %v385
      %v2083 = vmul.f32 %v1744, %v1744
      %v2084 = vmul.f32 %v387, %v387
      %v2085 = vmul.f32 %v1745, %v1745
      %v2086 = vsel %vm1758, %v2078, 0.0
      %2087 = vadd.xlane.f32.xlu0 %v2086
      %v2088 = vpop.xlane.xlu0 %2087
      %v2089 = vsel %vm1758, %v2079, 0.0
      %2090 = vadd.xlane.f32.xlu0 %v2089
      %v2091 = vpop.xlane.xlu0 %2090
      %v2092 = vsel %vm1758, %v2080, 0.0
      %2093 = vadd.xlane.f32.xlu0 %v2092
      %v2094 = vpop.xlane.xlu0 %2093
      %v2095 = vsel %vm1758, %v2081, 0.0
      %2096 = vadd.xlane.f32.xlu0 %v2095
      %v2097 = vpop.xlane.xlu0 %2096
      %v2098 = vsel %vm1758, %v2082, 0.0
      %2099 = vadd.xlane.f32.xlu0 %v2098
      %v2100 = vpop.xlane.xlu0 %2099
      %v2101 = vsel %vm1758, %v2083, 0.0
      %2102 = vadd.xlane.f32.xlu0 %v2101
      %v2103 = vpop.xlane.xlu0 %2102
      %v2104 = vsel %vm1758, %v2084, 0.0
      %2105 = vadd.xlane.f32.xlu0 %v2104
      %v2106 = vpop.xlane.xlu0 %2105
      %v2107 = vsel %vm1758, %v2085, 0.0
      %2108 = vadd.xlane.f32.xlu0 %v2107
      %v2109 = vpop.xlane.xlu0 %2108
      %v2110 = vrsqrt.pop %v2088
      %v2111 = vmul.f32 %v2110, %v2088
      %v2112 = vmul.f32 %v2111, %v2110
      %v2113 = vmul.f32 0.5, %v2112
      %v2114 = vsub.f32 1.5, %v2113
      %v2115 = vmul.f32 %v2110, %v2114
      %v2116 = vmul.f32 %v2088, %v2115
      %vm2117 = vcmp.eq.f32.partialorder %v2088, inf
      %v2118 = vsel %vm2117, %v2088, %v2116
      %vm2119 = vcmp.eq.f32.partialorder %v2088, 0.0
      %v2120 = vand.u32 %v2088, 2147483648
      %v2121 = vsel %vm2119, %v2120, %v2118
      %v2122 = vrsqrt.pop %v2091
      %v2123 = vmul.f32 %v2122, %v2091
      %v2124 = vmul.f32 %v2123, %v2122
      %v2125 = vmul.f32 0.5, %v2124
      %v2126 = vsub.f32 1.5, %v2125
      %v2127 = vmul.f32 %v2122, %v2126
      %v2128 = vmul.f32 %v2091, %v2127
      %vm2129 = vcmp.eq.f32.partialorder %v2091, inf
      %v2130 = vsel %vm2129, %v2091, %v2128
      %vm2131 = vcmp.eq.f32.partialorder %v2091, 0.0
      %v2132 = vand.u32 %v2091, 2147483648
      %v2133 = vsel %vm2131, %v2132, %v2130
      %v2134 = vrsqrt.pop %v2094
      %v2135 = vmul.f32 %v2134, %v2094
      %v2136 = vmul.f32 %v2135, %v2134
      %v2137 = vmul.f32 0.5, %v2136
      %v2138 = vsub.f32 1.5, %v2137
      %v2139 = vmul.f32 %v2134, %v2138
      %v2140 = vmul.f32 %v2094, %v2139
      %vm2141 = vcmp.eq.f32.partialorder %v2094, inf
      %v2142 = vsel %vm2141, %v2094, %v2140
      %vm2143 = vcmp.eq.f32.partialorder %v2094, 0.0
      %v2144 = vand.u32 %v2094, 2147483648
      %v2145 = vsel %vm2143, %v2144, %v2142
      %v2146 = vrsqrt.pop %v2097
      %v2147 = vmul.f32 %v2146, %v2097
      %v2148 = vmul.f32 %v2147, %v2146
      %v2149 = vmul.f32 0.5, %v2148
      %v2150 = vsub.f32 1.5, %v2149
      %v2151 = vmul.f32 %v2146, %v2150
      %v2152 = vmul.f32 %v2097, %v2151
      %vm2153 = vcmp.eq.f32.partialorder %v2097, inf
      %v2154 = vsel %vm2153, %v2097, %v2152
      %vm2155 = vcmp.eq.f32.partialorder %v2097, 0.0
      %v2156 = vand.u32 %v2097, 2147483648
      %v2157 = vsel %vm2155, %v2156, %v2154
      %v2158 = vrsqrt.pop %v2100
      %v2159 = vmul.f32 %v2158, %v2100
      %v2160 = vmul.f32 %v2159, %v2158
      %v2161 = vmul.f32 0.5, %v2160
      %v2162 = vsub.f32 1.5, %v2161
      %v2163 = vmul.f32 %v2158, %v2162
      %v2164 = vmul.f32 %v2100, %v2163
      %vm2165 = vcmp.eq.f32.partialorder %v2100, inf
      %v2166 = vsel %vm2165, %v2100, %v2164
      %vm2167 = vcmp.eq.f32.partialorder %v2100, 0.0
      %v2168 = vand.u32 %v2100, 2147483648
      %v2169 = vsel %vm2167, %v2168, %v2166
      %v2170 = vrsqrt.pop %v2103
      %v2171 = vmul.f32 %v2170, %v2103
      %v2172 = vmul.f32 %v2171, %v2170
      %v2173 = vmul.f32 0.5, %v2172
      %v2174 = vsub.f32 1.5, %v2173
      %v2175 = vmul.f32 %v2170, %v2174
      %v2176 = vmul.f32 %v2103, %v2175
      %vm2177 = vcmp.eq.f32.partialorder %v2103, inf
      %v2178 = vsel %vm2177, %v2103, %v2176
      %vm2179 = vcmp.eq.f32.partialorder %v2103, 0.0
      %v2180 = vand.u32 %v2103, 2147483648
      %v2181 = vsel %vm2179, %v2180, %v2178
      %v2182 = vrsqrt.pop %v2106
      %v2183 = vmul.f32 %v2182, %v2106
      %v2184 = vmul.f32 %v2183, %v2182
      %v2185 = vmul.f32 0.5, %v2184
      %v2186 = vsub.f32 1.5, %v2185
      %v2187 = vmul.f32 %v2182, %v2186
      %v2188 = vmul.f32 %v2106, %v2187
      %vm2189 = vcmp.eq.f32.partialorder %v2106, inf
      %v2190 = vsel %vm2189, %v2106, %v2188
      %vm2191 = vcmp.eq.f32.partialorder %v2106, 0.0
      %v2192 = vand.u32 %v2106, 2147483648
      %v2193 = vsel %vm2191, %v2192, %v2190
      %v2194 = vrsqrt.pop %v2109
      %v2195 = vmul.f32 %v2194, %v2109
      %v2196 = vmul.f32 %v2195, %v2194
      %v2197 = vmul.f32 0.5, %v2196
      %v2198 = vsub.f32 1.5, %v2197
      %v2199 = vmul.f32 %v2194, %v2198
      %v2200 = vmul.f32 %v2109, %v2199
      %vm2201 = vcmp.eq.f32.partialorder %v2109, inf
      %v2202 = vsel %vm2201, %v2109, %v2200
      %vm2203 = vcmp.eq.f32.partialorder %v2109, 0.0
      %v2204 = vand.u32 %v2109, 2147483648
      %v2205 = vsel %vm2203, %v2204, %v2202
      %v2206 = vmul.f32 %v2121, %v1885
      %v2207 = vmul.f32 %v2133, %v1885
      %v2208 = vmul.f32 %v2145, %v1885
      %v2209 = vmul.f32 %v2157, %v1885
      %v2210 = vmul.f32 %v2169, %v1885
      %v2211 = vmul.f32 %v2181, %v1885
      %v2212 = vmul.f32 %v2193, %v1885
      %v2213 = vmul.f32 %v2205, %v1885
      %v2214 = vmul.f32 %v2206, %v327
      %v2215 = vmul.f32 %v2207, %v327
      %v2216 = vmul.f32 %v2208, %v327
      %v2217 = vmul.f32 %v2209, %v327
      %v2218 = vmul.f32 %v2210, %v327
      %v2219 = vmul.f32 %v2211, %v327
      %v2220 = vmul.f32 %v2212, %v327
      %v2221 = vmul.f32 %v2213, %v327
      %v2222 = vsel %vm882, %v2214, 0.0
      %v2223 = vrot.slane %v2222, 4
      %v2224 = vadd.f32 %v2222, %v2223
      %v2225 = vrot.slane %v2224, 2
      %v2226 = vadd.f32 %v2224, %v2225
      %v2227 = vrot.slane %v2226, 1
      %v2228 = vadd.f32 %v2226, %v2227
      %v2229 = vsel %vm882, %v2215, 0.0
      %v2230 = vrot.slane %v2229, 4
      %v2231 = vadd.f32 %v2229, %v2230
      %v2232 = vrot.slane %v2231, 2
      %v2233 = vadd.f32 %v2231, %v2232
      %v2234 = vrot.slane %v2233, 1
      %v2235 = vadd.f32 %v2233, %v2234
      %v2236 = vsel %vm882, %v2216, 0.0
      %v2237 = vrot.slane %v2236, 4
      %v2238 = vadd.f32 %v2236, %v2237
      %v2239 = vrot.slane %v2238, 2
      %v2240 = vadd.f32 %v2238, %v2239
      %v2241 = vrot.slane %v2240, 1
      %v2242 = vadd.f32 %v2240, %v2241
      %v2243 = vsel %vm882, %v2217, 0.0
      %v2244 = vrot.slane %v2243, 4
      %v2245 = vadd.f32 %v2243, %v2244
      %v2246 = vrot.slane %v2245, 2
      %v2247 = vadd.f32 %v2245, %v2246
      %v2248 = vrot.slane %v2247, 1
      %v2249 = vadd.f32 %v2247, %v2248
      %v2250 = vsel %vm882, %v2218, 0.0
      %v2251 = vrot.slane %v2250, 4
      %v2252 = vadd.f32 %v2250, %v2251
      %v2253 = vrot.slane %v2252, 2
      %v2254 = vadd.f32 %v2252, %v2253
      %v2255 = vrot.slane %v2254, 1
      %v2256 = vadd.f32 %v2254, %v2255
      %v2257 = vsel %vm882, %v2219, 0.0
      %v2258 = vrot.slane %v2257, 4
      %v2259 = vadd.f32 %v2257, %v2258
      %v2260 = vrot.slane %v2259, 2
      %v2261 = vadd.f32 %v2259, %v2260
      %v2262 = vrot.slane %v2261, 1
      %v2263 = vadd.f32 %v2261, %v2262
      %v2264 = vsel %vm882, %v2220, 0.0
      %v2265 = vrot.slane %v2264, 4
      %v2266 = vadd.f32 %v2264, %v2265
      %v2267 = vrot.slane %v2266, 2
      %v2268 = vadd.f32 %v2266, %v2267
      %v2269 = vrot.slane %v2268, 1
      %v2270 = vadd.f32 %v2268, %v2269
      %v2271 = vsel %vm882, %v2221, 0.0
      %v2272 = vrot.slane %v2271, 4
      %v2273 = vadd.f32 %v2271, %v2272
      %v2274 = vrot.slane %v2273, 2
      %v2275 = vadd.f32 %v2273, %v2274
      %v2276 = vrot.slane %v2275, 1
      %v2277 = vadd.f32 %v2275, %v2276
      %v2278 = vtanh.pop %v2228
      %v2279 = vtanh.pop %v2235
      %v2280 = vtanh.pop %v2242
      %v2281 = vtanh.pop %v2249
      %v2282 = vtanh.pop %v2256
      %v2283 = vtanh.pop %v2263
      %v2284 = vtanh.pop %v2270
      %v2285 = vtanh.pop %v2277
      %v2286 = vlaneseq
      %v2287 = vshrl.u32 %v2286, 7
      %2289 = vset.pattern.permute.xlu0 %v2287
      %2290 = vperm.xlu0 %2289, %v2278
      %v2291 = vpop.permute.xlu0 %2290
      %v2292 = vlaneseq
      %v2293 = vshrl.u32 %v2292, 7
      %2295 = vset.pattern.permute.xlu0 %v2293
      %2296 = vperm.xlu0 %2295, %v2279
      %v2297 = vpop.permute.xlu0 %2296
      %v2298 = vlaneseq
      %v2299 = vshrl.u32 %v2298, 7
      %2301 = vset.pattern.permute.xlu0 %v2299
      %2302 = vperm.xlu0 %2301, %v2280
      %v2303 = vpop.permute.xlu0 %2302
      %v2304 = vlaneseq
      %v2305 = vshrl.u32 %v2304, 7
      %2307 = vset.pattern.permute.xlu0 %v2305
      %2308 = vperm.xlu0 %2307, %v2281
      %v2309 = vpop.permute.xlu0 %2308
      %v2310 = vlaneseq
      %v2311 = vshrl.u32 %v2310, 7
      %2313 = vset.pattern.permute.xlu0 %v2311
      %2314 = vperm.xlu0 %2313, %v2282
      %v2315 = vpop.permute.xlu0 %2314
      %v2316 = vlaneseq
      %v2317 = vshrl.u32 %v2316, 7
      %2319 = vset.pattern.permute.xlu0 %v2317
      %2320 = vperm.xlu0 %2319, %v2283
      %v2321 = vpop.permute.xlu0 %2320
      %v2322 = vlaneseq
      %v2323 = vshrl.u32 %v2322, 7
      %2325 = vset.pattern.permute.xlu0 %v2323
      %2326 = vperm.xlu0 %2325, %v2284
      %v2327 = vpop.permute.xlu0 %2326
      %v2328 = vlaneseq
      %v2329 = vshrl.u32 %v2328, 7
      %2331 = vset.pattern.permute.xlu0 %v2329
      %2332 = vperm.xlu0 %2331, %v2285
      %v2333 = vpop.permute.xlu0 %2332
      %v2334 = vmul.f32 %v2291, %v380
      %v2335 = vmul.f32 %v2297, %v1742
      %v2336 = vmul.f32 %v2303, %v382
      %v2337 = vmul.f32 %v2309, %v1743
      %v2338 = vmul.f32 %v2315, %v385
      %v2339 = vmul.f32 %v2321, %v1744
      %v2340 = vmul.f32 %v2327, %v387
      %v2341 = vmul.f32 %v2333, %v1745
      %v2342 = vsel %vm1758, %v2334, 0.0
      %v2343 = vrot.slane %v2342, 4
      %v2344 = vadd.f32 %v2342, %v2343
      %v2345 = vrot.slane %v2344, 2
      %v2346 = vadd.f32 %v2344, %v2345
      %v2347 = vrot.slane %v2346, 1
      %v2348 = vadd.f32 %v2346, %v2347
      %v2349 = vsel %vm1758, %v2335, 0.0
      %v2350 = vrot.slane %v2349, 4
      %v2351 = vadd.f32 %v2349, %v2350
      %v2352 = vrot.slane %v2351, 2
      %v2353 = vadd.f32 %v2351, %v2352
      %v2354 = vrot.slane %v2353, 1
      %v2355 = vadd.f32 %v2353, %v2354
      %v2356 = vsel %vm1758, %v2336, 0.0
      %v2357 = vrot.slane %v2356, 4
      %v2358 = vadd.f32 %v2356, %v2357
      %v2359 = vrot.slane %v2358, 2
      %v2360 = vadd.f32 %v2358, %v2359
      %v2361 = vrot.slane %v2360, 1
      %v2362 = vadd.f32 %v2360, %v2361
      %v2363 = vsel %vm1758, %v2337, 0.0
      %v2364 = vrot.slane %v2363, 4
      %v2365 = vadd.f32 %v2363, %v2364
      %v2366 = vrot.slane %v2365, 2
      %v2367 = vadd.f32 %v2365, %v2366
      %v2368 = vrot.slane %v2367, 1
      %v2369 = vadd.f32 %v2367, %v2368
      %v2370 = vsel %vm1758, %v2338, 0.0
      %v2371 = vrot.slane %v2370, 4
      %v2372 = vadd.f32 %v2370, %v2371
      %v2373 = vrot.slane %v2372, 2
      %v2374 = vadd.f32 %v2372, %v2373
      %v2375 = vrot.slane %v2374, 1
      %v2376 = vadd.f32 %v2374, %v2375
      %v2377 = vsel %vm1758, %v2339, 0.0
      %v2378 = vrot.slane %v2377, 4
      %v2379 = vadd.f32 %v2377, %v2378
      %v2380 = vrot.slane %v2379, 2
      %v2381 = vadd.f32 %v2379, %v2380
      %v2382 = vrot.slane %v2381, 1
      %v2383 = vadd.f32 %v2381, %v2382
      %v2384 = vsel %vm1758, %v2340, 0.0
      %v2385 = vrot.slane %v2384, 4
      %v2386 = vadd.f32 %v2384, %v2385
      %v2387 = vrot.slane %v2386, 2
      %v2388 = vadd.f32 %v2386, %v2387
      %v2389 = vrot.slane %v2388, 1
      %v2390 = vadd.f32 %v2388, %v2389
      %v2391 = vsel %vm1758, %v2341, 0.0
      %v2392 = vrot.slane %v2391, 4
      %v2393 = vadd.f32 %v2391, %v2392
      %v2394 = vrot.slane %v2393, 2
      %v2395 = vadd.f32 %v2393, %v2394
      %v2396 = vrot.slane %v2395, 1
      %v2397 = vadd.f32 %v2395, %v2396
      %2399 = vst [vmem:[#allocation1] sm:$0xff] %v325
      %s2400 = scalar_lea.vmem [#allocation1], 6
      %v2401 = vld [vmem:[%s2400] ss:$9 sm:$0xff]
      %s2402 = scalar_lea.vmem [#allocation1], 7
      %v2403 = vld [vmem:[%s2402] ss:$9 sm:$0xff]
      %2405 = vst [vmem:[#allocation1] sm:$0xff] %v326
      %s2406 = scalar_lea.vmem [#allocation1], 1
      %v2407 = vld [vmem:[%s2406] ss:$9 sm:$0xff]
      %s2408 = scalar_lea.vmem [#allocation1], 2
      %v2409 = vld [vmem:[%s2408] ss:$9 sm:$0xff]
      %v2410 = vpack.c.bf16 %v2028, %v2028
      %v2411 = vpack.c.bf16 %v2035, %v2035
      %v2412 = vpack.c.bf16 %v2042, %v2042
      %v2413 = vpack.c.bf16 %v2049, %v2049
      %v2414 = vpack.c.bf16 %v2056, %v2056
      %v2415 = vpack.c.bf16 %v2063, %v2063
      %v2416 = vpack.c.bf16 %v2070, %v2070
      %v2417 = vpack.c.bf16 %v2077, %v2077
      %v2418 = vpack.c.bf16 %v2348, %v2348
      %v2419 = vpack.c.bf16 %v2355, %v2355
      %v2420 = vpack.c.bf16 %v2362, %v2362
      %v2421 = vpack.c.bf16 %v2369, %v2369
      %v2422 = vpack.c.bf16 %v2376, %v2376
      %v2423 = vpack.c.bf16 %v2383, %v2383
      %v2424 = vpack.c.bf16 %v2390, %v2390
      %v2425 = vpack.c.bf16 %v2397, %v2397
      %v2426 = vperm.slane %v2401, 0
      %v2427 = vperm.slane %v2403, 0
      %v2438 = vunpack.c.l.b16 %v2410
      %v2439 = vunpack.c.l.b16 %v2411
      %v2440 = vunpack.c.l.b16 %v2412
      %v2441 = vunpack.c.l.b16 %v2413
      %v2442 = vunpack.c.l.b16 %v2414
      %v2443 = vunpack.c.l.b16 %v2415
      %v2444 = vunpack.c.l.b16 %v2416
      %v2445 = vunpack.c.l.b16 %v2417
      %v2446 = vpack.c.b16 %v2438, %v2438
      %v2447 = vpack.c.b16 %v2439, %v2439
      %v2448 = vpack.c.b16 %v2440, %v2440
      %v2449 = vpack.c.b16 %v2441, %v2441
      %v2450 = vpack.c.b16 %v2442, %v2442
      %v2451 = vpack.c.b16 %v2443, %v2443
      %v2452 = vpack.c.b16 %v2444, %v2444
      %v2453 = vpack.c.b16 %v2445, %v2445
      %v2454 = vunpack.c.l.b16 %v2446
      %v2455 = vunpack.c.l.b16 %v2447
      %v2456 = vunpack.c.l.b16 %v2448
      %v2457 = vunpack.c.l.b16 %v2449
      %v2458 = vunpack.c.l.b16 %v2450
      %v2459 = vunpack.c.l.b16 %v2451
      %v2460 = vunpack.c.l.b16 %v2452
      %v2461 = vunpack.c.l.b16 %v2453
      %v2462 = vrot.slane %v2455, 7
      %vm2463 = vcmask 1041409
      %v2464 = vsel %vm2463, %v2462, %v2454
      %v2465 = vrot.slane %v2456, 6
      %vm2466 = vcmask 1042434
      %v2467 = vsel %vm2466, %v2465, %v2464
      %v2468 = vrot.slane %v2457, 5
      %vm2469 = vcmask 1043459
      %v2470 = vsel %vm2469, %v2468, %v2467
      %v2471 = vrot.slane %v2458, 4
      %vm2472 = vcmask 1044484
      %v2473 = vsel %vm2472, %v2471, %v2470
      %v2474 = vrot.slane %v2459, 3
      %vm2475 = vcmask 1045509
      %v2476 = vsel %vm2475, %v2474, %v2473
      %v2477 = vrot.slane %v2460, 2
      %vm2478 = vcmask 1046534
      %v2479 = vsel %vm2478, %v2477, %v2476
      %v2480 = vrot.slane %v2461, 1
      %vm2481 = vcmask 1047559
      %v2482 = vsel %vm2481, %v2480, %v2479
      %v2483 = vpack.c.b16 %v2482, %v2482
      %v2488 = vunpack.c.l.b16 %v289
      %v2489 = vunpack.c.l.b16 %v290
      %v2490 = vunpack.c.l.b16 %v291
      %v2491 = vunpack.c.l.b16 %v292
      %v2492 = vpack.c.b16 %v2489, %v2488
      %v2493 = vpack.c.b16 %v2491, %v2490
      %v2497 = vsel %vm363, %v2483, 0
      %2499 = vmatpush.bf16.msra.mxu0 0
      %2500 = vmatpush.bf16.msra.mxu0 0
      %2501 = vmatpush.bf16.msra.mxu0 0
      %2502 = vmatpush.bf16.msra.mxu0 0
      %2503 = vmatpush.bf16.msra.mxu0 0
      %2504 = vmatpush.bf16.msra.mxu0 0
      %2505 = vmatpush.bf16.msra.mxu0 %v2493
      %2506 = vmatpush.bf16.msra.mxu0 %v2492
      %2507 = vmatmul.bf16.gmra.mxu0 %v2497
      %v2508 = vpop.f32.mrf.mxu0
      %v2509 = vadd.f32 %v2426, %v2508
      %v2510 = vpop.f32.mrf.mxu0
      %2511 = vdwg.mxu0
      %v2520 = vunpack.c.l.b16 %v2418
      %v2521 = vunpack.c.l.b16 %v2419
      %v2522 = vunpack.c.l.b16 %v2420
      %v2523 = vunpack.c.l.b16 %v2421
      %v2524 = vunpack.c.l.b16 %v2422
      %v2525 = vunpack.c.l.b16 %v2423
      %v2526 = vunpack.c.l.b16 %v2424
      %v2527 = vunpack.c.l.b16 %v2425
      %v2528 = vpack.c.b16 %v2520, %v2520
      %v2529 = vpack.c.b16 %v2521, %v2521
      %v2530 = vpack.c.b16 %v2522, %v2522
      %v2531 = vpack.c.b16 %v2523, %v2523
      %v2532 = vpack.c.b16 %v2524, %v2524
      %v2533 = vpack.c.b16 %v2525, %v2525
      %v2534 = vpack.c.b16 %v2526, %v2526
      %v2535 = vpack.c.b16 %v2527, %v2527
      %v2536 = vunpack.c.l.b16 %v2528
      %v2537 = vunpack.c.l.b16 %v2529
      %v2538 = vunpack.c.l.b16 %v2530
      %v2539 = vunpack.c.l.b16 %v2531
      %v2540 = vunpack.c.l.b16 %v2532
      %v2541 = vunpack.c.l.b16 %v2533
      %v2542 = vunpack.c.l.b16 %v2534
      %v2543 = vunpack.c.l.b16 %v2535
      %v2544 = vrot.slane %v2537, 7
      %v2545 = vsel %vm2463, %v2544, %v2536
      %v2546 = vrot.slane %v2538, 6
      %v2547 = vsel %vm2466, %v2546, %v2545
      %v2548 = vrot.slane %v2539, 5
      %v2549 = vsel %vm2469, %v2548, %v2547
      %v2550 = vrot.slane %v2540, 4
      %v2551 = vsel %vm2472, %v2550, %v2549
      %v2552 = vrot.slane %v2541, 3
      %v2553 = vsel %vm2475, %v2552, %v2551
      %v2554 = vrot.slane %v2542, 2
      %v2555 = vsel %vm2478, %v2554, %v2553
      %v2556 = vrot.slane %v2543, 1
      %v2557 = vsel %vm2481, %v2556, %v2555
      %v2558 = vpack.c.b16 %v2557, %v2557
      %v2563 = vunpack.c.l.b16 %v293
      %v2564 = vunpack.c.l.b16 %v294
      %v2565 = vunpack.c.l.b16 %v295
      %v2566 = vunpack.c.l.b16 %v296
      %v2567 = vpack.c.b16 %v2564, %v2563
      %v2568 = vpack.c.b16 %v2566, %v2565
      %v2572 = vsel %vm363, %v2558, 0
      %2574 = vmatpush.bf16.msra.mxu0 0
      %2575 = vmatpush.bf16.msra.mxu0 0
      %2576 = vmatpush.bf16.msra.mxu0 0
      %2577 = vmatpush.bf16.msra.mxu0 0
      %2578 = vmatpush.bf16.msra.mxu0 0
      %2579 = vmatpush.bf16.msra.mxu0 0
      %2580 = vmatpush.bf16.msra.mxu0 %v2568
      %2581 = vmatpush.bf16.msra.mxu0 %v2567
      %2582 = vmatmul.bf16.gmra.mxu0 %v2572
      %v2583 = vpop.f32.mrf.mxu0
      %v2584 = vadd.f32 %v2427, %v2583
      %v2585 = vpop.f32.mrf.mxu0
      %2586 = vdwg.mxu0
      %v2587 = vmax.f32 %v2509, 0.0
      %v2588 = vmax.f32 %v2584, 0.0
      %v2589 = vpack.c.bf16 %v2587, %v2587
      %v2590 = vpack.c.bf16 %v2588, %v2588
      %v2591 = vperm.slane %v2407, 0
      %v2592 = vperm.slane %v2409, 0
      %v2603 = vunpack.c.l.b16 %v301
      %v2604 = vunpack.c.l.b16 %v302
      %v2605 = vunpack.c.l.b16 %v303
      %v2606 = vunpack.c.l.b16 %v304
      %v2607 = vunpack.c.l.b16 %v305
      %v2608 = vunpack.c.l.b16 %v306
      %v2609 = vunpack.c.l.b16 %v307
      %v2610 = vunpack.c.l.b16 %v308
      %v2611 = vpack.c.b16 %v2604, %v2603
      %v2612 = vpack.c.b16 %v2606, %v2605
      %v2613 = vpack.c.b16 %v2608, %v2607
      %v2614 = vpack.c.b16 %v2610, %v2609
      %vm2619 = vcmask 523264
      %v2621 = vsel %vm2619, %v2589, 0
      %2623 = vmatpush.bf16.msra.mxu0 0
      %2624 = vmatpush.bf16.msra.mxu0 0
      %2625 = vmatpush.bf16.msra.mxu0 0
      %2626 = vmatpush.bf16.msra.mxu0 0
      %2627 = vmatpush.bf16.msra.mxu0 %v2614
      %2628 = vmatpush.bf16.msra.mxu0 %v2613
      %2629 = vmatpush.bf16.msra.mxu0 %v2612
      %2630 = vmatpush.bf16.msra.mxu0 %v2611
      %2631 = vmatmul.bf16.gmra.mxu0 %v2621
      %v2632 = vpop.f32.mrf.mxu0
      %v2633 = vadd.f32 %v2591, %v2632
      %v2634 = vpop.f32.mrf.mxu0
      %2635 = vdwg.mxu0
      %v2644 = vunpack.c.l.b16 %v309
      %v2645 = vunpack.c.l.b16 %v310
      %v2646 = vunpack.c.l.b16 %v311
      %v2647 = vunpack.c.l.b16 %v312
      %v2648 = vunpack.c.l.b16 %v313
      %v2649 = vunpack.c.l.b16 %v314
      %v2650 = vunpack.c.l.b16 %v315
      %v2651 = vunpack.c.l.b16 %v316
      %v2652 = vpack.c.b16 %v2645, %v2644
      %v2653 = vpack.c.b16 %v2647, %v2646
      %v2654 = vpack.c.b16 %v2649, %v2648
      %v2655 = vpack.c.b16 %v2651, %v2650
      %v2661 = vsel %vm2619, %v2590, 0
      %2663 = vmatpush.bf16.msra.mxu0 0
      %2664 = vmatpush.bf16.msra.mxu0 0
      %2665 = vmatpush.bf16.msra.mxu0 0
      %2666 = vmatpush.bf16.msra.mxu0 0
      %2667 = vmatpush.bf16.msra.mxu0 %v2655
      %2668 = vmatpush.bf16.msra.mxu0 %v2654
      %2669 = vmatpush.bf16.msra.mxu0 %v2653
      %2670 = vmatpush.bf16.msra.mxu0 %v2652
      %2671 = vmatmul.bf16.gmra.mxu0 %v2661
      %v2672 = vpop.f32.mrf.mxu0
      %v2673 = vadd.f32 %v2592, %v2672
      %v2674 = vpop.f32.mrf.mxu0
      %2675 = vdwg.mxu0
      %v2676 = vpack.c.bf16 %v2633, %v2673
      %v2677 = vunpack.c.h.b16 %v285
      %v2678 = vunpack.c.h.b16 %v286
      %v2679 = vunpack.c.h.b16 %v287
      %v2680 = vunpack.c.h.b16 %v288
      %v2681 = vpack.c.b16 %v2678, %v2677
      %v2682 = vpack.c.b16 %v2680, %v2679
      %v2686 = vsel %vm363, %v2676, 0
      %2688 = vmatpush.bf16.msra.mxu0 0
      %2689 = vmatpush.bf16.msra.mxu0 0
      %2690 = vmatpush.bf16.msra.mxu0 0
      %2691 = vmatpush.bf16.msra.mxu0 0
      %2692 = vmatpush.bf16.msra.mxu0 0
      %2693 = vmatpush.bf16.msra.mxu0 0
      %2694 = vmatpush.bf16.msra.mxu0 %v2682
      %2695 = vmatpush.bf16.msra.mxu0 %v2681
      %2696 = vmatmul.bf16.gmra.mxu0 %v2686
      %v2697 = vpop.f32.mrf.mxu0
      %v2698 = vadd.f32 0.0, %v2697
      %v2699 = vpop.f32.mrf.mxu0
      %v2700 = vadd.f32 0.0, %v2699
      %2701 = vdwg.mxu0
      %v2702 = vperm.slane %v325, 3
      %v2703 = vadd.f32 %v2698, %v2702
      %v2704 = vperm.slane %v325, 4
      %2706 = vrot.lane.b32.xlu0 %v2704, 32
      %v2707 = vpop.permute.xlu0 %2706
      %v2709 = vadd.f32 %v2700, %v2707
      %v2711 = vrot.slane %v2703, 4
      %v2714 = vrot.slane %v2709, 4
      %2716 = vrot.lane.b32.xlu0 %v2703, 112
      %v2717 = vpop.permute.xlu0 %2716
      %2718 = vrot.lane.b32.xlu0 %v2711, 112
      %v2719 = vpop.permute.xlu0 %2718
      %v2722 = vpack.c.bf16 %v2703, %v2703
      %v2723 = vpack.c.bf16 %v2711, %v2711
      %v2724 = vpack.c.bf16 %v2717, %v2717
      %v2725 = vpack.c.bf16 %v2719, %v2719
      %2726 = vrot.lane.b32.xlu0 %v2709, 112
      %v2727 = vpop.permute.xlu0 %2726
      %2728 = vrot.lane.b32.xlu0 %v2714, 112
      %v2729 = vpop.permute.xlu0 %2728
      %v2732 = vpack.c.bf16 %v2709, %v2709
      %v2733 = vpack.c.bf16 %v2714, %v2714
      %v2734 = vpack.c.bf16 %v2727, %v2727
      %v2735 = vpack.c.bf16 %v2729, %v2729
      %v2737 = vunpack.c.l.b16 %v2732
      %v2738 = vpack.c.b16 %v2737, %v2737
      %2739 = vrot.lane.b32.xlu0 %v2738, 96
      %v2740 = vpop.permute.xlu0 %2739
      %v2742 = vsel %vm486, %v2722, 0
      %v2745 = vsel %vm486, %v2740, 0
      %2747 = vmatpush.bf16.xpose.msra.mxu0 0
      %2748 = vmatpush.bf16.xpose.msra.mxu0 0
      %2749 = vmatpush.bf16.xpose.msra.mxu0 0
      %2750 = vmatpush.bf16.xpose.msra.mxu0 0
      %2751 = vmatpush.bf16.xpose.msra.mxu0 0
      %2752 = vmatpush.bf16.xpose.msra.mxu0 0
      %2753 = vmatpush.bf16.xpose.msra.mxu0 0
      %2754 = vmatpush.bf16.xpose.msra.mxu0 %v2745
      %2755 = vmatmul.bf16.gmra.mxu0 %v2742
      %v2756 = vpop.f32.mrf.mxu0
      %v2757 = vadd.f32 0.0, %v2756
      %v2758 = vpop.f32.mrf.mxu0
      %2759 = vdwg.mxu0
      %v2761 = vunpack.c.l.b16 %v2733
      %v2762 = vpack.c.b16 %v2761, %v2761
      %2763 = vrot.lane.b32.xlu0 %v2762, 96
      %v2764 = vpop.permute.xlu0 %2763
      %v2766 = vsel %vm486, %v2723, 0
      %v2769 = vsel %vm486, %v2764, 0
      %2771 = vmatpush.bf16.xpose.msra.mxu0 0
      %2772 = vmatpush.bf16.xpose.msra.mxu0 0
      %2773 = vmatpush.bf16.xpose.msra.mxu0 0
      %2774 = vmatpush.bf16.xpose.msra.mxu0 0
      %2775 = vmatpush.bf16.xpose.msra.mxu0 0
      %2776 = vmatpush.bf16.xpose.msra.mxu0 0
      %2777 = vmatpush.bf16.xpose.msra.mxu0 0
      %2778 = vmatpush.bf16.xpose.msra.mxu0 %v2769
      %2779 = vmatmul.bf16.gmra.mxu0 %v2766
      %v2780 = vpop.f32.mrf.mxu0
      %v2781 = vadd.f32 0.0, %v2780
      %v2782 = vpop.f32.mrf.mxu0
      %2783 = vdwg.mxu0
      %v2785 = vunpack.c.l.b16 %v2734
      %v2786 = vpack.c.b16 %v2785, %v2785
      %2787 = vrot.lane.b32.xlu0 %v2786, 96
      %v2788 = vpop.permute.xlu0 %2787
      %v2790 = vsel %vm486, %v2724, 0
      %v2793 = vsel %vm486, %v2788, 0
      %2795 = vmatpush.bf16.xpose.msra.mxu0 0
      %2796 = vmatpush.bf16.xpose.msra.mxu0 0
      %2797 = vmatpush.bf16.xpose.msra.mxu0 0
      %2798 = vmatpush.bf16.xpose.msra.mxu0 0
      %2799 = vmatpush.bf16.xpose.msra.mxu0 0
      %2800 = vmatpush.bf16.xpose.msra.mxu0 0
      %2801 = vmatpush.bf16.xpose.msra.mxu0 0
      %2802 = vmatpush.bf16.xpose.msra.mxu0 %v2793
      %2803 = vmatmul.bf16.gmra.mxu0 %v2790
      %v2804 = vpop.f32.mrf.mxu0
      %v2805 = vadd.f32 0.0, %v2804
      %v2806 = vpop.f32.mrf.mxu0
      %2807 = vdwg.mxu0
      %v2809 = vunpack.c.l.b16 %v2735
      %v2810 = vpack.c.b16 %v2809, %v2809
      %2811 = vrot.lane.b32.xlu0 %v2810, 96
      %v2812 = vpop.permute.xlu0 %2811
      %v2814 = vsel %vm486, %v2725, 0
      %v2817 = vsel %vm486, %v2812, 0
      %2819 = vmatpush.bf16.xpose.msra.mxu0 0
      %2820 = vmatpush.bf16.xpose.msra.mxu0 0
      %2821 = vmatpush.bf16.xpose.msra.mxu0 0
      %2822 = vmatpush.bf16.xpose.msra.mxu0 0
      %2823 = vmatpush.bf16.xpose.msra.mxu0 0
      %2824 = vmatpush.bf16.xpose.msra.mxu0 0
      %2825 = vmatpush.bf16.xpose.msra.mxu0 0
      %2826 = vmatpush.bf16.xpose.msra.mxu0 %v2817
      %2827 = vmatmul.bf16.gmra.mxu0 %v2814
      %v2828 = vpop.f32.mrf.mxu0
      %v2829 = vadd.f32 0.0, %v2828
      %v2830 = vpop.f32.mrf.mxu0
      %2831 = vdwg.mxu0
      %v2832 = vmul.f32 %v2757, 0.25
      %v2833 = vmul.f32 %v2781, 0.25
      %v2834 = vmul.f32 %v2805, 0.25
      %v2835 = vmul.f32 %v2829, 0.25
      %v2836 = vsel %vm882, %v2832, -inf
      %2837 = vmax.xlane.f32.xlu0 %v2836
      %v2838 = vpop.xlane.xlu0 %2837
      %v2839 = vsel %vm882, %v2833, -inf
      %2840 = vmax.xlane.f32.xlu0 %v2839
      %v2841 = vpop.xlane.xlu0 %2840
      %v2842 = vsel %vm882, %v2834, -inf
      %2843 = vmax.xlane.f32.xlu0 %v2842
      %v2844 = vpop.xlane.xlu0 %2843
      %v2845 = vsel %vm882, %v2835, -inf
      %2846 = vmax.xlane.f32.xlu0 %v2845
      %v2847 = vpop.xlane.xlu0 %2846
      %v2848 = vsub.f32 %v2832, %v2838
      %v2849 = vsub.f32 %v2833, %v2841
      %v2850 = vsub.f32 %v2834, %v2844
      %v2851 = vsub.f32 %v2835, %v2847
      %v2852 = vmul.f32 %v2848, 1.442695
      %v2853 = vpow.pop %v2852
      %v2854 = vmul.f32 %v2849, 1.442695
      %v2855 = vpow.pop %v2854
      %v2856 = vmul.f32 %v2850, 1.442695
      %v2857 = vpow.pop %v2856
      %v2858 = vmul.f32 %v2851, 1.442695
      %v2859 = vpow.pop %v2858
      %v2860 = vsel %vm882, %v2853, 0.0
      %2861 = vadd.xlane.f32.xlu0 %v2860
      %v2862 = vpop.xlane.xlu0 %2861
      %v2863 = vsel %vm882, %v2855, 0.0
      %2864 = vadd.xlane.f32.xlu0 %v2863
      %v2865 = vpop.xlane.xlu0 %2864
      %v2866 = vsel %vm882, %v2857, 0.0
      %2867 = vadd.xlane.f32.xlu0 %v2866
      %v2868 = vpop.xlane.xlu0 %2867
      %v2869 = vsel %vm882, %v2859, 0.0
      %2870 = vadd.xlane.f32.xlu0 %v2869
      %v2871 = vpop.xlane.xlu0 %2870
      %v2872 = vrcp.pop %v2862
      %v2873 = vmul.f32 %v2862, %v2872
      %v2874 = vsub.f32 1.0, %v2873
      %v2875 = vmul.f32 %v2872, %v2874
      %v2876 = vadd.f32 %v2872, %v2875
      %vm2877 = vweird.f32 %v2862
      %vm2878 = vweird.f32 %v2872
      %vm2879 = vmor %vm2877, %vm2878
      %v2880 = vsel %vm2879, %v2872, %v2876
      %v2881 = vand.u32 2147483647, %v2862
      %vm2882 = vcmp.eq.f32.partialorder %v2881, 8.507059e+37
      %v2883 = vand.u32 %v2862, 2147483648
      %v2884 = vor.u32 1.1754944e-38, %v2883
      %v2885 = vsel %vm2882, %v2884, %v2880
      %v2886 = vmul.f32 %v2853, %v2885
      %v2887 = vrcp.pop %v2865
      %v2888 = vmul.f32 %v2865, %v2887
      %v2889 = vsub.f32 1.0, %v2888
      %v2890 = vmul.f32 %v2887, %v2889
      %v2891 = vadd.f32 %v2887, %v2890
      %vm2892 = vweird.f32 %v2865
      %vm2893 = vweird.f32 %v2887
      %vm2894 = vmor %vm2892, %vm2893
      %v2895 = vsel %vm2894, %v2887, %v2891
      %v2896 = vand.u32 2147483647, %v2865
      %vm2897 = vcmp.eq.f32.partialorder %v2896, 8.507059e+37
      %v2898 = vand.u32 %v2865, 2147483648
      %v2899 = vor.u32 1.1754944e-38, %v2898
      %v2900 = vsel %vm2897, %v2899, %v2895
      %v2901 = vmul.f32 %v2855, %v2900
      %v2902 = vrcp.pop %v2868
      %v2903 = vmul.f32 %v2868, %v2902
      %v2904 = vsub.f32 1.0, %v2903
      %v2905 = vmul.f32 %v2902, %v2904
      %v2906 = vadd.f32 %v2902, %v2905
      %vm2907 = vweird.f32 %v2868
      %vm2908 = vweird.f32 %v2902
      %vm2909 = vmor %vm2907, %vm2908
      %v2910 = vsel %vm2909, %v2902, %v2906
      %v2911 = vand.u32 2147483647, %v2868
      %vm2912 = vcmp.eq.f32.partialorder %v2911, 8.507059e+37
      %v2913 = vand.u32 %v2868, 2147483648
      %v2914 = vor.u32 1.1754944e-38, %v2913
      %v2915 = vsel %vm2912, %v2914, %v2910
      %v2916 = vmul.f32 %v2857, %v2915
      %v2917 = vrcp.pop %v2871
      %v2918 = vmul.f32 %v2871, %v2917
      %v2919 = vsub.f32 1.0, %v2918
      %v2920 = vmul.f32 %v2917, %v2919
      %v2921 = vadd.f32 %v2917, %v2920
      %vm2922 = vweird.f32 %v2871
      %vm2923 = vweird.f32 %v2917
      %vm2924 = vmor %vm2922, %vm2923
      %v2925 = vsel %vm2924, %v2917, %v2921
      %v2926 = vand.u32 2147483647, %v2871
      %vm2927 = vcmp.eq.f32.partialorder %v2926, 8.507059e+37
      %v2928 = vand.u32 %v2871, 2147483648
      %v2929 = vor.u32 1.1754944e-38, %v2928
      %v2930 = vsel %vm2927, %v2929, %v2925
      %v2931 = vmul.f32 %v2859, %v2930
      %v2932 = vpack.c.bf16 %v2886, %v2886
      %v2933 = vpack.c.bf16 %v2901, %v2901
      %v2934 = vpack.c.bf16 %v2916, %v2916
      %v2935 = vpack.c.bf16 %v2931, %v2931
      %2936 = vrot.lane.b32.xlu0 %v2738, 64
      %v2937 = vpop.permute.xlu0 %2936
      %v2939 = vsel %vm1285, %v2932, 0
      %v2942 = vsel %vm1289, %v2937, 0
      %2944 = vmatpush.bf16.msra.mxu0 0
      %2945 = vmatpush.bf16.msra.mxu0 0
      %2946 = vmatpush.bf16.msra.mxu0 0
      %2947 = vmatpush.bf16.msra.mxu0 0
      %2948 = vmatpush.bf16.msra.mxu0 0
      %2949 = vmatpush.bf16.msra.mxu0 0
      %2950 = vmatpush.bf16.msra.mxu0 0
      %2951 = vmatpush.bf16.msra.mxu0 %v2942
      %2952 = vmatmul.bf16.gmra.mxu0 %v2939
      %v2953 = vpop.f32.mrf.mxu0
      %v2954 = vadd.f32 0.0, %v2953
      %v2955 = vpop.f32.mrf.mxu0
      %2956 = vdwg.mxu0
      %2957 = vrot.lane.b32.xlu0 %v2762, 64
      %v2958 = vpop.permute.xlu0 %2957
      %v2960 = vsel %vm1285, %v2933, 0
      %v2963 = vsel %vm1289, %v2958, 0
      %2965 = vmatpush.bf16.msra.mxu0 0
      %2966 = vmatpush.bf16.msra.mxu0 0
      %2967 = vmatpush.bf16.msra.mxu0 0
      %2968 = vmatpush.bf16.msra.mxu0 0
      %2969 = vmatpush.bf16.msra.mxu0 0
      %2970 = vmatpush.bf16.msra.mxu0 0
      %2971 = vmatpush.bf16.msra.mxu0 0
      %2972 = vmatpush.bf16.msra.mxu0 %v2963
      %2973 = vmatmul.bf16.gmra.mxu0 %v2960
      %v2974 = vpop.f32.mrf.mxu0
      %v2975 = vadd.f32 0.0, %v2974
      %v2976 = vpop.f32.mrf.mxu0
      %2977 = vdwg.mxu0
      %2978 = vrot.lane.b32.xlu0 %v2786, 64
      %v2979 = vpop.permute.xlu0 %2978
      %v2981 = vsel %vm1285, %v2934, 0
      %v2984 = vsel %vm1289, %v2979, 0
      %2986 = vmatpush.bf16.msra.mxu0 0
      %2987 = vmatpush.bf16.msra.mxu0 0
      %2988 = vmatpush.bf16.msra.mxu0 0
      %2989 = vmatpush.bf16.msra.mxu0 0
      %2990 = vmatpush.bf16.msra.mxu0 0
      %2991 = vmatpush.bf16.msra.mxu0 0
      %2992 = vmatpush.bf16.msra.mxu0 0
      %2993 = vmatpush.bf16.msra.mxu0 %v2984
      %2994 = vmatmul.bf16.gmra.mxu0 %v2981
      %v2995 = vpop.f32.mrf.mxu0
      %v2996 = vadd.f32 0.0, %v2995
      %v2997 = vpop.f32.mrf.mxu0
      %2998 = vdwg.mxu0
      %2999 = vrot.lane.b32.xlu0 %v2810, 64
      %v3000 = vpop.permute.xlu0 %2999
      %v3002 = vsel %vm1285, %v2935, 0
      %v3005 = vsel %vm1289, %v3000, 0
      %3007 = vmatpush.bf16.msra.mxu0 0
      %3008 = vmatpush.bf16.msra.mxu0 0
      %3009 = vmatpush.bf16.msra.mxu0 0
      %3010 = vmatpush.bf16.msra.mxu0 0
      %3011 = vmatpush.bf16.msra.mxu0 0
      %3012 = vmatpush.bf16.msra.mxu0 0
      %3013 = vmatpush.bf16.msra.mxu0 0
      %3014 = vmatpush.bf16.msra.mxu0 %v3005
      %3015 = vmatmul.bf16.gmra.mxu0 %v3002
      %v3016 = vpop.f32.mrf.mxu0
      %v3017 = vadd.f32 0.0, %v3016
      %v3018 = vpop.f32.mrf.mxu0
      %3019 = vdwg.mxu0
      %3022 = vrot.lane.b32.xlu0 %v2996, 16
      %v3023 = vpop.permute.xlu0 %3022
      %3024 = vrot.lane.b32.xlu0 %v3017, 16
      %v3025 = vpop.permute.xlu0 %3024
      %v3028 = vsel %vm486, %v2954, %v3023
      %v3029 = vsel %vm486, %v2975, %v3025
      %3032 = vst [vmem:[#allocation1] ss:$2 sm:$0xff] %v3028
      %s3033 = scalar_lea.vmem [#allocation1], 1
      %3034 = vst [vmem:[%s3033] ss:$2 sm:$0xff] %v3029
      %v3035 = vld.sshfl [vmem:[#allocation1] sm:$0xff pattern:$0x75316420]
      %v3037 = vpack.c.bf16 %v3035, %v3035
      %v3038 = vperm.slane %v325, 5
      %3039 = vrot.lane.b32.xlu0 %v2681, 32
      %v3040 = vpop.permute.xlu0 %3039
      %3041 = vrot.lane.b32.xlu0 %v2682, 32
      %v3042 = vpop.permute.xlu0 %3041
      %v3046 = vsel %vm363, %v3037, 0
      %3048 = vmatpush.bf16.msra.mxu0 0
      %3049 = vmatpush.bf16.msra.mxu0 0
      %3050 = vmatpush.bf16.msra.mxu0 0
      %3051 = vmatpush.bf16.msra.mxu0 0
      %3052 = vmatpush.bf16.msra.mxu0 0
      %3053 = vmatpush.bf16.msra.mxu0 0
      %3054 = vmatpush.bf16.msra.mxu0 %v3042
      %3055 = vmatpush.bf16.msra.mxu0 %v3040
      %3056 = vmatmul.bf16.gmra.mxu0 %v3046
      %v3057 = vpop.f32.mrf.mxu0
      %v3058 = vadd.f32 %v3038, %v3057
      %v3059 = vpop.f32.mrf.mxu0
      %3060 = vdwg.mxu0
      %v3062 = vrot.slane %v3058, 4
      %v3064 = vmul.f32 %v3058, %v3058
      %v3065 = vmul.f32 %v3062, %v3062
      %v3066 = vsel %vm1758, %v3064, 0.0
      %3067 = vadd.xlane.f32.xlu0 %v3066
      %v3068 = vpop.xlane.xlu0 %3067
      %v3069 = vsel %vm1758, %v3065, 0.0
      %3070 = vadd.xlane.f32.xlu0 %v3069
      %v3071 = vpop.xlane.xlu0 %3070
      %v3072 = vrsqrt.pop %v3068
      %v3073 = vmul.f32 %v3072, %v3068
      %v3074 = vmul.f32 %v3073, %v3072
      %v3075 = vmul.f32 0.5, %v3074
      %v3076 = vsub.f32 1.5, %v3075
      %v3077 = vmul.f32 %v3072, %v3076
      %v3078 = vmul.f32 %v3068, %v3077
      %vm3079 = vcmp.eq.f32.partialorder %v3068, inf
      %v3080 = vsel %vm3079, %v3068, %v3078
      %vm3081 = vcmp.eq.f32.partialorder %v3068, 0.0
      %v3082 = vand.u32 %v3068, 2147483648
      %v3083 = vsel %vm3081, %v3082, %v3080
      %v3084 = vrsqrt.pop %v3071
      %v3085 = vmul.f32 %v3084, %v3071
      %v3086 = vmul.f32 %v3085, %v3084
      %v3087 = vmul.f32 0.5, %v3086
      %v3088 = vsub.f32 1.5, %v3087
      %v3089 = vmul.f32 %v3084, %v3088
      %v3090 = vmul.f32 %v3071, %v3089
      %vm3091 = vcmp.eq.f32.partialorder %v3071, inf
      %v3092 = vsel %vm3091, %v3071, %v3090
      %vm3093 = vcmp.eq.f32.partialorder %v3071, 0.0
      %v3094 = vand.u32 %v3071, 2147483648
      %v3095 = vsel %vm3093, %v3094, %v3092
      %v3096 = vmul.f32 %v3083, %v1885
      %v3097 = vmul.f32 %v3095, %v1885
      %v3098 = vmul.f32 %v3096, %v327
      %v3099 = vmul.f32 %v3097, %v327
      %v3100 = vsel %vm882, %v3098, 0.0
      %v3101 = vrot.slane %v3100, 4
      %v3102 = vadd.f32 %v3100, %v3101
      %v3103 = vrot.slane %v3102, 2
      %v3104 = vadd.f32 %v3102, %v3103
      %v3105 = vrot.slane %v3104, 1
      %v3106 = vadd.f32 %v3104, %v3105
      %v3107 = vsel %vm882, %v3099, 0.0
      %v3108 = vrot.slane %v3107, 4
      %v3109 = vadd.f32 %v3107, %v3108
      %v3110 = vrot.slane %v3109, 2
      %v3111 = vadd.f32 %v3109, %v3110
      %v3112 = vrot.slane %v3111, 1
      %v3113 = vadd.f32 %v3111, %v3112
      %v3114 = vtanh.pop %v3106
      %v3115 = vtanh.pop %v3113
      %v3116 = vlaneseq
      %v3117 = vshrl.u32 %v3116, 7
      %3119 = vset.pattern.permute.xlu0 %v3117
      %3120 = vperm.xlu0 %3119, %v3114
      %v3121 = vpop.permute.xlu0 %3120
      %v3122 = vlaneseq
      %v3123 = vshrl.u32 %v3122, 7
      %3125 = vset.pattern.permute.xlu0 %v3123
      %3126 = vperm.xlu0 %3125, %v3115
      %v3127 = vpop.permute.xlu0 %3126
      %v3128 = vmul.f32 %v3121, %v3058
      %v3129 = vmul.f32 %v3127, %v3062
      %v3130 = vsel %vm1758, %v3128, 0.0
      %v3131 = vrot.slane %v3130, 4
      %v3132 = vadd.f32 %v3130, %v3131
      %v3133 = vrot.slane %v3132, 2
      %v3134 = vadd.f32 %v3132, %v3133
      %v3135 = vrot.slane %v3134, 1
      %v3136 = vadd.f32 %v3134, %v3135
      %v3137 = vsel %vm1758, %v3129, 0.0
      %v3138 = vrot.slane %v3137, 4
      %v3139 = vadd.f32 %v3137, %v3138
      %v3140 = vrot.slane %v3139, 2
      %v3141 = vadd.f32 %v3139, %v3140
      %v3142 = vrot.slane %v3141, 1
      %v3143 = vadd.f32 %v3141, %v3142
      %v3144 = vpack.c.bf16 %v3136, %v3136
      %v3145 = vpack.c.bf16 %v3143, %v3143
      %v3146 = vperm.slane %v326, 0
      %v3149 = vunpack.c.l.b16 %v3144
      %v3150 = vunpack.c.l.b16 %v3145
      %v3151 = vsel %vm2463, %v3150, %v3149
      %v3152 = vpack.c.b16 %v3151, %v3151
      %v3157 = vunpack.c.l.b16 %v297
      %v3158 = vunpack.c.l.b16 %v298
      %v3159 = vunpack.c.l.b16 %v299
      %v3160 = vunpack.c.l.b16 %v300
      %v3161 = vpack.c.b16 %v3158, %v3157
      %v3162 = vpack.c.b16 %v3160, %v3159
      %v3166 = vsel %vm363, %v3152, 0
      %3168 = vmatpush.bf16.msra.mxu0 0
      %3169 = vmatpush.bf16.msra.mxu0 0
      %3170 = vmatpush.bf16.msra.mxu0 0
      %3171 = vmatpush.bf16.msra.mxu0 0
      %3172 = vmatpush.bf16.msra.mxu0 0
      %3173 = vmatpush.bf16.msra.mxu0 0
      %3174 = vmatpush.bf16.msra.mxu0 %v3162
      %3175 = vmatpush.bf16.msra.mxu0 %v3161
      %3176 = vmatmul.bf16.gmra.mxu0 %v3166
      %v3177 = vpop.f32.mrf.mxu0
      %v3178 = vadd.f32 %v3146, %v3177
      %v3179 = vpop.f32.mrf.mxu0
      %3180 = vdwg.mxu0
      %v3181 = vmax.f32 %v3178, 0.0
      %v3182 = vpack.c.bf16 %v3181, %v3181
      %v3183 = vperm.slane %v326, 3
      %v3192 = vunpack.c.l.b16 %v317
      %v3193 = vunpack.c.l.b16 %v318
      %v3194 = vunpack.c.l.b16 %v319
      %v3195 = vunpack.c.l.b16 %v320
      %v3196 = vunpack.c.l.b16 %v321
      %v3197 = vunpack.c.l.b16 %v322
      %v3198 = vunpack.c.l.b16 %v323
      %v3199 = vunpack.c.l.b16 %v324
      %v3200 = vpack.c.b16 %v3193, %v3192
      %v3201 = vpack.c.b16 %v3195, %v3194
      %v3202 = vpack.c.b16 %v3197, %v3196
      %v3203 = vpack.c.b16 %v3199, %v3198
      %v3209 = vsel %vm2619, %v3182, 0
      %3211 = vmatpush.bf16.msra.mxu0 0
      %3212 = vmatpush.bf16.msra.mxu0 0
      %3213 = vmatpush.bf16.msra.mxu0 0
      %3214 = vmatpush.bf16.msra.mxu0 0
      %3215 = vmatpush.bf16.msra.mxu0 %v3203
      %3216 = vmatpush.bf16.msra.mxu0 %v3202
      %3217 = vmatpush.bf16.msra.mxu0 %v3201
      %3218 = vmatpush.bf16.msra.mxu0 %v3200
      %3219 = vmatmul.bf16.gmra.mxu0 %v3209
      %v3220 = vpop.f32.mrf.mxu0
      %v3221 = vadd.f32 %v3183, %v3220
      %v3222 = vpop.f32.mrf.mxu0
      %3223 = vdwg.mxu0
      %3240 = vst [vmem:[#allocation1] ss:$2 sm:$0xff] %v866
      %s3241 = scalar_lea.vmem [#allocation1], 1
      %3242 = vst [vmem:[%s3241] ss:$2 sm:$0xff] %v867
      %s3243 = scalar_lea.vmem [#allocation1], 16
      %3244 = vst [vmem:[%s3243] ss:$2 sm:$0xff] %v868
      %s3245 = scalar_lea.vmem [#allocation1], 17
      %3246 = vst [vmem:[%s3245] ss:$2 sm:$0xff] %v869
      %s3247 = scalar_lea.vmem [#allocation1], 32
      %3248 = vst [vmem:[%s3247] ss:$2 sm:$0xff] %v870
      %s3249 = scalar_lea.vmem [#allocation1], 33
      %3250 = vst [vmem:[%s3249] ss:$2 sm:$0xff] %v871
      %s3251 = scalar_lea.vmem [#allocation1], 48
      %3252 = vst [vmem:[%s3251] ss:$2 sm:$0xff] %v872
      %s3253 = scalar_lea.vmem [#allocation1], 49
      %3254 = vst [vmem:[%s3253] ss:$2 sm:$0xff] %v873
      %v3255 = vld.sshfl [vmem:[#allocation1] sm:$0xff pattern:$0x75316420]
      %v3256 = vld.sshfl [vmem:[#allocation1 + $0x10] sm:$0xff pattern:$0x75316420]
      %v3257 = vld.sshfl [vmem:[#allocation1 + $0x20] sm:$0xff pattern:$0x75316420]
      %v3258 = vld.sshfl [vmem:[#allocation1 + $0x30] sm:$0xff pattern:$0x75316420]
      %3259 = vst [vmem:[#allocation1] ss:$2 sm:$0xff] %v874
      %3260 = vst [vmem:[%s3241] ss:$2 sm:$0xff] %v875
      %3261 = vst [vmem:[%s3243] ss:$2 sm:$0xff] %v876
      %3262 = vst [vmem:[%s3245] ss:$2 sm:$0xff] %v877
      %3263 = vst [vmem:[%s3247] ss:$2 sm:$0xff] %v878
      %3264 = vst [vmem:[%s3249] ss:$2 sm:$0xff] %v879
      %3265 = vst [vmem:[%s3251] ss:$2 sm:$0xff] %v880
      %3266 = vst [vmem:[%s3253] ss:$2 sm:$0xff] %v881
      %v3267 = vld.sshfl [vmem:[#allocation1] sm:$0xff pattern:$0x75316420]
      %v3268 = vld.sshfl [vmem:[#allocation1 + $0x10] sm:$0xff pattern:$0x75316420]
      %v3269 = vld.sshfl [vmem:[#allocation1 + $0x20] sm:$0xff pattern:$0x75316420]
      %v3270 = vld.sshfl [vmem:[#allocation1 + $0x30] sm:$0xff pattern:$0x75316420]
      %3279 = vst.msk [vmem:[%s283] sm:$0xff] %vm1285, %v3255
      %3280 = vst.msk [vmem:[%s283 + $0x8] sm:$0xff] %vm1285, %v3256
      %3281 = vst.msk [vmem:[%s283 + $0x10] sm:$0xff] %vm1285, %v3257
      %3282 = vst.msk [vmem:[%s283 + $0x18] sm:$0xff] %vm1285, %v3258
      %3283 = vst.msk [vmem:[%s283 + $0x20] sm:$0xff] %vm1285, %v3267
      %3284 = vst.msk [vmem:[%s283 + $0x28] sm:$0xff] %vm1285, %v3268
      %3285 = vst.msk [vmem:[%s283 + $0x30] sm:$0xff] %vm1285, %v3269
      %3286 = vst.msk [vmem:[%s283 + $0x38] sm:$0xff] %vm1285, %v3270
      %3291 = vst [vmem:[#allocation1] ss:$2 sm:$0xff] %v2832
      %s3292 = scalar_lea.vmem [#allocation1], 1
      %3293 = vst [vmem:[%s3292] ss:$2 sm:$0xff] %v2833
      %s3294 = scalar_lea.vmem [#allocation1], 16
      %3295 = vst [vmem:[%s3294] ss:$2 sm:$0xff] %v2834
      %s3296 = scalar_lea.vmem [#allocation1], 17
      %3297 = vst [vmem:[%s3296] ss:$2 sm:$0xff] %v2835
      %v3298 = vld.sshfl [vmem:[#allocation1] sm:$0xff pattern:$0x75316420]
      %v3299 = vld.sshfl [vmem:[#allocation1 + $0x10] sm:$0xff pattern:$0x75316420]
      %3302 = vst.msk [vmem:[%s283 + $0x40] sm:$0xff] %vm1285, %v3298
      %3303 = vst.msk [vmem:[%s283 + $0x48] sm:$0xff] %vm1285, %v3299
      %v3304 = vadd.f32 %v1886, %v2206
      %v3305 = vadd.f32 %v1887, %v2207
      %v3306 = vadd.f32 %v1888, %v2208
      %v3307 = vadd.f32 %v1889, %v2209
      %v3308 = vadd.f32 %v1890, %v2210
      %v3309 = vadd.f32 %v1891, %v2211
      %v3310 = vadd.f32 %v1892, %v2212
      %v3311 = vadd.f32 %v1893, %v2213
      %v3320 = vlaneseq
      %v3321 = vand.u32 %v3320, 127
      %v3322 = vperm.slane %v3304, %v3321
      %v3323 = vperm.slane %v3305, %v3321
      %v3324 = vperm.slane %v3306, %v3321
      %v3325 = vperm.slane %v3307, %v3321
      %v3326 = vperm.slane %v3308, %v3321
      %v3327 = vperm.slane %v3309, %v3321
      %v3328 = vperm.slane %v3310, %v3321
      %v3329 = vperm.slane %v3311, %v3321
      %v3330 = vsel %vm2463, %v3323, %v3322
      %v3331 = vsel %vm2466, %v3324, %v3330
      %v3332 = vsel %vm2469, %v3325, %v3331
      %v3333 = vsel %vm2472, %v3326, %v3332
      %v3334 = vsel %vm2475, %v3327, %v3333
      %v3335 = vsel %vm2478, %v3328, %v3334
      %v3336 = vsel %vm2481, %v3329, %v3335
      %3338 = vst.msk [vmem:[%s283 + $0x50] sm:$0xff] %vm1285, %v3336
      %v3341 = vperm.slane %v3096, %v3321
      %v3342 = vperm.slane %v3097, %v3321
      %v3343 = vsel %vm2463, %v3342, %v3341
      %vm3345 = vcmask 25600
      %3346 = vst.msk [vmem:[%s283 + $0x58] sm:$0x3] %vm3345, %v3343
      %vm3347 = vcmask 254976
      %3348 = vst.msk [vmem:[%s283 + $0x5a] sm:$0x3] %vm3347, %v3221
      %p3349 = scmp.lt.s32.totalorder %s18, 1
      %s3350 = scalar_select %p3349, %s18, 1
      %s3351 = smul.addr %s3350, 12
      %s3352 = smul.addr %s3351, 8
      %s3353 = scalar_lea.vmem %s7, %s3352
      // Predicated region
      $region49: #{fn.1} parent=47 // pred_check
        %p3354 = pneg %p188
      $region50: #{fn.1} parent=47 // pred_check_branch
        %3356 = sbr.rel (%p3354) target = $region52
      $region51: #{fn.1} parent=47 // pred_region
        _
      $region52: #{fn.1} parent=47 // pred_fallthru
        _
    $region48: #{fn.1} parent=5 // pred_fallthru
      _
    %p3357 = scmp.le.s32.totalorder 2, %s13
    // Predicated region
    $region53: #{fn.1} parent=5 // pred_check
      %p3358 = pneg %p3357
    $region54: #{fn.1} parent=5 // pred_check_branch
      %3360 = sbr.rel (%p3358) target = $region56
    $region55: #{fn.1} parent=5 // pred_region
      %s3361 = ssub.s32 %s13, 2
      // Predicated region
      $region57: #{fn.1} parent=55 // pred_check
        %p3362 = pneg %p194
      $region58: #{fn.1} parent=55 // pred_check_branch
        %3364 = sbr.rel (%p3362) target = $region60
      $region59: #{fn.1} parent=55 // pred_region
        %p3365 = scmp.lt.s32.totalorder %s19, 1
        %s3366 = scalar_select %p3365, %s19, 1
        %s3367 = smul.addr %s3366, 12
        %s3368 = smul.addr %s3367, 8
        %s3369 = scalar_lea.vmem %s7, %s3368
      $region60: #{fn.1} parent=55 // pred_fallthru
        _
    $region56: #{fn.1} parent=5 // pred_fallthru
      _
  $region6: #{fn.1} parent=0 // loop_footer
    %s17 = sadd.s32 1, %s13
  $region7: #{fn.1} parent=0 // loop_footer_branch
    %12 = sbr.rel target = $region3
  $region8: #{fn.1} parent=0 // loop_exit
    _

</llo_original>
